<compile_context>
chip_gen: v7x
topology: tpu7x:2x2x1
jax: 0.10.0
libtpu: 0.0.40
codegen_flags: <defaults>
</compile_context>

<pallas_src>
import jax
import jax.numpy as jnp
from jax.experimental import pallas as pl
from jax.experimental.pallas import tpu as pltpu


NUM_CLASSES = 10
PADDED_CLASSES = 128        # lane-dense final output (multiple of 128 lanes)
NEG = -1e30                 # finite "-inf" for padded logit columns (must stay f32)

D_IN, D1, D2, D3 = 3072, 1024, 512, 128
TN1 = 256                   # layer-1 output-feature chunk == layer-2 K chunk
N_STEPS = D1 // TN1         # 4 streamed steps


def _mlp_kernel(x_ref, w1_ref, b1_ref, w2_ref, b2_ref, w3_ref, b3_ref,
                w4_ref, b4_ref, o_ref, acc2_ref):
    """Fused 4-layer MLP + log_softmax with W1/W2 streamed over the grid.

    Per grid step j:
      h1_chunk = relu(x @ W1[:, j*TN1:(j+1)*TN1] + b1_chunk)      (bf16)
      acc2    += h1_chunk @ W2[j*TN1:(j+1)*TN1, :]                 (f32)
    On the last step: bias+ReLU layer 2, layers 3-4, log_softmax, store.
    """
    f32 = jnp.float32
    bf16 = jnp.bfloat16
    j = pl.program_id(0)

    @pl.when(j == 0)
    def _():
        acc2_ref[...] = jnp.zeros_like(acc2_ref)

    # Layer 1 chunk (streamed W1) + fused ReLU, f32 accumulation on the MXU.
    h1c = jnp.dot(x_ref[...], w1_ref[...], preferred_element_type=f32) + b1_ref[...]
    h1c = jnp.maximum(h1c, 0.0).astype(bf16)                       # (Bp, TN1)

    # Layer 2 partial product over the matching K chunk (streamed W2).
    acc2_ref[...] += jnp.dot(h1c, w2_ref[...], preferred_element_type=f32)

    @pl.when(j == pl.num_programs(0) - 1)
    def _():
        h2 = jnp.maximum(acc2_ref[...] + b2_ref[...], 0.0).astype(bf16)   # (Bp, 512)
        h3 = jnp.dot(h2, w3_ref[...], preferred_element_type=f32) + b3_ref[...]
        h3 = jnp.maximum(h3, 0.0).astype(bf16)                            # (Bp, 128)
        logits = jnp.dot(h3, w4_ref[...], preferred_element_type=f32) + b4_ref[...]

        # log_softmax over the padded, lane-dense class axis; padded columns
        # carry an f32 -1e30 bias so exp() underflows to exactly 0.
        m = jnp.max(logits, axis=-1, keepdims=True)
        s = logits - m
        o_ref[...] = s - jnp.log(jnp.sum(jnp.exp(s), axis=-1, keepdims=True))


def init_params(key):
    """PyTorch nn.Linear default init (U[-1/sqrt(in), 1/sqrt(in)]).

    Weights stored as (in_features, out_features) = W^T of PyTorch's layout.
    """
    dims = [(D_IN, D1), (D1, D2), (D2, D3), (D3, NUM_CLASSES)]
    params = []
    for fan_in, fan_out in dims:
        key, kw, kb = jax.random.split(key, 3)
        bound = 1.0 / jnp.sqrt(jnp.float32(fan_in))
        w = jax.random.uniform(kw, (fan_in, fan_out), jnp.float32, -bound, bound)
        b = jax.random.uniform(kb, (fan_out,), jnp.float32, -bound, bound)
        params.append((w, b))
    return params


def pack_params(params):
    """One-time packing: bf16 weights, f32 (1, N) biases, lane-padded layer 4.

    NOTE: biases (esp. b4's -1e30 padded lanes) must remain float32.
    """
    (w1, b1), (w2, b2), (w3, b3), (w4, b4) = params
    w4p = jnp.zeros((w4.shape[0], PADDED_CLASSES), jnp.float32)
    w4p = w4p.at[:, :NUM_CLASSES].set(w4)
    b4p = jnp.full((PADDED_CLASSES,), NEG, jnp.float32)
    b4p = b4p.at[:NUM_CLASSES].set(b4)
    packed = []
    for w, b in ((w1, b1), (w2, b2), (w3, b3), (w4p, b4p)):
        packed.append((w.astype(jnp.bfloat16), b.reshape(1, -1).astype(jnp.float32)))
    return tuple(packed)


def cifar_mlp_forward(x_nchw, packed_params):
    """Forward pass of CifarMlpNet. x_nchw: (B, 3, 32, 32) f32 -> (B, 10) f32."""
    B = x_nchw.shape[0]
    # torch .view() flatten; cast to bf16 here (kernel feeds the MXU bf16
    # anyway) so input HBM traffic is halved and the tiny pad copy is on bf16.
    x = x_nchw.reshape(B, -1).astype(jnp.bfloat16)                 # (B, 3072)
    Bp = max(16, ((B + 15) // 16) * 16)                            # bf16 sublane-packed batch
    if Bp != B:
        x = jnp.pad(x, ((0, Bp - B), (0, 0)))

    (w1, b1), (w2, b2), (w3, b3), (w4, b4) = packed_params

    weight_elems = D_IN * D1 + D1 * D2 + D2 * D3 + D3 * PADDED_CLASSES
    cost = pl.CostEstimate(
        flops=2 * Bp * weight_elems,
        transcendentals=Bp * (PADDED_CLASSES + 1),
        bytes_accessed=(2 * weight_elems                            # bf16 weights
                        + 4 * (D1 + D2 + D3 + PADDED_CLASSES)       # f32 biases
                        + 2 * Bp * D_IN                             # bf16 input
                        + 4 * Bp * PADDED_CLASSES),                 # f32 output
    )

    grid_spec = pltpu.PrefetchScalarGridSpec(
        num_scalar_prefetch=0,
        grid=(N_STEPS,),
        in_specs=[
            # Constant-index blocks are DMA'd once (step 0) and stay resident.
            pl.BlockSpec((Bp, D_IN), lambda j: (0, 0)),             # x
            pl.BlockSpec((D_IN, TN1), lambda j: (0, j)),            # W1 chunk (streamed)
            pl.BlockSpec((1, TN1), lambda j: (0, j)),               # b1 chunk (streamed)
            pl.BlockSpec((TN1, D2), lambda j: (j, 0)),              # W2 K-chunk (streamed)
            pl.BlockSpec((1, D2), lambda j: (0, 0)),                # b2
            pl.BlockSpec((D2, D3), lambda j: (0, 0)),               # W3
            pl.BlockSpec((1, D3), lambda j: (0, 0)),                # b3
            pl.BlockSpec((D3, PADDED_CLASSES), lambda j: (0, 0)),   # W4 (padded)
            pl.BlockSpec((1, PADDED_CLASSES), lambda j: (0, 0)),    # b4 (padded, f32)
        ],
        out_specs=pl.BlockSpec((Bp, PADDED_CLASSES), lambda j: (0, 0)),
        scratch_shapes=[pltpu.VMEM((Bp, D2), jnp.float32)],         # layer-2 accumulator
    )

    out = pl.pallas_call(
        _mlp_kernel,
        out_shape=jax.ShapeDtypeStruct((Bp, PADDED_CLASSES), jnp.float32),
        grid_spec=grid_spec,
        compiler_params=pltpu.CompilerParams(
            dimension_semantics=("arbitrary",),     # axis carries the accumulator
            vmem_limit_bytes=32 * 1024 * 1024,      # explicit budget (safe on v5e too)
        ),
        cost_estimate=cost,
    )(x, w1, b1, w2, b2, w3, b3, w4, b4)

    # dropout (enable_dropout) is disabled / identity in eval mode -> no-op.
    return out[:B, :NUM_CLASSES]


def cifar_mlp_reference_bf16(x_nchw, params):
    """Pure-JAX reference mirroring the kernel's mixed precision."""
    B = x_nchw.shape[0]
    h = x_nchw.reshape(B, -1).astype(jnp.float32)
    (w1, b1), (w2, b2), (w3, b3), (w4, b4) = params
    for w, b in ((w1, b1), (w2, b2), (w3, b3)):
        h = jnp.dot(h.astype(jnp.bfloat16), w.astype(jnp.bfloat16),
                    preferred_element_type=jnp.float32) + b
        h = jnp.maximum(h, 0.0)
    logits = jnp.dot(h.astype(jnp.bfloat16), w4.astype(jnp.bfloat16),
                     preferred_element_type=jnp.float32) + b4
    return jax.nn.log_softmax(logits, axis=1)


def cifar_mlp_reference_f32(x_nchw, params):
    """Pure-f32 reference (exact PyTorch-module semantics)."""
    B = x_nchw.shape[0]
    h = x_nchw.reshape(B, -1)
    (w1, b1), (w2, b2), (w3, b3), (w4, b4) = params
    h = jnp.maximum(h @ w1 + b1, 0.0)
    h = jnp.maximum(h @ w2 + b2, 0.0)
    h = jnp.maximum(h @ w3 + b3, 0.0)
    return jax.nn.log_softmax(h @ w4 + b4, axis=1)


if __name__ == "__main__":
    key = jax.random.PRNGKey(0)
    key, kx = jax.random.split(key)

    # CIFAR-shaped input, small batch, NCHW like PyTorch.
    x = jax.random.normal(kx, (2, 3, 32, 32), jnp.float32)
    params = init_params(key)
    packed = pack_params(params)            # one-time bf16 / lane-pad packing

    out = jax.jit(cifar_mlp_forward)(x, packed)
    out = jax.block_until_ready(out)
    assert out.shape == (2, NUM_CLASSES)

    # Strict check against a reference with matching mixed-precision numerics.
    ref_bf16 = cifar_mlp_reference_bf16(x, params)
    assert jnp.allclose(out, ref_bf16, atol=2e-3, rtol=2e-3), \
        "mismatch vs bf16-mirror reference"

    # Loose check against the pure-f32 module semantics (difference is only
    # the bf16 weight/activation quantization of the deployed kernel).
    ref_f32 = cifar_mlp_reference_f32(x, params)
    assert jnp.allclose(out, ref_f32, atol=1e-1, rtol=1e-1), \
        "mismatch vs f32 reference"

    print("KERNEL_OK")
</pallas_src>

<mosaic_0001>
module attributes {stable_mosaic.version = 11 : i64} {
  func.func @_mlp_kernel(%arg0: i32, %arg1: memref<16x3072xbf16, #tpu.memory_space<vmem>>, %arg2: memref<3072x256xbf16, #tpu.memory_space<vmem>>, %arg3: memref<1x256xf32, #tpu.memory_space<vmem>>, %arg4: memref<256x512xbf16, #tpu.memory_space<vmem>>, %arg5: memref<1x512xf32, #tpu.memory_space<vmem>>, %arg6: memref<512x128xbf16, #tpu.memory_space<vmem>>, %arg7: memref<1x128xf32, #tpu.memory_space<vmem>>, %arg8: memref<128x128xbf16, #tpu.memory_space<vmem>>, %arg9: memref<1x128xf32, #tpu.memory_space<vmem>>, %arg10: memref<16x128xf32, #tpu.memory_space<vmem>>, %arg11: memref<16x512xf32, #tpu.memory_space<vmem>>) attributes {dimension_semantics = [#tpu.dimension_semantics<arbitrary>], iteration_bounds = array<i64: 4>, scalar_prefetch = 0 : i64, scratch_operands = 1 : i64, tpu.core_type = #tpu.core_type<tc>, window_params = [{pipeline_mode = #tpu.pipeline_mode<synchronous>, transform_indices = @transform_0, window_bounds = array<i64: 16, 3072>}, {transform_indices = @transform_1, window_bounds = array<i64: 3072, 256>}, {transform_indices = @transform_2, window_bounds = array<i64: 1, 256>}, {transform_indices = @transform_3, window_bounds = array<i64: 256, 512>}, {pipeline_mode = #tpu.pipeline_mode<synchronous>, transform_indices = @transform_4, window_bounds = array<i64: 1, 512>}, {pipeline_mode = #tpu.pipeline_mode<synchronous>, transform_indices = @transform_5, window_bounds = array<i64: 512, 128>}, {pipeline_mode = #tpu.pipeline_mode<synchronous>, transform_indices = @transform_6, window_bounds = array<i64: 1, 128>}, {pipeline_mode = #tpu.pipeline_mode<synchronous>, transform_indices = @transform_7, window_bounds = array<i64: 128, 128>}, {pipeline_mode = #tpu.pipeline_mode<synchronous>, transform_indices = @transform_8, window_bounds = array<i64: 1, 128>}, {pipeline_mode = #tpu.pipeline_mode<synchronous>, transform_indices = @transform_9, window_bounds = array<i64: 16, 128>}]} {
    %c0_i32 = arith.constant 0 : i32
    %0 = arith.cmpi eq, %arg0, %c0_i32 : i32
    %1 = arith.extui %0 : i1 to i32
    %c0_i32_0 = arith.constant 0 : i32
    %2 = arith.cmpi ne, %1, %c0_i32_0 : i32
    scf.if %2 {
      %cst_15 = arith.constant 0.000000e+00 : f32
      %20 = vector.broadcast %cst_15 : f32 to vector<16x512xf32>
      %c0_16 = arith.constant 0 : index
      %c0_17 = arith.constant 0 : index
      %21 = vector.load %arg11[%c0_16, %c0_17] : memref<16x512xf32, #tpu.memory_space<vmem>>, vector<16x512xf32>
      tpu.vector_store %arg11[%c0_16, %c0_17], %20 {strides = array<i32>} : memref<16x512xf32, #tpu.memory_space<vmem>>, vector<16x512xf32>,
    } else {
    }
    %c0 = arith.constant 0 : index
    %c0_1 = arith.constant 0 : index
    %3 = vector.load %arg1[%c0, %c0_1] : memref<16x3072xbf16, #tpu.memory_space<vmem>>, vector<16x3072xbf16>
    %c0_2 = arith.constant 0 : index
    %c0_3 = arith.constant 0 : index
    %4 = vector.load %arg2[%c0_2, %c0_3] : memref<3072x256xbf16, #tpu.memory_space<vmem>>, vector<3072x256xbf16>
    %cst = arith.constant dense<0.000000e+00> : vector<16x256xf32>
    %5 = tpu.matmul %3, %4, %cst {dimension_numbers = #tpu.dot_dimension_numbers<[1], [0], [0], [1], [0, 0, 1, 1], [], []>} : vector<16x3072xbf16>, vector<3072x256xbf16>, vector<16x256xf32> -> vector<16x256xf32>
    %c0_4 = arith.constant 0 : index
    %c0_5 = arith.constant 0 : index
    %6 = vector.load %arg3[%c0_4, %c0_5] : memref<1x256xf32, #tpu.memory_space<vmem>>, vector<1x256xf32>
    %7 = vector.broadcast %6 : vector<1x256xf32> to vector<16x256xf32>
    %8 = arith.addf %5, %7 : vector<16x256xf32>
    %cst_6 = arith.constant 0.000000e+00 : f32
    %9 = vector.broadcast %cst_6 : f32 to vector<16x256xf32>
    %10 = arith.maximumf %8, %9 : vector<16x256xf32>
    %11 = arith.truncf %10 : vector<16x256xf32> to vector<16x256xbf16>
    %c0_7 = arith.constant 0 : index
    %c0_8 = arith.constant 0 : index
    %12 = vector.load %arg11[%c0_7, %c0_8] : memref<16x512xf32, #tpu.memory_space<vmem>>, vector<16x512xf32>
    %c0_9 = arith.constant 0 : index
    %c0_10 = arith.constant 0 : index
    %13 = vector.load %arg4[%c0_9, %c0_10] : memref<256x512xbf16, #tpu.memory_space<vmem>>, vector<256x512xbf16>
    %cst_11 = arith.constant dense<0.000000e+00> : vector<16x512xf32>
    %14 = tpu.matmul %11, %13, %cst_11 {dimension_numbers = #tpu.dot_dimension_numbers<[1], [0], [0], [1], [0, 0, 1, 1], [], []>} : vector<16x256xbf16>, vector<256x512xbf16>, vector<16x512xf32> -> vector<16x512xf32>
    %15 = arith.addf %12, %14 : vector<16x512xf32>
    %c0_12 = arith.constant 0 : index
    %c0_13 = arith.constant 0 : index
    %16 = vector.load %arg11[%c0_12, %c0_13] : memref<16x512xf32, #tpu.memory_space<vmem>>, vector<16x512xf32>
    tpu.vector_store %arg11[%c0_12, %c0_13], %15 {strides = array<i32>} : memref<16x512xf32, #tpu.memory_space<vmem>>, vector<16x512xf32>,
    %c3_i32 = arith.constant 3 : i32
    %17 = arith.cmpi eq, %arg0, %c3_i32 : i32
    %18 = arith.extui %17 : i1 to i32
    %c0_i32_14 = arith.constant 0 : i32
    %19 = arith.cmpi ne, %18, %c0_i32_14 : i32
    scf.if %19 {
      %c0_15 = arith.constant 0 : index
      %c0_16 = arith.constant 0 : index
      %20 = vector.load %arg11[%c0_15, %c0_16] : memref<16x512xf32, #tpu.memory_space<vmem>>, vector<16x512xf32>
      %c0_17 = arith.constant 0 : index
      %c0_18 = arith.constant 0 : index
      %21 = vector.load %arg5[%c0_17, %c0_18] : memref<1x512xf32, #tpu.memory_space<vmem>>, vector<1x512xf32>
      %22 = vector.broadcast %21 : vector<1x512xf32> to vector<16x512xf32>
      %23 = arith.addf %20, %22 : vector<16x512xf32>
      %cst_19 = arith.constant 0.000000e+00 : f32
      %24 = vector.broadcast %cst_19 : f32 to vector<16x512xf32>
      %25 = arith.maximumf %23, %24 : vector<16x512xf32>
      %26 = arith.truncf %25 : vector<16x512xf32> to vector<16x512xbf16>
      %c0_20 = arith.constant 0 : index
      %c0_21 = arith.constant 0 : index
      %27 = vector.load %arg6[%c0_20, %c0_21] : memref<512x128xbf16, #tpu.memory_space<vmem>>, vector<512x128xbf16>
      %cst_22 = arith.constant dense<0.000000e+00> : vector<16x128xf32>
      %28 = tpu.matmul %26, %27, %cst_22 {dimension_numbers = #tpu.dot_dimension_numbers<[1], [0], [0], [1], [0, 0, 1, 1], [], []>} : vector<16x512xbf16>, vector<512x128xbf16>, vector<16x128xf32> -> vector<16x128xf32>
      %c0_23 = arith.constant 0 : index
      %c0_24 = arith.constant 0 : index
      %29 = vector.load %arg7[%c0_23, %c0_24] : memref<1x128xf32, #tpu.memory_space<vmem>>, vector<1x128xf32>
      %30 = vector.broadcast %29 : vector<1x128xf32> to vector<16x128xf32>
      %31 = arith.addf %28, %30 : vector<16x128xf32>
      %cst_25 = arith.constant 0.000000e+00 : f32
      %32 = vector.broadcast %cst_25 : f32 to vector<16x128xf32>
      %33 = arith.maximumf %31, %32 : vector<16x128xf32>
      %34 = arith.truncf %33 : vector<16x128xf32> to vector<16x128xbf16>
      %c0_26 = arith.constant 0 : index
      %c0_27 = arith.constant 0 : index
      %35 = vector.load %arg8[%c0_26, %c0_27] : memref<128x128xbf16, #tpu.memory_space<vmem>>, vector<128x128xbf16>
      %cst_28 = arith.constant dense<0.000000e+00> : vector<16x128xf32>
      %36 = tpu.matmul %34, %35, %cst_28 {dimension_numbers = #tpu.dot_dimension_numbers<[1], [0], [0], [1], [0, 0, 1, 1], [], []>} : vector<16x128xbf16>, vector<128x128xbf16>, vector<16x128xf32> -> vector<16x128xf32>
      %c0_29 = arith.constant 0 : index
      %c0_30 = arith.constant 0 : index
      %37 = vector.load %arg9[%c0_29, %c0_30] : memref<1x128xf32, #tpu.memory_space<vmem>>, vector<1x128xf32>
      %38 = vector.broadcast %37 : vector<1x128xf32> to vector<16x128xf32>
      %39 = arith.addf %36, %38 : vector<16x128xf32>
      %cst_31 = arith.constant dense<0xFF800000> : vector<16xf32>
      %40 = vector.multi_reduction <maximumf>, %39, %cst_31 [1] : vector<16x128xf32> to vector<16xf32>
      %41 = vector.shape_cast %40 : vector<16xf32> to vector<16x1xf32>
      %42 = vector.broadcast %41 : vector<16x1xf32> to vector<16x128xf32>
      %43 = arith.subf %39, %42 : vector<16x128xf32>
      %44 = math.exp %43 : vector<16x128xf32>
      %cst_32 = arith.constant dense<0.000000e+00> : vector<16xf32>
      %45 = vector.multi_reduction <add>, %44, %cst_32 [1] : vector<16x128xf32> to vector<16xf32>
      %46 = vector.shape_cast %45 : vector<16xf32> to vector<16x1xf32>
      %47 = math.log %46 : vector<16x1xf32>
      %48 = vector.broadcast %47 : vector<16x1xf32> to vector<16x128xf32>
      %49 = arith.subf %43, %48 : vector<16x128xf32>
      %c0_33 = arith.constant 0 : index
      %c0_34 = arith.constant 0 : index
      %50 = vector.load %arg10[%c0_33, %c0_34] : memref<16x128xf32, #tpu.memory_space<vmem>>, vector<16x128xf32>
      tpu.vector_store %arg10[%c0_33, %c0_34], %49 {strides = array<i32>} : memref<16x128xf32, #tpu.memory_space<vmem>>, vector<16x128xf32>,
    } else {
    }
    return
  }
  func.func @transform_0(%arg0: i32) -> (i32, i32) {
    %c0_i32 = arith.constant 0 : i32
    %c0_i32_0 = arith.constant 0 : i32
    %c0_i32_1 = arith.constant 0 : i32
    return %c0_i32, %c0_i32_0 : i32, i32
  }
  func.func @transform_1(%arg0: i32) -> (i32, i32) {
    %c0_i32 = arith.constant 0 : i32
    %c0_i32_0 = arith.constant 0 : i32
    return %c0_i32, %arg0 : i32, i32
  }
  func.func @transform_2(%arg0: i32) -> (i32, i32) {
    %c0_i32 = arith.constant 0 : i32
    %c0_i32_0 = arith.constant 0 : i32
    return %c0_i32, %arg0 : i32, i32
  }
  func.func @transform_3(%arg0: i32) -> (i32, i32) {
    %c0_i32 = arith.constant 0 : i32
    %c0_i32_0 = arith.constant 0 : i32
    return %arg0, %c0_i32 : i32, i32
  }
  func.func @transform_4(%arg0: i32) -> (i32, i32) {
    %c0_i32 = arith.constant 0 : i32
    %c0_i32_0 = arith.constant 0 : i32
    %c0_i32_1 = arith.constant 0 : i32
    return %c0_i32, %c0_i32_0 : i32, i32
  }
  func.func @transform_5(%arg0: i32) -> (i32, i32) {
    %c0_i32 = arith.constant 0 : i32
    %c0_i32_0 = arith.constant 0 : i32
    %c0_i32_1 = arith.constant 0 : i32
    return %c0_i32, %c0_i32_0 : i32, i32
  }
  func.func @transform_6(%arg0: i32) -> (i32, i32) {
    %c0_i32 = arith.constant 0 : i32
    %c0_i32_0 = arith.constant 0 : i32
    %c0_i32_1 = arith.constant 0 : i32
    return %c0_i32, %c0_i32_0 : i32, i32
  }
  func.func @transform_7(%arg0: i32) -> (i32, i32) {
    %c0_i32 = arith.constant 0 : i32
    %c0_i32_0 = arith.constant 0 : i32
    %c0_i32_1 = arith.constant 0 : i32
    return %c0_i32, %c0_i32_0 : i32, i32
  }
  func.func @transform_8(%arg0: i32) -> (i32, i32) {
    %c0_i32 = arith.constant 0 : i32
    %c0_i32_0 = arith.constant 0 : i32
    %c0_i32_1 = arith.constant 0 : i32
    return %c0_i32, %c0_i32_0 : i32, i32
  }
  func.func @transform_9(%arg0: i32) -> (i32, i32) {
    %c0_i32 = arith.constant 0 : i32
    %c0_i32_0 = arith.constant 0 : i32
    %c0_i32_1 = arith.constant 0 : i32
    return %c0_i32, %c0_i32_0 : i32, i32
  }
}

</mosaic_0001>

<llo_original>
// kernel: cifar_mlp_forward.1
$region0: #{cifar_mlp_forward.1}
  #allocation0 [shape = 'u32[]', space=smem, size = 0x4, offset = 0x4, fixed_abs, tag = 'smem constant byte address 0x4 - core index']
  #allocation1 [shape = 'u32[144,128]{1,0:T(1,128)}', space=vmem, size = 0x12000, scoped, tag = 'internal scratch']
  #allocation2 [shape = 'f32[16,512]{1,0:T(8,128)}', space=vmem, size = 0x8000, scoped, tag = 'scratch operand']
  %s0 = inlined_call_operand.vmem [shape: bf16[16,3072], index: 0, kind: input, shape index: {}]
  %s1 = inlined_call_operand.hbm [shape: bf16[3072,1024], index: 1, kind: input, shape index: {}]
  %s2 = inlined_call_operand.hbm [shape: f32[1,1024], index: 2, kind: input, shape index: {}]
  %s3 = inlined_call_operand.hbm [shape: bf16[1024,512], index: 3, kind: input, shape index: {}]
  %s4 = inlined_call_operand.hbm [shape: f32[1,512], index: 4, kind: input, shape index: {}]
  %s5 = inlined_call_operand.hbm [shape: bf16[512,128], index: 5, kind: input, shape index: {}]
  %s6 = inlined_call_operand.hbm [shape: f32[1,128], index: 6, kind: input, shape index: {}]
  %s7 = inlined_call_operand.hbm [shape: bf16[128,128], index: 7, kind: input, shape index: {}]
  %s8 = inlined_call_operand.hbm [shape: f32[1,128], index: 8, kind: input, shape index: {}]
  %s9 = inlined_call_operand.vmem [shape: f32[16,128], index: 9, kind: output, shape index: {}]
  %s10 = sld [smem:[#allocation0]]
  $region109: #{cifar_mlp_forward.1} parent=0
    _
  %s12 = ssub.s32 1, %s10
  %s13 = scalar_select 0, %s12, %s10
  $region1: #{cifar_mlp_forward.1} parent=0
    #allocation3 [shape = 'u8[3145728]{0}', space=vmem, size = 0x300000, scoped, tag = 'input window, operand 1']
    #allocation4 [shape = 's32[2]{0}', space=sflag, size = 0x8, scoped, tag = 'scoped memory for cifar_mlp_forward.1']
    #allocation5 [shape = 'u8[2048]{0}', space=vmem, size = 0x800, scoped, tag = 'input window, operand 2']
    #allocation6 [shape = 's32[2]{0}', space=sflag, size = 0x8, scoped, tag = 'scoped memory for cifar_mlp_forward.1']
    #allocation7 [shape = 'u8[524288]{0}', space=vmem, size = 0x80000, scoped, tag = 'input window, operand 3']
    #allocation8 [shape = 'u8[2048]{0}', space=vmem, size = 0x800, scoped, tag = 'input window, operand 4, single buffered']
    #allocation9 [shape = 's32[1]{0}', space=sflag, size = 0x4, scoped, tag = 'scoped memory for cifar_mlp_forward.1']
    #allocation10 [shape = 'u8[131072]{0}', space=vmem, size = 0x20000, scoped, tag = 'input window, operand 5, single buffered']
    #allocation11 [shape = 'u8[512]{0}', space=vmem, size = 0x400, scoped, tag = 'input window, operand 6, single buffered']
    #allocation12 [shape = 's32[1]{0}', space=sflag, size = 0x4, scoped, tag = 'scoped memory for cifar_mlp_forward.1']
    #allocation13 [shape = 'u8[32768]{0}', space=vmem, size = 0x8000, scoped, tag = 'input window, operand 7, single buffered']
    #allocation14 [shape = 'u8[512]{0}', space=vmem, size = 0x400, scoped, tag = 'input window, operand 8, single buffered']
    #allocation15 [shape = 's32[1]{0}', space=sflag, size = 0x4, scoped, tag = 'scoped memory for cifar_mlp_forward.1']
    %14 = vsyncpa [#allocation4], 0
    %s15 = scalar_lea.sflag [#allocation4], 1
    %16 = vsyncpa %s15, 0
    %17 = vsyncpa [#allocation6], 0
    %s18 = scalar_lea.sflag [#allocation6], 1
    %19 = vsyncpa %s18, 0
    %20 = vsyncpa [#allocation9], 0
    %21 = vsyncpa [#allocation12], 0
    %22 = vsyncpa [#allocation15], 0
    loop: start=0, step=1, limit=6
    $region2: #{cifar_mlp_forward.1} parent=1 // loop_pre_header
      _
    $region3: #{cifar_mlp_forward.1} parent=1 // loop_header
      %s24 = sphi 0, %s28
      %p25 = scmp.ge.s32.totalorder %s24, 6
      %s32 = sphi 0, %s32
      %s34 = sphi 0, %s32
      %s35 = sphi 0, %s34
      %s49 = sphi 0, %s35
      %s55 = sphi 0, %s57
      %s58 = sphi 0, %s55
      %s59 = sphi 0, %s58
      %s75 = sphi 0, %s59
      %s81 = sphi 0, %s83
      %s84 = sphi 0, %s81
      %s85 = sphi 0, %s84
      %s101 = sphi 0, %s85
      %s107 = sphi 0, %s109
      %s110 = sphi 0, %s107
      %s111 = sphi 0, %s110
      %s127 = sphi 0, %s111
      %s131 = sphi 0, %s131
      %s133 = sphi 0, %s131
      %s134 = sphi 0, %s133
      %s148 = sphi 0, %s134
      %s152 = sphi 0, %s152
      %s154 = sphi 0, %s152
      %s155 = sphi 0, %s154
      %s169 = sphi 0, %s155
      %s173 = sphi 0, %s173
      %s175 = sphi 0, %s173
      %s176 = sphi 0, %s175
      %s190 = sphi 0, %s176
      %s194 = sphi 0, %s194
      %s196 = sphi 0, %s194
      %s197 = sphi 0, %s196
      %s211 = sphi 0, %s197
      %s215 = sphi 0, %s215
      %s217 = sphi 0, %s215
      %s218 = sphi 0, %s217
      %s232 = sphi 0, %s218
      %s236 = sphi 0, %s236
      %s238 = sphi 0, %s236
      %s239 = sphi 0, %s238
      %s253 = sphi 0, %s239
    $region4: #{cifar_mlp_forward.1} parent=1 // loop_header_branch
      %27 = sbr.rel (%p25) target = $region8
    $region5: #{cifar_mlp_forward.1} parent=1 // loop_body
      %s29 = ssub.s32 %s24, 1
      %s30 = ssub.s32 %s24, 2
      %s31 = sadd.s32 %s24, 1
      %s33 = sadd.s32 %s32, 1
      %p36 = scmp.eq.s32.totalorder %s24, 3
      %p37 = scmp.ne.s32.totalorder %s32, %s34
      %p38 = scmp.eq.s32.totalorder %s24, 0
      %p39 = por %p37, %p38
      %p40 = scmp.ne.s32.totalorder %s32, %s34
      %p41 = scmp.eq.s32.totalorder %s29, 3
      %p42 = por %p40, %p41
      %p43 = scmp.ne.s32.totalorder %s34, %s35
      %p44 = scmp.eq.s32.totalorder %s29, 0
      %p45 = por %p43, %p44
      %p46 = scmp.ne.s32.totalorder %s34, %s35
      %p47 = scmp.eq.s32.totalorder %s30, 3
      %p48 = por %p46, %p47
      %p50 = scmp.ne.s32.totalorder %s35, %s49
      %p51 = scmp.eq.s32.totalorder %s30, 0
      %p52 = por %p50, %p51
      %s53 = ssub.s32 %s24, %s31
      %p54 = scmp.eq.s32.totalorder %s53, 0
      %s56 = sadd.s32 %s55, 1
      %s57 = scalar_select %p54, %s55, %s56
      %p60 = pneg %p54
      %p61 = scmp.eq.s32.totalorder %s24, 3
      %p62 = por %p60, %p61
      %p63 = scmp.ne.s32.totalorder %s55, %s58
      %p64 = scmp.eq.s32.totalorder %s24, 0
      %p65 = por %p63, %p64
      %p66 = scmp.ne.s32.totalorder %s55, %s58
      %p67 = scmp.eq.s32.totalorder %s29, 3
      %p68 = por %p66, %p67
      %p69 = scmp.ne.s32.totalorder %s58, %s59
      %p70 = scmp.eq.s32.totalorder %s29, 0
      %p71 = por %p69, %p70
      %p72 = scmp.ne.s32.totalorder %s58, %s59
      %p73 = scmp.eq.s32.totalorder %s30, 3
      %p74 = por %p72, %p73
      %p76 = scmp.ne.s32.totalorder %s59, %s75
      %p77 = scmp.eq.s32.totalorder %s30, 0
      %p78 = por %p76, %p77
      %s79 = ssub.s32 %s24, %s31
      %p80 = scmp.eq.s32.totalorder %s79, 0
      %s82 = sadd.s32 %s81, 1
      %s83 = scalar_select %p80, %s81, %s82
      %p86 = pneg %p80
      %p87 = scmp.eq.s32.totalorder %s24, 3
      %p88 = por %p86, %p87
      %p89 = scmp.ne.s32.totalorder %s81, %s84
      %p90 = scmp.eq.s32.totalorder %s24, 0
      %p91 = por %p89, %p90
      %p92 = scmp.ne.s32.totalorder %s81, %s84
      %p93 = scmp.eq.s32.totalorder %s29, 3
      %p94 = por %p92, %p93
      %p95 = scmp.ne.s32.totalorder %s84, %s85
      %p96 = scmp.eq.s32.totalorder %s29, 0
      %p97 = por %p95, %p96
      %p98 = scmp.ne.s32.totalorder %s84, %s85
      %p99 = scmp.eq.s32.totalorder %s30, 3
      %p100 = por %p98, %p99
      %p102 = scmp.ne.s32.totalorder %s85, %s101
      %p103 = scmp.eq.s32.totalorder %s30, 0
      %p104 = por %p102, %p103
      %s105 = ssub.s32 %s24, %s31
      %p106 = scmp.eq.s32.totalorder %s105, 0
      %s108 = sadd.s32 %s107, 1
      %s109 = scalar_select %p106, %s107, %s108
      %p112 = pneg %p106
      %p113 = scmp.eq.s32.totalorder %s24, 3
      %p114 = por %p112, %p113
      %p115 = scmp.ne.s32.totalorder %s107, %s110
      %p116 = scmp.eq.s32.totalorder %s24, 0
      %p117 = por %p115, %p116
      %p118 = scmp.ne.s32.totalorder %s107, %s110
      %p119 = scmp.eq.s32.totalorder %s29, 3
      %p120 = por %p118, %p119
      %p121 = scmp.ne.s32.totalorder %s110, %s111
      %p122 = scmp.eq.s32.totalorder %s29, 0
      %p123 = por %p121, %p122
      %p124 = scmp.ne.s32.totalorder %s110, %s111
      %p125 = scmp.eq.s32.totalorder %s30, 3
      %p126 = por %p124, %p125
      %p128 = scmp.ne.s32.totalorder %s111, %s127
      %p129 = scmp.eq.s32.totalorder %s30, 0
      %p130 = por %p128, %p129
      %s132 = sadd.s32 %s131, 1
      %p135 = scmp.eq.s32.totalorder %s24, 3
      %p136 = scmp.ne.s32.totalorder %s131, %s133
      %p137 = scmp.eq.s32.totalorder %s24, 0
      %p138 = por %p136, %p137
      %p139 = scmp.ne.s32.totalorder %s131, %s133
      %p140 = scmp.eq.s32.totalorder %s29, 3
      %p141 = por %p139, %p140
      %p142 = scmp.ne.s32.totalorder %s133, %s134
      %p143 = scmp.eq.s32.totalorder %s29, 0
      %p144 = por %p142, %p143
      %p145 = scmp.ne.s32.totalorder %s133, %s134
      %p146 = scmp.eq.s32.totalorder %s30, 3
      %p147 = por %p145, %p146
      %p149 = scmp.ne.s32.totalorder %s134, %s148
      %p150 = scmp.eq.s32.totalorder %s30, 0
      %p151 = por %p149, %p150
      %s153 = sadd.s32 %s152, 1
      %p156 = scmp.eq.s32.totalorder %s24, 3
      %p157 = scmp.ne.s32.totalorder %s152, %s154
      %p158 = scmp.eq.s32.totalorder %s24, 0
      %p159 = por %p157, %p158
      %p160 = scmp.ne.s32.totalorder %s152, %s154
      %p161 = scmp.eq.s32.totalorder %s29, 3
      %p162 = por %p160, %p161
      %p163 = scmp.ne.s32.totalorder %s154, %s155
      %p164 = scmp.eq.s32.totalorder %s29, 0
      %p165 = por %p163, %p164
      %p166 = scmp.ne.s32.totalorder %s154, %s155
      %p167 = scmp.eq.s32.totalorder %s30, 3
      %p168 = por %p166, %p167
      %p170 = scmp.ne.s32.totalorder %s155, %s169
      %p171 = scmp.eq.s32.totalorder %s30, 0
      %p172 = por %p170, %p171
      %s174 = sadd.s32 %s173, 1
      %p177 = scmp.eq.s32.totalorder %s24, 3
      %p178 = scmp.ne.s32.totalorder %s173, %s175
      %p179 = scmp.eq.s32.totalorder %s24, 0
      %p180 = por %p178, %p179
      %p181 = scmp.ne.s32.totalorder %s173, %s175
      %p182 = scmp.eq.s32.totalorder %s29, 3
      %p183 = por %p181, %p182
      %p184 = scmp.ne.s32.totalorder %s175, %s176
      %p185 = scmp.eq.s32.totalorder %s29, 0
      %p186 = por %p184, %p185
      %p187 = scmp.ne.s32.totalorder %s175, %s176
      %p188 = scmp.eq.s32.totalorder %s30, 3
      %p189 = por %p187, %p188
      %p191 = scmp.ne.s32.totalorder %s176, %s190
      %p192 = scmp.eq.s32.totalorder %s30, 0
      %p193 = por %p191, %p192
      %s195 = sadd.s32 %s194, 1
      %p198 = scmp.eq.s32.totalorder %s24, 3
      %p199 = scmp.ne.s32.totalorder %s194, %s196
      %p200 = scmp.eq.s32.totalorder %s24, 0
      %p201 = por %p199, %p200
      %p202 = scmp.ne.s32.totalorder %s194, %s196
      %p203 = scmp.eq.s32.totalorder %s29, 3
      %p204 = por %p202, %p203
      %p205 = scmp.ne.s32.totalorder %s196, %s197
      %p206 = scmp.eq.s32.totalorder %s29, 0
      %p207 = por %p205, %p206
      %p208 = scmp.ne.s32.totalorder %s196, %s197
      %p209 = scmp.eq.s32.totalorder %s30, 3
      %p210 = por %p208, %p209
      %p212 = scmp.ne.s32.totalorder %s197, %s211
      %p213 = scmp.eq.s32.totalorder %s30, 0
      %p214 = por %p212, %p213
      %s216 = sadd.s32 %s215, 1
      %p219 = scmp.eq.s32.totalorder %s24, 3
      %p220 = scmp.ne.s32.totalorder %s215, %s217
      %p221 = scmp.eq.s32.totalorder %s24, 0
      %p222 = por %p220, %p221
      %p223 = scmp.ne.s32.totalorder %s215, %s217
      %p224 = scmp.eq.s32.totalorder %s29, 3
      %p225 = por %p223, %p224
      %p226 = scmp.ne.s32.totalorder %s217, %s218
      %p227 = scmp.eq.s32.totalorder %s29, 0
      %p228 = por %p226, %p227
      %p229 = scmp.ne.s32.totalorder %s217, %s218
      %p230 = scmp.eq.s32.totalorder %s30, 3
      %p231 = por %p229, %p230
      %p233 = scmp.ne.s32.totalorder %s218, %s232
      %p234 = scmp.eq.s32.totalorder %s30, 0
      %p235 = por %p233, %p234
      %s237 = sadd.s32 %s236, 1
      %p240 = scmp.eq.s32.totalorder %s24, 3
      %p241 = scmp.ne.s32.totalorder %s236, %s238
      %p242 = scmp.eq.s32.totalorder %s24, 0
      %p243 = por %p241, %p242
      %p244 = scmp.ne.s32.totalorder %s236, %s238
      %p245 = scmp.eq.s32.totalorder %s29, 3
      %p246 = por %p244, %p245
      %p247 = scmp.ne.s32.totalorder %s238, %s239
      %p248 = scmp.eq.s32.totalorder %s29, 0
      %p249 = por %p247, %p248
      %p250 = scmp.ne.s32.totalorder %s238, %s239
      %p251 = scmp.eq.s32.totalorder %s30, 3
      %p252 = por %p250, %p251
      %p254 = scmp.ne.s32.totalorder %s239, %s253
      %p255 = scmp.eq.s32.totalorder %s30, 0
      %p256 = por %p254, %p255
      %p257 = scmp.le.s32.totalorder 1, %s24
      %p258 = scmp.lt.s32.totalorder %s24, 5
      %p259 = pnand %p257, %p258
      %p260 = pneg %p259
      // Predicated region
      $region9: #{cifar_mlp_forward.1} parent=5 // pred_check
        _
      $region10: #{cifar_mlp_forward.1} parent=5 // pred_check_branch
        %262 = sbr.rel (%p259) target = $region12
      $region11: #{cifar_mlp_forward.1} parent=5 // pred_region
        %s263 = ssub.s32 %s24, 1
        // Predicated region
        $region13: #{cifar_mlp_forward.1} parent=11 // pred_check
          %p264 = pneg %p45
        $region14: #{cifar_mlp_forward.1} parent=11 // pred_check_branch
          %266 = sbr.rel (%p264) target = $region16
        $region15: #{cifar_mlp_forward.1} parent=11 // pred_region
          _
        $region16: #{cifar_mlp_forward.1} parent=11 // pred_fallthru
          _
        // Predicated region
        $region17: #{cifar_mlp_forward.1} parent=11 // pred_check
          %p267 = pneg %p144
        $region18: #{cifar_mlp_forward.1} parent=11 // pred_check_branch
          %269 = sbr.rel (%p267) target = $region20
        $region19: #{cifar_mlp_forward.1} parent=11 // pred_region
          %s271 = ssub.s32 64, 64
          %272 = vsyncadd [#allocation9], %s271
          %s274 = sshll.u32 [#allocation8], 4
          %s275 = int_to_ptr.vmem [resolvable:$true] %s274
          %277 = dma.hbm_to_vmem [thread:$0]  %s4, 64, %s275, [#allocation9]
        $region20: #{cifar_mlp_forward.1} parent=11 // pred_fallthru
          _
        // Predicated region
        $region21: #{cifar_mlp_forward.1} parent=11 // pred_check
          %p278 = pneg %p165
        $region22: #{cifar_mlp_forward.1} parent=11 // pred_check_branch
          %280 = sbr.rel (%p278) target = $region24
        $region23: #{cifar_mlp_forward.1} parent=11 // pred_region
          %s282 = ssub.s32 4096, 4096
          %283 = vsyncadd [#allocation9], %s282
          %s284 = sshll.u32 [#allocation10], 4
          %s285 = int_to_ptr.vmem [resolvable:$true] %s284
          %290 = dma.hbm_to_vmem [thread:$0]  %s5, 4096, %s285, [#allocation9], 64, 64, 4
        $region24: #{cifar_mlp_forward.1} parent=11 // pred_fallthru
          _
        // Predicated region
        $region25: #{cifar_mlp_forward.1} parent=11 // pred_check
          %p291 = pneg %p186
        $region26: #{cifar_mlp_forward.1} parent=11 // pred_check_branch
          %293 = sbr.rel (%p291) target = $region28
        $region27: #{cifar_mlp_forward.1} parent=11 // pred_region
          %s295 = ssub.s32 16, 16
          %296 = vsyncadd [#allocation12], %s295
          %s298 = sshll.u32 [#allocation11], 4
          %s299 = int_to_ptr.vmem [resolvable:$true] %s298
          %301 = dma.hbm_to_vmem [thread:$0]  %s6, 16, %s299, [#allocation12]
        $region28: #{cifar_mlp_forward.1} parent=11 // pred_fallthru
          _
        // Predicated region
        $region29: #{cifar_mlp_forward.1} parent=11 // pred_check
          %p302 = pneg %p207
        $region30: #{cifar_mlp_forward.1} parent=11 // pred_check_branch
          %304 = sbr.rel (%p302) target = $region32
        $region31: #{cifar_mlp_forward.1} parent=11 // pred_region
          %s306 = ssub.s32 1024, 1024
          %307 = vsyncadd [#allocation12], %s306
          %s308 = sshll.u32 [#allocation13], 4
          %s309 = int_to_ptr.vmem [resolvable:$true] %s308
          %314 = dma.hbm_to_vmem [thread:$0]  %s7, 1024, %s309, [#allocation12], 64, 64, 4
        $region32: #{cifar_mlp_forward.1} parent=11 // pred_fallthru
          _
        // Predicated region
        $region33: #{cifar_mlp_forward.1} parent=11 // pred_check
          %p315 = pneg %p228
        $region34: #{cifar_mlp_forward.1} parent=11 // pred_check_branch
          %317 = sbr.rel (%p315) target = $region36
        $region35: #{cifar_mlp_forward.1} parent=11 // pred_region
          %s319 = ssub.s32 16, 16
          %320 = vsyncadd [#allocation15], %s319
          %s322 = sshll.u32 [#allocation14], 4
          %s323 = int_to_ptr.vmem [resolvable:$true] %s322
          %325 = dma.hbm_to_vmem [thread:$0]  %s8, 16, %s323, [#allocation15]
        $region36: #{cifar_mlp_forward.1} parent=11 // pred_fallthru
          _
      $region12: #{cifar_mlp_forward.1} parent=5 // pred_fallthru
        _
      %p326 = scmp.lt.s32.totalorder %s24, 4
      // Predicated region
      $region37: #{cifar_mlp_forward.1} parent=5 // pred_check
        %p327 = pneg %p326
      $region38: #{cifar_mlp_forward.1} parent=5 // pred_check_branch
        %329 = sbr.rel (%p327) target = $region40
      $region39: #{cifar_mlp_forward.1} parent=5 // pred_region
        // Predicated region
        $region41: #{cifar_mlp_forward.1} parent=39 // pred_check
          %p330 = pneg %p65
        $region42: #{cifar_mlp_forward.1} parent=39 // pred_check_branch
          %332 = sbr.rel (%p330) target = $region44
        $region43: #{cifar_mlp_forward.1} parent=39 // pred_region
          %s333 = sand.u32 %s55, 1
          %s334 = scalar_lea.sflag [#allocation4], %s333
          %s335 = sand.u32 %s55, 1
          %s336 = smul.addr %s335, 3072
          %s337 = scalar_lea.vmem [#allocation3], %s336
          %s338 = smul.u32 2, %s24
          %s340 = ssub.s32 49152, 49152
          %341 = vsyncadd %s334, %s340
          %s342 = smul.addr %s338, 64
          %s343 = scalar_lea.hbm %s1, %s342
          %s344 = sshll.u32 %s337, 4
          %s345 = int_to_ptr.vmem [resolvable:$true] %s344
          %350 = dma.hbm_to_vmem [thread:$0]  %s343, 49152, %s345, %s334, 512, 128, 8
        $region44: #{cifar_mlp_forward.1} parent=39 // pred_fallthru
          _
        // Predicated region
        $region45: #{cifar_mlp_forward.1} parent=39 // pred_check
          %p351 = pneg %p91
        $region46: #{cifar_mlp_forward.1} parent=39 // pred_check_branch
          %353 = sbr.rel (%p351) target = $region48
        $region47: #{cifar_mlp_forward.1} parent=39 // pred_region
          %s354 = sand.u32 %s24, 1
          %s355 = scalar_lea.sflag [#allocation6], %s354
          %s356 = sand.u32 %s81, 1
          %s357 = smul.addr %s356, 2
          %s358 = scalar_lea.vmem [#allocation5], %s357
          %s359 = smul.u32 2, %s24
          %s361 = ssub.s32 32, 32
          %362 = vsyncadd %s355, %s361
          %s363 = smul.addr %s359, 16
          %s364 = scalar_lea.hbm %s2, %s363
          %s366 = sshll.u32 %s358, 4
          %s367 = int_to_ptr.vmem [resolvable:$true] %s366
          %369 = dma.hbm_to_vmem [thread:$0]  %s364, 32, %s367, %s355
        $region48: #{cifar_mlp_forward.1} parent=39 // pred_fallthru
          _
        // Predicated region
        $region49: #{cifar_mlp_forward.1} parent=39 // pred_check
          %p370 = pneg %p117
        $region50: #{cifar_mlp_forward.1} parent=39 // pred_check_branch
          %372 = sbr.rel (%p370) target = $region52
        $region51: #{cifar_mlp_forward.1} parent=39 // pred_region
          %s373 = sand.u32 %s24, 1
          %s374 = scalar_lea.sflag [#allocation6], %s373
          %s375 = sand.u32 %s107, 1
          %s376 = smul.addr %s375, 512
          %s377 = scalar_lea.vmem [#allocation7], %s376
          %s378 = smul.u32 32, %s24
          %s380 = ssub.s32 8192, 8192
          %381 = vsyncadd %s374, %s380
          %s382 = smul.addr %s378, 4
          %s383 = smul.addr %s382, 64
          %s384 = scalar_lea.hbm %s3, %s383
          %s385 = sshll.u32 %s377, 4
          %s386 = int_to_ptr.vmem [resolvable:$true] %s385
          %391 = dma.hbm_to_vmem [thread:$0]  %s384, 8192, %s386, %s374, 256, 256, 16
        $region52: #{cifar_mlp_forward.1} parent=39 // pred_fallthru
          _
      $region40: #{cifar_mlp_forward.1} parent=5 // pred_fallthru
        _
      %p392 = scmp.le.s32.totalorder 1, %s24
      %p393 = scmp.lt.s32.totalorder %s24, 5
      %p394 = pnand %p392, %p393
      %p395 = pneg %p394
      // Predicated region
      $region53: #{cifar_mlp_forward.1} parent=5 // pred_check
        _
      $region54: #{cifar_mlp_forward.1} parent=5 // pred_check_branch
        %397 = sbr.rel (%p394) target = $region56
      $region55: #{cifar_mlp_forward.1} parent=5 // pred_region
        %s398 = ssub.s32 %s24, 1
        %s399 = sand.u32 %s58, 1
        %s400 = scalar_lea.sflag [#allocation4], %s399
        %s401 = sand.u32 %s58, 1
        %s402 = smul.addr %s401, 3072
        %s403 = scalar_lea.vmem [#allocation3], %s402
        // Predicated region
        $region57: #{cifar_mlp_forward.1} parent=55 // pred_check
          %p404 = pneg %p71
        $region58: #{cifar_mlp_forward.1} parent=55 // pred_check_branch
          %406 = sbr.rel (%p404) target = $region60
        $region59: #{cifar_mlp_forward.1} parent=55 // pred_region
          %407 = dma.done %s400, 49152
        $region60: #{cifar_mlp_forward.1} parent=55 // pred_fallthru
          _
        %s408 = sand.u32 %s29, 1
        %s409 = scalar_lea.sflag [#allocation6], %s408
        %s410 = sand.u32 %s84, 1
        %s411 = smul.addr %s410, 2
        %s412 = scalar_lea.vmem [#allocation5], %s411
        // Predicated region
        $region61: #{cifar_mlp_forward.1} parent=55 // pred_check
          %p413 = pneg %p97
        $region62: #{cifar_mlp_forward.1} parent=55 // pred_check_branch
          %415 = sbr.rel (%p413) target = $region64
        $region63: #{cifar_mlp_forward.1} parent=55 // pred_region
          %416 = dma.done %s409, 32
        $region64: #{cifar_mlp_forward.1} parent=55 // pred_fallthru
          _
        %s417 = sand.u32 %s29, 1
        %s418 = scalar_lea.sflag [#allocation6], %s417
        %s419 = sand.u32 %s110, 1
        %s420 = smul.addr %s419, 512
        %s421 = scalar_lea.vmem [#allocation7], %s420
        // Predicated region
        $region65: #{cifar_mlp_forward.1} parent=55 // pred_check
          %p422 = pneg %p123
        $region66: #{cifar_mlp_forward.1} parent=55 // pred_check_branch
          %424 = sbr.rel (%p422) target = $region68
        $region67: #{cifar_mlp_forward.1} parent=55 // pred_region
          %425 = dma.done %s418, 8192
        $region68: #{cifar_mlp_forward.1} parent=55 // pred_fallthru
          _
        // Predicated region
        $region69: #{cifar_mlp_forward.1} parent=55 // pred_check
          %p426 = pneg %p144
        $region70: #{cifar_mlp_forward.1} parent=55 // pred_check_branch
          %428 = sbr.rel (%p426) target = $region72
        $region71: #{cifar_mlp_forward.1} parent=55 // pred_region
          %429 = dma.done [#allocation9], 64
        $region72: #{cifar_mlp_forward.1} parent=55 // pred_fallthru
          _
        // Predicated region
        $region73: #{cifar_mlp_forward.1} parent=55 // pred_check
          %p430 = pneg %p165
        $region74: #{cifar_mlp_forward.1} parent=55 // pred_check_branch
          %432 = sbr.rel (%p430) target = $region76
        $region75: #{cifar_mlp_forward.1} parent=55 // pred_region
          %433 = dma.done [#allocation9], 4096
        $region76: #{cifar_mlp_forward.1} parent=55 // pred_fallthru
          _
        // Predicated region
        $region77: #{cifar_mlp_forward.1} parent=55 // pred_check
          %p434 = pneg %p186
        $region78: #{cifar_mlp_forward.1} parent=55 // pred_check_branch
          %436 = sbr.rel (%p434) target = $region80
        $region79: #{cifar_mlp_forward.1} parent=55 // pred_region
          %437 = dma.done [#allocation12], 16
        $region80: #{cifar_mlp_forward.1} parent=55 // pred_fallthru
          _
        // Predicated region
        $region81: #{cifar_mlp_forward.1} parent=55 // pred_check
          %p438 = pneg %p207
        $region82: #{cifar_mlp_forward.1} parent=55 // pred_check_branch
          %440 = sbr.rel (%p438) target = $region84
        $region83: #{cifar_mlp_forward.1} parent=55 // pred_region
          %441 = dma.done [#allocation12], 1024
        $region84: #{cifar_mlp_forward.1} parent=55 // pred_fallthru
          _
        // Predicated region
        $region85: #{cifar_mlp_forward.1} parent=55 // pred_check
          %p442 = pneg %p228
        $region86: #{cifar_mlp_forward.1} parent=55 // pred_check_branch
          %444 = sbr.rel (%p442) target = $region88
        $region87: #{cifar_mlp_forward.1} parent=55 // pred_region
          %445 = dma.done [#allocation15], 16
        $region88: #{cifar_mlp_forward.1} parent=55 // pred_fallthru
          _
        %p446 = pneg %p45
        %p447 = pneg %p42
        %s448 = sand.u32 %s58, 1
        %s449 = scalar_lea.sflag [#allocation4], %s448
        %s450 = sand.u32 %s58, 1
        %s451 = smul.addr %s450, 3072
        %s452 = scalar_lea.vmem [#allocation3], %s451
        %p453 = pneg %p71
        %p454 = pneg %p68
        %s455 = sand.u32 %s29, 1
        %s456 = scalar_lea.sflag [#allocation6], %s455
        %s457 = sand.u32 %s84, 1
        %s458 = smul.addr %s457, 2
        %s459 = scalar_lea.vmem [#allocation5], %s458
        %p460 = pneg %p97
        %p461 = pneg %p94
        %s462 = sand.u32 %s29, 1
        %s463 = scalar_lea.sflag [#allocation6], %s462
        %s464 = sand.u32 %s110, 1
        %s465 = smul.addr %s464, 512
        %s466 = scalar_lea.vmem [#allocation7], %s465
        %p467 = pneg %p123
        %p468 = pneg %p120
        %p469 = pneg %p144
        %p470 = pneg %p141
        %p471 = pneg %p165
        %p472 = pneg %p162
        %p473 = pneg %p186
        %p474 = pneg %p183
        %p475 = pneg %p207
        %p476 = pneg %p204
        %p477 = pneg %p228
        %p478 = pneg %p225
        %p479 = pneg %p249
        %p480 = pneg %p246
        %s481 = smul.u32 2, %s29
        %s482 = smul.u32 2, %s29
        %s483 = smul.u32 32, %s29
        %p485 = scmp.eq.s32.totalorder %s29, 0
        // Predicated region
        $region89: #{cifar_mlp_forward.1} parent=55 // pred_check
          %p486 = pneg %p485
        $region90: #{cifar_mlp_forward.1} parent=55 // pred_check_branch
          %488 = sbr.rel (%p486) target = $region92
        $region91: #{cifar_mlp_forward.1} parent=55 // pred_region
          %489 = vst [vmem:[#allocation2] sm:$0xff] 0.0
          %490 = vst [vmem:[#allocation2 + $0x8] sm:$0xff] 0.0
          %491 = vst [vmem:[#allocation2 + $0x10] sm:$0xff] 0.0
          %492 = vst [vmem:[#allocation2 + $0x18] sm:$0xff] 0.0
          %493 = vst [vmem:[#allocation2 + $0x20] sm:$0xff] 0.0
          %494 = vst [vmem:[#allocation2 + $0x28] sm:$0xff] 0.0
          %495 = vst [vmem:[#allocation2 + $0x30] sm:$0xff] 0.0
          %496 = vst [vmem:[#allocation2 + $0x38] sm:$0xff] 0.0
        $region92: #{cifar_mlp_forward.1} parent=55 // pred_fallthru
          _
        %v497 = vld [vmem:[%s0] sm:$0xff]
        %v498 = vld [vmem:[%s0 + $0x8] sm:$0xff]
        %v499 = vld [vmem:[%s0 + $0x10] sm:$0xff]
        %v500 = vld [vmem:[%s0 + $0x18] sm:$0xff]
        %v501 = vld [vmem:[%s0 + $0x20] sm:$0xff]
        %v502 = vld [vmem:[%s0 + $0x28] sm:$0xff]
        %v503 = vld [vmem:[%s0 + $0x30] sm:$0xff]
        %v504 = vld [vmem:[%s0 + $0x38] sm:$0xff]
        %v505 = vld [vmem:[%s0 + $0x40] sm:$0xff]
        %v506 = vld [vmem:[%s0 + $0x48] sm:$0xff]
        %v507 = vld [vmem:[%s0 + $0x50] sm:$0xff]
        %v508 = vld [vmem:[%s0 + $0x58] sm:$0xff]
        %v509 = vld [vmem:[%s0 + $0x60] sm:$0xff]
        %v510 = vld [vmem:[%s0 + $0x68] sm:$0xff]
        %v511 = vld [vmem:[%s0 + $0x70] sm:$0xff]
        %v512 = vld [vmem:[%s0 + $0x78] sm:$0xff]
        %v513 = vld [vmem:[%s0 + $0x80] sm:$0xff]
        %v514 = vld [vmem:[%s0 + $0x88] sm:$0xff]
        %v515 = vld [vmem:[%s0 + $0x90] sm:$0xff]
        %v516 = vld [vmem:[%s0 + $0x98] sm:$0xff]
        %v517 = vld [vmem:[%s0 + $0xa0] sm:$0xff]
        %v518 = vld [vmem:[%s0 + $0xa8] sm:$0xff]
        %v519 = vld [vmem:[%s0 + $0xb0] sm:$0xff]
        %v520 = vld [vmem:[%s0 + $0xb8] sm:$0xff]
        %v521 = vld [vmem:[%s403] sm:$0xff]
        %v522 = vld [vmem:[%s403 + $0x8] sm:$0xff]
        %v523 = vld [vmem:[%s403 + $0x10] sm:$0xff]
        %v524 = vld [vmem:[%s403 + $0x18] sm:$0xff]
        %v525 = vld [vmem:[%s403 + $0x20] sm:$0xff]
        %v526 = vld [vmem:[%s403 + $0x28] sm:$0xff]
        %v527 = vld [vmem:[%s403 + $0x30] sm:$0xff]
        %v528 = vld [vmem:[%s403 + $0x38] sm:$0xff]
        %v529 = vld [vmem:[%s403 + $0x40] sm:$0xff]
        %v530 = vld [vmem:[%s403 + $0x48] sm:$0xff]
        %v531 = vld [vmem:[%s403 + $0x50] sm:$0xff]
        %v532 = vld [vmem:[%s403 + $0x58] sm:$0xff]
        %v533 = vld [vmem:[%s403 + $0x60] sm:$0xff]
        %v534 = vld [vmem:[%s403 + $0x68] sm:$0xff]
        %v535 = vld [vmem:[%s403 + $0x70] sm:$0xff]
        %v536 = vld [vmem:[%s403 + $0x78] sm:$0xff]
        %v537 = vld [vmem:[%s403 + $0x80] sm:$0xff]
        %v538 = vld [vmem:[%s403 + $0x88] sm:$0xff]
        %v539 = vld [vmem:[%s403 + $0x90] sm:$0xff]
        %v540 = vld [vmem:[%s403 + $0x98] sm:$0xff]
        %v541 = vld [vmem:[%s403 + $0xa0] sm:$0xff]
        %v542 = vld [vmem:[%s403 + $0xa8] sm:$0xff]
        %v543 = vld [vmem:[%s403 + $0xb0] sm:$0xff]
        %v544 = vld [vmem:[%s403 + $0xb8] sm:$0xff]
        %v545 = vld [vmem:[%s403 + $0xc0] sm:$0xff]
        %v546 = vld [vmem:[%s403 + $0xc8] sm:$0xff]
        %v547 = vld [vmem:[%s403 + $0xd0] sm:$0xff]
        %v548 = vld [vmem:[%s403 + $0xd8] sm:$0xff]
        %v549 = vld [vmem:[%s403 + $0xe0] sm:$0xff]
        %v550 = vld [vmem:[%s403 + $0xe8] sm:$0xff]
        %v551 = vld [vmem:[%s403 + $0xf0] sm:$0xff]
        %v552 = vld [vmem:[%s403 + $0xf8] sm:$0xff]
        %v553 = vld [vmem:[%s403 + $0x100] sm:$0xff]
        %v554 = vld [vmem:[%s403 + $0x108] sm:$0xff]
        %v555 = vld [vmem:[%s403 + $0x110] sm:$0xff]
        %v556 = vld [vmem:[%s403 + $0x118] sm:$0xff]
        %v557 = vld [vmem:[%s403 + $0x120] sm:$0xff]
        %v558 = vld [vmem:[%s403 + $0x128] sm:$0xff]
        %v559 = vld [vmem:[%s403 + $0x130] sm:$0xff]
        %v560 = vld [vmem:[%s403 + $0x138] sm:$0xff]
        %v561 = vld [vmem:[%s403 + $0x140] sm:$0xff]
        %v562 = vld [vmem:[%s403 + $0x148] sm:$0xff]
        %v563 = vld [vmem:[%s403 + $0x150] sm:$0xff]
        %v564 = vld [vmem:[%s403 + $0x158] sm:$0xff]
        %v565 = vld [vmem:[%s403 + $0x160] sm:$0xff]
        %v566 = vld [vmem:[%s403 + $0x168] sm:$0xff]
        %v567 = vld [vmem:[%s403 + $0x170] sm:$0xff]
        %v568 = vld [vmem:[%s403 + $0x178] sm:$0xff]
        %v569 = vld [vmem:[%s403 + $0x180] sm:$0xff]
        %v570 = vld [vmem:[%s403 + $0x188] sm:$0xff]
        %v571 = vld [vmem:[%s403 + $0x190] sm:$0xff]
        %v572 = vld [vmem:[%s403 + $0x198] sm:$0xff]
        %v573 = vld [vmem:[%s403 + $0x1a0] sm:$0xff]
        %v574 = vld [vmem:[%s403 + $0x1a8] sm:$0xff]
        %v575 = vld [vmem:[%s403 + $0x1b0] sm:$0xff]
        %v576 = vld [vmem:[%s403 + $0x1b8] sm:$0xff]
        %v577 = vld [vmem:[%s403 + $0x1c0] sm:$0xff]
        %v578 = vld [vmem:[%s403 + $0x1c8] sm:$0xff]
        %v579 = vld [vmem:[%s403 + $0x1d0] sm:$0xff]
        %v580 = vld [vmem:[%s403 + $0x1d8] sm:$0xff]
        %v581 = vld [vmem:[%s403 + $0x1e0] sm:$0xff]
        %v582 = vld [vmem:[%s403 + $0x1e8] sm:$0xff]
        %v583 = vld [vmem:[%s403 + $0x1f0] sm:$0xff]
        %v584 = vld [vmem:[%s403 + $0x1f8] sm:$0xff]
        %v585 = vld [vmem:[%s403 + $0x200] sm:$0xff]
        %v586 = vld [vmem:[%s403 + $0x208] sm:$0xff]
        %v587 = vld [vmem:[%s403 + $0x210] sm:$0xff]
        %v588 = vld [vmem:[%s403 + $0x218] sm:$0xff]
        %v589 = vld [vmem:[%s403 + $0x220] sm:$0xff]
        %v590 = vld [vmem:[%s403 + $0x228] sm:$0xff]
        %v591 = vld [vmem:[%s403 + $0x230] sm:$0xff]
        %v592 = vld [vmem:[%s403 + $0x238] sm:$0xff]
        %v593 = vld [vmem:[%s403 + $0x240] sm:$0xff]
        %v594 = vld [vmem:[%s403 + $0x248] sm:$0xff]
        %v595 = vld [vmem:[%s403 + $0x250] sm:$0xff]
        %v596 = vld [vmem:[%s403 + $0x258] sm:$0xff]
        %v597 = vld [vmem:[%s403 + $0x260] sm:$0xff]
        %v598 = vld [vmem:[%s403 + $0x268] sm:$0xff]
        %v599 = vld [vmem:[%s403 + $0x270] sm:$0xff]
        %v600 = vld [vmem:[%s403 + $0x278] sm:$0xff]
        %v601 = vld [vmem:[%s403 + $0x280] sm:$0xff]
        %v602 = vld [vmem:[%s403 + $0x288] sm:$0xff]
        %v603 = vld [vmem:[%s403 + $0x290] sm:$0xff]
        %v604 = vld [vmem:[%s403 + $0x298] sm:$0xff]
        %v605 = vld [vmem:[%s403 + $0x2a0] sm:$0xff]
        %v606 = vld [vmem:[%s403 + $0x2a8] sm:$0xff]
        %v607 = vld [vmem:[%s403 + $0x2b0] sm:$0xff]
        %v608 = vld [vmem:[%s403 + $0x2b8] sm:$0xff]
        %v609 = vld [vmem:[%s403 + $0x2c0] sm:$0xff]
        %v610 = vld [vmem:[%s403 + $0x2c8] sm:$0xff]
        %v611 = vld [vmem:[%s403 + $0x2d0] sm:$0xff]
        %v612 = vld [vmem:[%s403 + $0x2d8] sm:$0xff]
        %v613 = vld [vmem:[%s403 + $0x2e0] sm:$0xff]
        %v614 = vld [vmem:[%s403 + $0x2e8] sm:$0xff]
        %v615 = vld [vmem:[%s403 + $0x2f0] sm:$0xff]
        %v616 = vld [vmem:[%s403 + $0x2f8] sm:$0xff]
        %v617 = vld [vmem:[%s403 + $0x300] sm:$0xff]
        %v618 = vld [vmem:[%s403 + $0x308] sm:$0xff]
        %v619 = vld [vmem:[%s403 + $0x310] sm:$0xff]
        %v620 = vld [vmem:[%s403 + $0x318] sm:$0xff]
        %v621 = vld [vmem:[%s403 + $0x320] sm:$0xff]
        %v622 = vld [vmem:[%s403 + $0x328] sm:$0xff]
        %v623 = vld [vmem:[%s403 + $0x330] sm:$0xff]
        %v624 = vld [vmem:[%s403 + $0x338] sm:$0xff]
        %v625 = vld [vmem:[%s403 + $0x340] sm:$0xff]
        %v626 = vld [vmem:[%s403 + $0x348] sm:$0xff]
        %v627 = vld [vmem:[%s403 + $0x350] sm:$0xff]
        %v628 = vld [vmem:[%s403 + $0x358] sm:$0xff]
        %v629 = vld [vmem:[%s403 + $0x360] sm:$0xff]
        %v630 = vld [vmem:[%s403 + $0x368] sm:$0xff]
        %v631 = vld [vmem:[%s403 + $0x370] sm:$0xff]
        %v632 = vld [vmem:[%s403 + $0x378] sm:$0xff]
        %v633 = vld [vmem:[%s403 + $0x380] sm:$0xff]
        %v634 = vld [vmem:[%s403 + $0x388] sm:$0xff]
        %v635 = vld [vmem:[%s403 + $0x390] sm:$0xff]
        %v636 = vld [vmem:[%s403 + $0x398] sm:$0xff]
        %v637 = vld [vmem:[%s403 + $0x3a0] sm:$0xff]
        %v638 = vld [vmem:[%s403 + $0x3a8] sm:$0xff]
        %v639 = vld [vmem:[%s403 + $0x3b0] sm:$0xff]
        %v640 = vld [vmem:[%s403 + $0x3b8] sm:$0xff]
        %v641 = vld [vmem:[%s403 + $0x3c0] sm:$0xff]
        %v642 = vld [vmem:[%s403 + $0x3c8] sm:$0xff]
        %v643 = vld [vmem:[%s403 + $0x3d0] sm:$0xff]
        %v644 = vld [vmem:[%s403 + $0x3d8] sm:$0xff]
        %v645 = vld [vmem:[%s403 + $0x3e0] sm:$0xff]
        %v646 = vld [vmem:[%s403 + $0x3e8] sm:$0xff]
        %v647 = vld [vmem:[%s403 + $0x3f0] sm:$0xff]
        %v648 = vld [vmem:[%s403 + $0x3f8] sm:$0xff]
        %v649 = vld [vmem:[%s403 + $0x400] sm:$0xff]
        %v650 = vld [vmem:[%s403 + $0x408] sm:$0xff]
        %v651 = vld [vmem:[%s403 + $0x410] sm:$0xff]
        %v652 = vld [vmem:[%s403 + $0x418] sm:$0xff]
        %v653 = vld [vmem:[%s403 + $0x420] sm:$0xff]
        %v654 = vld [vmem:[%s403 + $0x428] sm:$0xff]
        %v655 = vld [vmem:[%s403 + $0x430] sm:$0xff]
        %v656 = vld [vmem:[%s403 + $0x438] sm:$0xff]
        %v657 = vld [vmem:[%s403 + $0x440] sm:$0xff]
        %v658 = vld [vmem:[%s403 + $0x448] sm:$0xff]
        %v659 = vld [vmem:[%s403 + $0x450] sm:$0xff]
        %v660 = vld [vmem:[%s403 + $0x458] sm:$0xff]
        %v661 = vld [vmem:[%s403 + $0x460] sm:$0xff]
        %v662 = vld [vmem:[%s403 + $0x468] sm:$0xff]
        %v663 = vld [vmem:[%s403 + $0x470] sm:$0xff]
        %v664 = vld [vmem:[%s403 + $0x478] sm:$0xff]
        %v665 = vld [vmem:[%s403 + $0x480] sm:$0xff]
        %v666 = vld [vmem:[%s403 + $0x488] sm:$0xff]
        %v667 = vld [vmem:[%s403 + $0x490] sm:$0xff]
        %v668 = vld [vmem:[%s403 + $0x498] sm:$0xff]
        %v669 = vld [vmem:[%s403 + $0x4a0] sm:$0xff]
        %v670 = vld [vmem:[%s403 + $0x4a8] sm:$0xff]
        %v671 = vld [vmem:[%s403 + $0x4b0] sm:$0xff]
        %v672 = vld [vmem:[%s403 + $0x4b8] sm:$0xff]
        %v673 = vld [vmem:[%s403 + $0x4c0] sm:$0xff]
        %v674 = vld [vmem:[%s403 + $0x4c8] sm:$0xff]
        %v675 = vld [vmem:[%s403 + $0x4d0] sm:$0xff]
        %v676 = vld [vmem:[%s403 + $0x4d8] sm:$0xff]
        %v677 = vld [vmem:[%s403 + $0x4e0] sm:$0xff]
        %v678 = vld [vmem:[%s403 + $0x4e8] sm:$0xff]
        %v679 = vld [vmem:[%s403 + $0x4f0] sm:$0xff]
        %v680 = vld [vmem:[%s403 + $0x4f8] sm:$0xff]
        %v681 = vld [vmem:[%s403 + $0x500] sm:$0xff]
        %v682 = vld [vmem:[%s403 + $0x508] sm:$0xff]
        %v683 = vld [vmem:[%s403 + $0x510] sm:$0xff]
        %v684 = vld [vmem:[%s403 + $0x518] sm:$0xff]
        %v685 = vld [vmem:[%s403 + $0x520] sm:$0xff]
        %v686 = vld [vmem:[%s403 + $0x528] sm:$0xff]
        %v687 = vld [vmem:[%s403 + $0x530] sm:$0xff]
        %v688 = vld [vmem:[%s403 + $0x538] sm:$0xff]
        %v689 = vld [vmem:[%s403 + $0x540] sm:$0xff]
        %v690 = vld [vmem:[%s403 + $0x548] sm:$0xff]
        %v691 = vld [vmem:[%s403 + $0x550] sm:$0xff]
        %v692 = vld [vmem:[%s403 + $0x558] sm:$0xff]
        %v693 = vld [vmem:[%s403 + $0x560] sm:$0xff]
        %v694 = vld [vmem:[%s403 + $0x568] sm:$0xff]
        %v695 = vld [vmem:[%s403 + $0x570] sm:$0xff]
        %v696 = vld [vmem:[%s403 + $0x578] sm:$0xff]
        %v697 = vld [vmem:[%s403 + $0x580] sm:$0xff]
        %v698 = vld [vmem:[%s403 + $0x588] sm:$0xff]
        %v699 = vld [vmem:[%s403 + $0x590] sm:$0xff]
        %v700 = vld [vmem:[%s403 + $0x598] sm:$0xff]
        %v701 = vld [vmem:[%s403 + $0x5a0] sm:$0xff]
        %v702 = vld [vmem:[%s403 + $0x5a8] sm:$0xff]
        %v703 = vld [vmem:[%s403 + $0x5b0] sm:$0xff]
        %v704 = vld [vmem:[%s403 + $0x5b8] sm:$0xff]
        %v705 = vld [vmem:[%s403 + $0x5c0] sm:$0xff]
        %v706 = vld [vmem:[%s403 + $0x5c8] sm:$0xff]
        %v707 = vld [vmem:[%s403 + $0x5d0] sm:$0xff]
        %v708 = vld [vmem:[%s403 + $0x5d8] sm:$0xff]
        %v709 = vld [vmem:[%s403 + $0x5e0] sm:$0xff]
        %v710 = vld [vmem:[%s403 + $0x5e8] sm:$0xff]
        %v711 = vld [vmem:[%s403 + $0x5f0] sm:$0xff]
        %v712 = vld [vmem:[%s403 + $0x5f8] sm:$0xff]
        %v713 = vld [vmem:[%s403 + $0x600] sm:$0xff]
        %v714 = vld [vmem:[%s403 + $0x608] sm:$0xff]
        %v715 = vld [vmem:[%s403 + $0x610] sm:$0xff]
        %v716 = vld [vmem:[%s403 + $0x618] sm:$0xff]
        %v717 = vld [vmem:[%s403 + $0x620] sm:$0xff]
        %v718 = vld [vmem:[%s403 + $0x628] sm:$0xff]
        %v719 = vld [vmem:[%s403 + $0x630] sm:$0xff]
        %v720 = vld [vmem:[%s403 + $0x638] sm:$0xff]
        %v721 = vld [vmem:[%s403 + $0x640] sm:$0xff]
        %v722 = vld [vmem:[%s403 + $0x648] sm:$0xff]
        %v723 = vld [vmem:[%s403 + $0x650] sm:$0xff]
        %v724 = vld [vmem:[%s403 + $0x658] sm:$0xff]
        %v725 = vld [vmem:[%s403 + $0x660] sm:$0xff]
        %v726 = vld [vmem:[%s403 + $0x668] sm:$0xff]
        %v727 = vld [vmem:[%s403 + $0x670] sm:$0xff]
        %v728 = vld [vmem:[%s403 + $0x678] sm:$0xff]
        %v729 = vld [vmem:[%s403 + $0x680] sm:$0xff]
        %v730 = vld [vmem:[%s403 + $0x688] sm:$0xff]
        %v731 = vld [vmem:[%s403 + $0x690] sm:$0xff]
        %v732 = vld [vmem:[%s403 + $0x698] sm:$0xff]
        %v733 = vld [vmem:[%s403 + $0x6a0] sm:$0xff]
        %v734 = vld [vmem:[%s403 + $0x6a8] sm:$0xff]
        %v735 = vld [vmem:[%s403 + $0x6b0] sm:$0xff]
        %v736 = vld [vmem:[%s403 + $0x6b8] sm:$0xff]
        %v737 = vld [vmem:[%s403 + $0x6c0] sm:$0xff]
        %v738 = vld [vmem:[%s403 + $0x6c8] sm:$0xff]
        %v739 = vld [vmem:[%s403 + $0x6d0] sm:$0xff]
        %v740 = vld [vmem:[%s403 + $0x6d8] sm:$0xff]
        %v741 = vld [vmem:[%s403 + $0x6e0] sm:$0xff]
        %v742 = vld [vmem:[%s403 + $0x6e8] sm:$0xff]
        %v743 = vld [vmem:[%s403 + $0x6f0] sm:$0xff]
        %v744 = vld [vmem:[%s403 + $0x6f8] sm:$0xff]
        %v745 = vld [vmem:[%s403 + $0x700] sm:$0xff]
        %v746 = vld [vmem:[%s403 + $0x708] sm:$0xff]
        %v747 = vld [vmem:[%s403 + $0x710] sm:$0xff]
        %v748 = vld [vmem:[%s403 + $0x718] sm:$0xff]
        %v749 = vld [vmem:[%s403 + $0x720] sm:$0xff]
        %v750 = vld [vmem:[%s403 + $0x728] sm:$0xff]
        %v751 = vld [vmem:[%s403 + $0x730] sm:$0xff]
        %v752 = vld [vmem:[%s403 + $0x738] sm:$0xff]
        %v753 = vld [vmem:[%s403 + $0x740] sm:$0xff]
        %v754 = vld [vmem:[%s403 + $0x748] sm:$0xff]
        %v755 = vld [vmem:[%s403 + $0x750] sm:$0xff]
        %v756 = vld [vmem:[%s403 + $0x758] sm:$0xff]
        %v757 = vld [vmem:[%s403 + $0x760] sm:$0xff]
        %v758 = vld [vmem:[%s403 + $0x768] sm:$0xff]
        %v759 = vld [vmem:[%s403 + $0x770] sm:$0xff]
        %v760 = vld [vmem:[%s403 + $0x778] sm:$0xff]
        %v761 = vld [vmem:[%s403 + $0x780] sm:$0xff]
        %v762 = vld [vmem:[%s403 + $0x788] sm:$0xff]
        %v763 = vld [vmem:[%s403 + $0x790] sm:$0xff]
        %v764 = vld [vmem:[%s403 + $0x798] sm:$0xff]
        %v765 = vld [vmem:[%s403 + $0x7a0] sm:$0xff]
        %v766 = vld [vmem:[%s403 + $0x7a8] sm:$0xff]
        %v767 = vld [vmem:[%s403 + $0x7b0] sm:$0xff]
        %v768 = vld [vmem:[%s403 + $0x7b8] sm:$0xff]
        %v769 = vld [vmem:[%s403 + $0x7c0] sm:$0xff]
        %v770 = vld [vmem:[%s403 + $0x7c8] sm:$0xff]
        %v771 = vld [vmem:[%s403 + $0x7d0] sm:$0xff]
        %v772 = vld [vmem:[%s403 + $0x7d8] sm:$0xff]
        %v773 = vld [vmem:[%s403 + $0x7e0] sm:$0xff]
        %v774 = vld [vmem:[%s403 + $0x7e8] sm:$0xff]
        %v775 = vld [vmem:[%s403 + $0x7f0] sm:$0xff]
        %v776 = vld [vmem:[%s403 + $0x7f8] sm:$0xff]
        %v777 = vld [vmem:[%s403 + $0x800] sm:$0xff]
        %v778 = vld [vmem:[%s403 + $0x808] sm:$0xff]
        %v779 = vld [vmem:[%s403 + $0x810] sm:$0xff]
        %v780 = vld [vmem:[%s403 + $0x818] sm:$0xff]
        %v781 = vld [vmem:[%s403 + $0x820] sm:$0xff]
        %v782 = vld [vmem:[%s403 + $0x828] sm:$0xff]
        %v783 = vld [vmem:[%s403 + $0x830] sm:$0xff]
        %v784 = vld [vmem:[%s403 + $0x838] sm:$0xff]
        %v785 = vld [vmem:[%s403 + $0x840] sm:$0xff]
        %v786 = vld [vmem:[%s403 + $0x848] sm:$0xff]
        %v787 = vld [vmem:[%s403 + $0x850] sm:$0xff]
        %v788 = vld [vmem:[%s403 + $0x858] sm:$0xff]
        %v789 = vld [vmem:[%s403 + $0x860] sm:$0xff]
        %v790 = vld [vmem:[%s403 + $0x868] sm:$0xff]
        %v791 = vld [vmem:[%s403 + $0x870] sm:$0xff]
        %v792 = vld [vmem:[%s403 + $0x878] sm:$0xff]
        %v793 = vld [vmem:[%s403 + $0x880] sm:$0xff]
        %v794 = vld [vmem:[%s403 + $0x888] sm:$0xff]
        %v795 = vld [vmem:[%s403 + $0x890] sm:$0xff]
        %v796 = vld [vmem:[%s403 + $0x898] sm:$0xff]
        %v797 = vld [vmem:[%s403 + $0x8a0] sm:$0xff]
        %v798 = vld [vmem:[%s403 + $0x8a8] sm:$0xff]
        %v799 = vld [vmem:[%s403 + $0x8b0] sm:$0xff]
        %v800 = vld [vmem:[%s403 + $0x8b8] sm:$0xff]
        %v801 = vld [vmem:[%s403 + $0x8c0] sm:$0xff]
        %v802 = vld [vmem:[%s403 + $0x8c8] sm:$0xff]
        %v803 = vld [vmem:[%s403 + $0x8d0] sm:$0xff]
        %v804 = vld [vmem:[%s403 + $0x8d8] sm:$0xff]
        %v805 = vld [vmem:[%s403 + $0x8e0] sm:$0xff]
        %v806 = vld [vmem:[%s403 + $0x8e8] sm:$0xff]
        %v807 = vld [vmem:[%s403 + $0x8f0] sm:$0xff]
        %v808 = vld [vmem:[%s403 + $0x8f8] sm:$0xff]
        %v809 = vld [vmem:[%s403 + $0x900] sm:$0xff]
        %v810 = vld [vmem:[%s403 + $0x908] sm:$0xff]
        %v811 = vld [vmem:[%s403 + $0x910] sm:$0xff]
        %v812 = vld [vmem:[%s403 + $0x918] sm:$0xff]
        %v813 = vld [vmem:[%s403 + $0x920] sm:$0xff]
        %v814 = vld [vmem:[%s403 + $0x928] sm:$0xff]
        %v815 = vld [vmem:[%s403 + $0x930] sm:$0xff]
        %v816 = vld [vmem:[%s403 + $0x938] sm:$0xff]
        %v817 = vld [vmem:[%s403 + $0x940] sm:$0xff]
        %v818 = vld [vmem:[%s403 + $0x948] sm:$0xff]
        %v819 = vld [vmem:[%s403 + $0x950] sm:$0xff]
        %v820 = vld [vmem:[%s403 + $0x958] sm:$0xff]
        %v821 = vld [vmem:[%s403 + $0x960] sm:$0xff]
        %v822 = vld [vmem:[%s403 + $0x968] sm:$0xff]
        %v823 = vld [vmem:[%s403 + $0x970] sm:$0xff]
        %v824 = vld [vmem:[%s403 + $0x978] sm:$0xff]
        %v825 = vld [vmem:[%s403 + $0x980] sm:$0xff]
        %v826 = vld [vmem:[%s403 + $0x988] sm:$0xff]
        %v827 = vld [vmem:[%s403 + $0x990] sm:$0xff]
        %v828 = vld [vmem:[%s403 + $0x998] sm:$0xff]
        %v829 = vld [vmem:[%s403 + $0x9a0] sm:$0xff]
        %v830 = vld [vmem:[%s403 + $0x9a8] sm:$0xff]
        %v831 = vld [vmem:[%s403 + $0x9b0] sm:$0xff]
        %v832 = vld [vmem:[%s403 + $0x9b8] sm:$0xff]
        %v833 = vld [vmem:[%s403 + $0x9c0] sm:$0xff]
        %v834 = vld [vmem:[%s403 + $0x9c8] sm:$0xff]
        %v835 = vld [vmem:[%s403 + $0x9d0] sm:$0xff]
        %v836 = vld [vmem:[%s403 + $0x9d8] sm:$0xff]
        %v837 = vld [vmem:[%s403 + $0x9e0] sm:$0xff]
        %v838 = vld [vmem:[%s403 + $0x9e8] sm:$0xff]
        %v839 = vld [vmem:[%s403 + $0x9f0] sm:$0xff]
        %v840 = vld [vmem:[%s403 + $0x9f8] sm:$0xff]
        %v841 = vld [vmem:[%s403 + $0xa00] sm:$0xff]
        %v842 = vld [vmem:[%s403 + $0xa08] sm:$0xff]
        %v843 = vld [vmem:[%s403 + $0xa10] sm:$0xff]
        %v844 = vld [vmem:[%s403 + $0xa18] sm:$0xff]
        %v845 = vld [vmem:[%s403 + $0xa20] sm:$0xff]
        %v846 = vld [vmem:[%s403 + $0xa28] sm:$0xff]
        %v847 = vld [vmem:[%s403 + $0xa30] sm:$0xff]
        %v848 = vld [vmem:[%s403 + $0xa38] sm:$0xff]
        %v849 = vld [vmem:[%s403 + $0xa40] sm:$0xff]
        %v850 = vld [vmem:[%s403 + $0xa48] sm:$0xff]
        %v851 = vld [vmem:[%s403 + $0xa50] sm:$0xff]
        %v852 = vld [vmem:[%s403 + $0xa58] sm:$0xff]
        %v853 = vld [vmem:[%s403 + $0xa60] sm:$0xff]
        %v854 = vld [vmem:[%s403 + $0xa68] sm:$0xff]
        %v855 = vld [vmem:[%s403 + $0xa70] sm:$0xff]
        %v856 = vld [vmem:[%s403 + $0xa78] sm:$0xff]
        %v857 = vld [vmem:[%s403 + $0xa80] sm:$0xff]
        %v858 = vld [vmem:[%s403 + $0xa88] sm:$0xff]
        %v859 = vld [vmem:[%s403 + $0xa90] sm:$0xff]
        %v860 = vld [vmem:[%s403 + $0xa98] sm:$0xff]
        %v861 = vld [vmem:[%s403 + $0xaa0] sm:$0xff]
        %v862 = vld [vmem:[%s403 + $0xaa8] sm:$0xff]
        %v863 = vld [vmem:[%s403 + $0xab0] sm:$0xff]
        %v864 = vld [vmem:[%s403 + $0xab8] sm:$0xff]
        %v865 = vld [vmem:[%s403 + $0xac0] sm:$0xff]
        %v866 = vld [vmem:[%s403 + $0xac8] sm:$0xff]
        %v867 = vld [vmem:[%s403 + $0xad0] sm:$0xff]
        %v868 = vld [vmem:[%s403 + $0xad8] sm:$0xff]
        %v869 = vld [vmem:[%s403 + $0xae0] sm:$0xff]
        %v870 = vld [vmem:[%s403 + $0xae8] sm:$0xff]
        %v871 = vld [vmem:[%s403 + $0xaf0] sm:$0xff]
        %v872 = vld [vmem:[%s403 + $0xaf8] sm:$0xff]
        %v873 = vld [vmem:[%s403 + $0xb00] sm:$0xff]
        %v874 = vld [vmem:[%s403 + $0xb08] sm:$0xff]
        %v875 = vld [vmem:[%s403 + $0xb10] sm:$0xff]
        %v876 = vld [vmem:[%s403 + $0xb18] sm:$0xff]
        %v877 = vld [vmem:[%s403 + $0xb20] sm:$0xff]
        %v878 = vld [vmem:[%s403 + $0xb28] sm:$0xff]
        %v879 = vld [vmem:[%s403 + $0xb30] sm:$0xff]
        %v880 = vld [vmem:[%s403 + $0xb38] sm:$0xff]
        %v881 = vld [vmem:[%s403 + $0xb40] sm:$0xff]
        %v882 = vld [vmem:[%s403 + $0xb48] sm:$0xff]
        %v883 = vld [vmem:[%s403 + $0xb50] sm:$0xff]
        %v884 = vld [vmem:[%s403 + $0xb58] sm:$0xff]
        %v885 = vld [vmem:[%s403 + $0xb60] sm:$0xff]
        %v886 = vld [vmem:[%s403 + $0xb68] sm:$0xff]
        %v887 = vld [vmem:[%s403 + $0xb70] sm:$0xff]
        %v888 = vld [vmem:[%s403 + $0xb78] sm:$0xff]
        %v889 = vld [vmem:[%s403 + $0xb80] sm:$0xff]
        %v890 = vld [vmem:[%s403 + $0xb88] sm:$0xff]
        %v891 = vld [vmem:[%s403 + $0xb90] sm:$0xff]
        %v892 = vld [vmem:[%s403 + $0xb98] sm:$0xff]
        %v893 = vld [vmem:[%s403 + $0xba0] sm:$0xff]
        %v894 = vld [vmem:[%s403 + $0xba8] sm:$0xff]
        %v895 = vld [vmem:[%s403 + $0xbb0] sm:$0xff]
        %v896 = vld [vmem:[%s403 + $0xbb8] sm:$0xff]
        %v897 = vld [vmem:[%s403 + $0xbc0] sm:$0xff]
        %v898 = vld [vmem:[%s403 + $0xbc8] sm:$0xff]
        %v899 = vld [vmem:[%s403 + $0xbd0] sm:$0xff]
        %v900 = vld [vmem:[%s403 + $0xbd8] sm:$0xff]
        %v901 = vld [vmem:[%s403 + $0xbe0] sm:$0xff]
        %v902 = vld [vmem:[%s403 + $0xbe8] sm:$0xff]
        %v903 = vld [vmem:[%s403 + $0xbf0] sm:$0xff]
        %v904 = vld [vmem:[%s403 + $0xbf8] sm:$0xff]
        %v905 = vld [vmem:[%s412] sm:$0x3]
        %v907 = vlaneseq
        %v908 = vshrl.u32 %v907, 7
        %v909 = vsub.s32 0, %v908
        %v910 = vrot.slane %v905, %v909
        %v911 = vlaneseq
        %v912 = vshrl.u32 %v911, 7
        %v913 = vsub.s32 1, %v912
        %v914 = vrot.slane %v905, %v913
        %v941 = vunpack.c.l.b16 %v497
        %v942 = vunpack.c.h.b16 %v497
        %v943 = vunpack.c.l.b16 %v498
        %v944 = vunpack.c.h.b16 %v498
        %v945 = vunpack.c.l.b16 %v499
        %v946 = vunpack.c.h.b16 %v499
        %v947 = vunpack.c.l.b16 %v500
        %v948 = vunpack.c.h.b16 %v500
        %v949 = vunpack.c.l.b16 %v501
        %v950 = vunpack.c.h.b16 %v501
        %v951 = vunpack.c.l.b16 %v502
        %v952 = vunpack.c.h.b16 %v502
        %v953 = vunpack.c.l.b16 %v503
        %v954 = vunpack.c.h.b16 %v503
        %v955 = vunpack.c.l.b16 %v504
        %v956 = vunpack.c.h.b16 %v504
        %v957 = vunpack.c.l.b16 %v505
        %v958 = vunpack.c.h.b16 %v505
        %v959 = vunpack.c.l.b16 %v506
        %v960 = vunpack.c.h.b16 %v506
        %v961 = vunpack.c.l.b16 %v507
        %v962 = vunpack.c.h.b16 %v507
        %v963 = vunpack.c.l.b16 %v508
        %v964 = vunpack.c.h.b16 %v508
        %v965 = vunpack.c.l.b16 %v509
        %v966 = vunpack.c.h.b16 %v509
        %v967 = vunpack.c.l.b16 %v510
        %v968 = vunpack.c.h.b16 %v510
        %v969 = vunpack.c.l.b16 %v511
        %v970 = vunpack.c.h.b16 %v511
        %v971 = vunpack.c.l.b16 %v512
        %v972 = vunpack.c.h.b16 %v512
        %v973 = vunpack.c.l.b16 %v513
        %v974 = vunpack.c.h.b16 %v513
        %v975 = vunpack.c.l.b16 %v514
        %v976 = vunpack.c.h.b16 %v514
        %v977 = vunpack.c.l.b16 %v515
        %v978 = vunpack.c.h.b16 %v515
        %v979 = vunpack.c.l.b16 %v516
        %v980 = vunpack.c.h.b16 %v516
        %v981 = vunpack.c.l.b16 %v517
        %v982 = vunpack.c.h.b16 %v517
        %v983 = vunpack.c.l.b16 %v518
        %v984 = vunpack.c.h.b16 %v518
        %v985 = vunpack.c.l.b16 %v519
        %v986 = vunpack.c.h.b16 %v519
        %v987 = vunpack.c.l.b16 %v520
        %v988 = vunpack.c.h.b16 %v520
        %v989 = vpack.c.b16 %v965, %v941
        %v990 = vpack.c.b16 %v966, %v942
        %v991 = vpack.c.b16 %v967, %v943
        %v992 = vpack.c.b16 %v968, %v944
        %v993 = vpack.c.b16 %v969, %v945
        %v994 = vpack.c.b16 %v970, %v946
        %v995 = vpack.c.b16 %v971, %v947
        %v996 = vpack.c.b16 %v972, %v948
        %v997 = vpack.c.b16 %v973, %v949
        %v998 = vpack.c.b16 %v974, %v950
        %v999 = vpack.c.b16 %v975, %v951
        %v1000 = vpack.c.b16 %v976, %v952
        %v1001 = vpack.c.b16 %v977, %v953
        %v1002 = vpack.c.b16 %v978, %v954
        %v1003 = vpack.c.b16 %v979, %v955
        %v1004 = vpack.c.b16 %v980, %v956
        %v1005 = vpack.c.b16 %v981, %v957
        %v1006 = vpack.c.b16 %v982, %v958
        %v1007 = vpack.c.b16 %v983, %v959
        %v1008 = vpack.c.b16 %v984, %v960
        %v1009 = vpack.c.b16 %v985, %v961
        %v1010 = vpack.c.b16 %v986, %v962
        %v1011 = vpack.c.b16 %v987, %v963
        %v1012 = vpack.c.b16 %v988, %v964
        %v1421 = vunpack.c.l.b16 %v521
        %v1422 = vunpack.c.h.b16 %v521
        %v1423 = vunpack.c.l.b16 %v522
        %v1424 = vunpack.c.h.b16 %v522
        %v1425 = vunpack.c.l.b16 %v523
        %v1426 = vunpack.c.h.b16 %v523
        %v1427 = vunpack.c.l.b16 %v524
        %v1428 = vunpack.c.h.b16 %v524
        %v1429 = vunpack.c.l.b16 %v525
        %v1430 = vunpack.c.h.b16 %v525
        %v1431 = vunpack.c.l.b16 %v526
        %v1432 = vunpack.c.h.b16 %v526
        %v1433 = vunpack.c.l.b16 %v527
        %v1434 = vunpack.c.h.b16 %v527
        %v1435 = vunpack.c.l.b16 %v528
        %v1436 = vunpack.c.h.b16 %v528
        %v1437 = vunpack.c.l.b16 %v529
        %v1438 = vunpack.c.h.b16 %v529
        %v1439 = vunpack.c.l.b16 %v530
        %v1440 = vunpack.c.h.b16 %v530
        %v1441 = vunpack.c.l.b16 %v531
        %v1442 = vunpack.c.h.b16 %v531
        %v1443 = vunpack.c.l.b16 %v532
        %v1444 = vunpack.c.h.b16 %v532
        %v1445 = vunpack.c.l.b16 %v533
        %v1446 = vunpack.c.h.b16 %v533
        %v1447 = vunpack.c.l.b16 %v534
        %v1448 = vunpack.c.h.b16 %v534
        %v1449 = vunpack.c.l.b16 %v535
        %v1450 = vunpack.c.h.b16 %v535
        %v1451 = vunpack.c.l.b16 %v536
        %v1452 = vunpack.c.h.b16 %v536
        %v1453 = vunpack.c.l.b16 %v537
        %v1454 = vunpack.c.h.b16 %v537
        %v1455 = vunpack.c.l.b16 %v538
        %v1456 = vunpack.c.h.b16 %v538
        %v1457 = vunpack.c.l.b16 %v539
        %v1458 = vunpack.c.h.b16 %v539
        %v1459 = vunpack.c.l.b16 %v540
        %v1460 = vunpack.c.h.b16 %v540
        %v1461 = vunpack.c.l.b16 %v541
        %v1462 = vunpack.c.h.b16 %v541
        %v1463 = vunpack.c.l.b16 %v542
        %v1464 = vunpack.c.h.b16 %v542
        %v1465 = vunpack.c.l.b16 %v543
        %v1466 = vunpack.c.h.b16 %v543
        %v1467 = vunpack.c.l.b16 %v544
        %v1468 = vunpack.c.h.b16 %v544
        %v1469 = vunpack.c.l.b16 %v545
        %v1470 = vunpack.c.h.b16 %v545
        %v1471 = vunpack.c.l.b16 %v546
        %v1472 = vunpack.c.h.b16 %v546
        %v1473 = vunpack.c.l.b16 %v547
        %v1474 = vunpack.c.h.b16 %v547
        %v1475 = vunpack.c.l.b16 %v548
        %v1476 = vunpack.c.h.b16 %v548
        %v1477 = vunpack.c.l.b16 %v549
        %v1478 = vunpack.c.h.b16 %v549
        %v1479 = vunpack.c.l.b16 %v550
        %v1480 = vunpack.c.h.b16 %v550
        %v1481 = vunpack.c.l.b16 %v551
        %v1482 = vunpack.c.h.b16 %v551
        %v1483 = vunpack.c.l.b16 %v552
        %v1484 = vunpack.c.h.b16 %v552
        %v1485 = vunpack.c.l.b16 %v553
        %v1486 = vunpack.c.h.b16 %v553
        %v1487 = vunpack.c.l.b16 %v554
        %v1488 = vunpack.c.h.b16 %v554
        %v1489 = vunpack.c.l.b16 %v555
        %v1490 = vunpack.c.h.b16 %v555
        %v1491 = vunpack.c.l.b16 %v556
        %v1492 = vunpack.c.h.b16 %v556
        %v1493 = vunpack.c.l.b16 %v557
        %v1494 = vunpack.c.h.b16 %v557
        %v1495 = vunpack.c.l.b16 %v558
        %v1496 = vunpack.c.h.b16 %v558
        %v1497 = vunpack.c.l.b16 %v559
        %v1498 = vunpack.c.h.b16 %v559
        %v1499 = vunpack.c.l.b16 %v560
        %v1500 = vunpack.c.h.b16 %v560
        %v1501 = vunpack.c.l.b16 %v561
        %v1502 = vunpack.c.h.b16 %v561
        %v1503 = vunpack.c.l.b16 %v562
        %v1504 = vunpack.c.h.b16 %v562
        %v1505 = vunpack.c.l.b16 %v563
        %v1506 = vunpack.c.h.b16 %v563
        %v1507 = vunpack.c.l.b16 %v564
        %v1508 = vunpack.c.h.b16 %v564
        %v1509 = vunpack.c.l.b16 %v565
        %v1510 = vunpack.c.h.b16 %v565
        %v1511 = vunpack.c.l.b16 %v566
        %v1512 = vunpack.c.h.b16 %v566
        %v1513 = vunpack.c.l.b16 %v567
        %v1514 = vunpack.c.h.b16 %v567
        %v1515 = vunpack.c.l.b16 %v568
        %v1516 = vunpack.c.h.b16 %v568
        %v1517 = vunpack.c.l.b16 %v569
        %v1518 = vunpack.c.h.b16 %v569
        %v1519 = vunpack.c.l.b16 %v570
        %v1520 = vunpack.c.h.b16 %v570
        %v1521 = vunpack.c.l.b16 %v571
        %v1522 = vunpack.c.h.b16 %v571
        %v1523 = vunpack.c.l.b16 %v572
        %v1524 = vunpack.c.h.b16 %v572
        %v1525 = vunpack.c.l.b16 %v573
        %v1526 = vunpack.c.h.b16 %v573
        %v1527 = vunpack.c.l.b16 %v574
        %v1528 = vunpack.c.h.b16 %v574
        %v1529 = vunpack.c.l.b16 %v575
        %v1530 = vunpack.c.h.b16 %v575
        %v1531 = vunpack.c.l.b16 %v576
        %v1532 = vunpack.c.h.b16 %v576
        %v1533 = vunpack.c.l.b16 %v577
        %v1534 = vunpack.c.h.b16 %v577
        %v1535 = vunpack.c.l.b16 %v578
        %v1536 = vunpack.c.h.b16 %v578
        %v1537 = vunpack.c.l.b16 %v579
        %v1538 = vunpack.c.h.b16 %v579
        %v1539 = vunpack.c.l.b16 %v580
        %v1540 = vunpack.c.h.b16 %v580
        %v1541 = vunpack.c.l.b16 %v581
        %v1542 = vunpack.c.h.b16 %v581
        %v1543 = vunpack.c.l.b16 %v582
        %v1544 = vunpack.c.h.b16 %v582
        %v1545 = vunpack.c.l.b16 %v583
        %v1546 = vunpack.c.h.b16 %v583
        %v1547 = vunpack.c.l.b16 %v584
        %v1548 = vunpack.c.h.b16 %v584
        %v1549 = vunpack.c.l.b16 %v585
        %v1550 = vunpack.c.h.b16 %v585
        %v1551 = vunpack.c.l.b16 %v586
        %v1552 = vunpack.c.h.b16 %v586
        %v1553 = vunpack.c.l.b16 %v587
        %v1554 = vunpack.c.h.b16 %v587
        %v1555 = vunpack.c.l.b16 %v588
        %v1556 = vunpack.c.h.b16 %v588
        %v1557 = vunpack.c.l.b16 %v589
        %v1558 = vunpack.c.h.b16 %v589
        %v1559 = vunpack.c.l.b16 %v590
        %v1560 = vunpack.c.h.b16 %v590
        %v1561 = vunpack.c.l.b16 %v591
        %v1562 = vunpack.c.h.b16 %v591
        %v1563 = vunpack.c.l.b16 %v592
        %v1564 = vunpack.c.h.b16 %v592
        %v1565 = vunpack.c.l.b16 %v593
        %v1566 = vunpack.c.h.b16 %v593
        %v1567 = vunpack.c.l.b16 %v594
        %v1568 = vunpack.c.h.b16 %v594
        %v1569 = vunpack.c.l.b16 %v595
        %v1570 = vunpack.c.h.b16 %v595
        %v1571 = vunpack.c.l.b16 %v596
        %v1572 = vunpack.c.h.b16 %v596
        %v1573 = vunpack.c.l.b16 %v597
        %v1574 = vunpack.c.h.b16 %v597
        %v1575 = vunpack.c.l.b16 %v598
        %v1576 = vunpack.c.h.b16 %v598
        %v1577 = vunpack.c.l.b16 %v599
        %v1578 = vunpack.c.h.b16 %v599
        %v1579 = vunpack.c.l.b16 %v600
        %v1580 = vunpack.c.h.b16 %v600
        %v1581 = vunpack.c.l.b16 %v601
        %v1582 = vunpack.c.h.b16 %v601
        %v1583 = vunpack.c.l.b16 %v602
        %v1584 = vunpack.c.h.b16 %v602
        %v1585 = vunpack.c.l.b16 %v603
        %v1586 = vunpack.c.h.b16 %v603
        %v1587 = vunpack.c.l.b16 %v604
        %v1588 = vunpack.c.h.b16 %v604
        %v1589 = vunpack.c.l.b16 %v605
        %v1590 = vunpack.c.h.b16 %v605
        %v1591 = vunpack.c.l.b16 %v606
        %v1592 = vunpack.c.h.b16 %v606
        %v1593 = vunpack.c.l.b16 %v607
        %v1594 = vunpack.c.h.b16 %v607
        %v1595 = vunpack.c.l.b16 %v608
        %v1596 = vunpack.c.h.b16 %v608
        %v1597 = vunpack.c.l.b16 %v609
        %v1598 = vunpack.c.h.b16 %v609
        %v1599 = vunpack.c.l.b16 %v610
        %v1600 = vunpack.c.h.b16 %v610
        %v1601 = vunpack.c.l.b16 %v611
        %v1602 = vunpack.c.h.b16 %v611
        %v1603 = vunpack.c.l.b16 %v612
        %v1604 = vunpack.c.h.b16 %v612
        %v1605 = vunpack.c.l.b16 %v613
        %v1606 = vunpack.c.h.b16 %v613
        %v1607 = vunpack.c.l.b16 %v614
        %v1608 = vunpack.c.h.b16 %v614
        %v1609 = vunpack.c.l.b16 %v615
        %v1610 = vunpack.c.h.b16 %v615
        %v1611 = vunpack.c.l.b16 %v616
        %v1612 = vunpack.c.h.b16 %v616
        %v1613 = vunpack.c.l.b16 %v617
        %v1614 = vunpack.c.h.b16 %v617
        %v1615 = vunpack.c.l.b16 %v618
        %v1616 = vunpack.c.h.b16 %v618
        %v1617 = vunpack.c.l.b16 %v619
        %v1618 = vunpack.c.h.b16 %v619
        %v1619 = vunpack.c.l.b16 %v620
        %v1620 = vunpack.c.h.b16 %v620
        %v1621 = vunpack.c.l.b16 %v621
        %v1622 = vunpack.c.h.b16 %v621
        %v1623 = vunpack.c.l.b16 %v622
        %v1624 = vunpack.c.h.b16 %v622
        %v1625 = vunpack.c.l.b16 %v623
        %v1626 = vunpack.c.h.b16 %v623
        %v1627 = vunpack.c.l.b16 %v624
        %v1628 = vunpack.c.h.b16 %v624
        %v1629 = vunpack.c.l.b16 %v625
        %v1630 = vunpack.c.h.b16 %v625
        %v1631 = vunpack.c.l.b16 %v626
        %v1632 = vunpack.c.h.b16 %v626
        %v1633 = vunpack.c.l.b16 %v627
        %v1634 = vunpack.c.h.b16 %v627
        %v1635 = vunpack.c.l.b16 %v628
        %v1636 = vunpack.c.h.b16 %v628
        %v1637 = vunpack.c.l.b16 %v629
        %v1638 = vunpack.c.h.b16 %v629
        %v1639 = vunpack.c.l.b16 %v630
        %v1640 = vunpack.c.h.b16 %v630
        %v1641 = vunpack.c.l.b16 %v631
        %v1642 = vunpack.c.h.b16 %v631
        %v1643 = vunpack.c.l.b16 %v632
        %v1644 = vunpack.c.h.b16 %v632
        %v1645 = vunpack.c.l.b16 %v633
        %v1646 = vunpack.c.h.b16 %v633
        %v1647 = vunpack.c.l.b16 %v634
        %v1648 = vunpack.c.h.b16 %v634
        %v1649 = vunpack.c.l.b16 %v635
        %v1650 = vunpack.c.h.b16 %v635
        %v1651 = vunpack.c.l.b16 %v636
        %v1652 = vunpack.c.h.b16 %v636
        %v1653 = vunpack.c.l.b16 %v637
        %v1654 = vunpack.c.h.b16 %v637
        %v1655 = vunpack.c.l.b16 %v638
        %v1656 = vunpack.c.h.b16 %v638
        %v1657 = vunpack.c.l.b16 %v639
        %v1658 = vunpack.c.h.b16 %v639
        %v1659 = vunpack.c.l.b16 %v640
        %v1660 = vunpack.c.h.b16 %v640
        %v1661 = vunpack.c.l.b16 %v641
        %v1662 = vunpack.c.h.b16 %v641
        %v1663 = vunpack.c.l.b16 %v642
        %v1664 = vunpack.c.h.b16 %v642
        %v1665 = vunpack.c.l.b16 %v643
        %v1666 = vunpack.c.h.b16 %v643
        %v1667 = vunpack.c.l.b16 %v644
        %v1668 = vunpack.c.h.b16 %v644
        %v1669 = vunpack.c.l.b16 %v645
        %v1670 = vunpack.c.h.b16 %v645
        %v1671 = vunpack.c.l.b16 %v646
        %v1672 = vunpack.c.h.b16 %v646
        %v1673 = vunpack.c.l.b16 %v647
        %v1674 = vunpack.c.h.b16 %v647
        %v1675 = vunpack.c.l.b16 %v648
        %v1676 = vunpack.c.h.b16 %v648
        %v1677 = vunpack.c.l.b16 %v649
        %v1678 = vunpack.c.h.b16 %v649
        %v1679 = vunpack.c.l.b16 %v650
        %v1680 = vunpack.c.h.b16 %v650
        %v1681 = vunpack.c.l.b16 %v651
        %v1682 = vunpack.c.h.b16 %v651
        %v1683 = vunpack.c.l.b16 %v652
        %v1684 = vunpack.c.h.b16 %v652
        %v1685 = vunpack.c.l.b16 %v653
        %v1686 = vunpack.c.h.b16 %v653
        %v1687 = vunpack.c.l.b16 %v654
        %v1688 = vunpack.c.h.b16 %v654
        %v1689 = vunpack.c.l.b16 %v655
        %v1690 = vunpack.c.h.b16 %v655
        %v1691 = vunpack.c.l.b16 %v656
        %v1692 = vunpack.c.h.b16 %v656
        %v1693 = vunpack.c.l.b16 %v657
        %v1694 = vunpack.c.h.b16 %v657
        %v1695 = vunpack.c.l.b16 %v658
        %v1696 = vunpack.c.h.b16 %v658
        %v1697 = vunpack.c.l.b16 %v659
        %v1698 = vunpack.c.h.b16 %v659
        %v1699 = vunpack.c.l.b16 %v660
        %v1700 = vunpack.c.h.b16 %v660
        %v1701 = vunpack.c.l.b16 %v661
        %v1702 = vunpack.c.h.b16 %v661
        %v1703 = vunpack.c.l.b16 %v662
        %v1704 = vunpack.c.h.b16 %v662
        %v1705 = vunpack.c.l.b16 %v663
        %v1706 = vunpack.c.h.b16 %v663
        %v1707 = vunpack.c.l.b16 %v664
        %v1708 = vunpack.c.h.b16 %v664
        %v1709 = vunpack.c.l.b16 %v665
        %v1710 = vunpack.c.h.b16 %v665
        %v1711 = vunpack.c.l.b16 %v666
        %v1712 = vunpack.c.h.b16 %v666
        %v1713 = vunpack.c.l.b16 %v667
        %v1714 = vunpack.c.h.b16 %v667
        %v1715 = vunpack.c.l.b16 %v668
        %v1716 = vunpack.c.h.b16 %v668
        %v1717 = vunpack.c.l.b16 %v669
        %v1718 = vunpack.c.h.b16 %v669
        %v1719 = vunpack.c.l.b16 %v670
        %v1720 = vunpack.c.h.b16 %v670
        %v1721 = vunpack.c.l.b16 %v671
        %v1722 = vunpack.c.h.b16 %v671
        %v1723 = vunpack.c.l.b16 %v672
        %v1724 = vunpack.c.h.b16 %v672
        %v1725 = vunpack.c.l.b16 %v673
        %v1726 = vunpack.c.h.b16 %v673
        %v1727 = vunpack.c.l.b16 %v674
        %v1728 = vunpack.c.h.b16 %v674
        %v1729 = vunpack.c.l.b16 %v675
        %v1730 = vunpack.c.h.b16 %v675
        %v1731 = vunpack.c.l.b16 %v676
        %v1732 = vunpack.c.h.b16 %v676
        %v1733 = vunpack.c.l.b16 %v677
        %v1734 = vunpack.c.h.b16 %v677
        %v1735 = vunpack.c.l.b16 %v678
        %v1736 = vunpack.c.h.b16 %v678
        %v1737 = vunpack.c.l.b16 %v679
        %v1738 = vunpack.c.h.b16 %v679
        %v1739 = vunpack.c.l.b16 %v680
        %v1740 = vunpack.c.h.b16 %v680
        %v1741 = vunpack.c.l.b16 %v681
        %v1742 = vunpack.c.h.b16 %v681
        %v1743 = vunpack.c.l.b16 %v682
        %v1744 = vunpack.c.h.b16 %v682
        %v1745 = vunpack.c.l.b16 %v683
        %v1746 = vunpack.c.h.b16 %v683
        %v1747 = vunpack.c.l.b16 %v684
        %v1748 = vunpack.c.h.b16 %v684
        %v1749 = vunpack.c.l.b16 %v685
        %v1750 = vunpack.c.h.b16 %v685
        %v1751 = vunpack.c.l.b16 %v686
        %v1752 = vunpack.c.h.b16 %v686
        %v1753 = vunpack.c.l.b16 %v687
        %v1754 = vunpack.c.h.b16 %v687
        %v1755 = vunpack.c.l.b16 %v688
        %v1756 = vunpack.c.h.b16 %v688
        %v1757 = vunpack.c.l.b16 %v689
        %v1758 = vunpack.c.h.b16 %v689
        %v1759 = vunpack.c.l.b16 %v690
        %v1760 = vunpack.c.h.b16 %v690
        %v1761 = vunpack.c.l.b16 %v691
        %v1762 = vunpack.c.h.b16 %v691
        %v1763 = vunpack.c.l.b16 %v692
        %v1764 = vunpack.c.h.b16 %v692
        %v1765 = vunpack.c.l.b16 %v693
        %v1766 = vunpack.c.h.b16 %v693
        %v1767 = vunpack.c.l.b16 %v694
        %v1768 = vunpack.c.h.b16 %v694
        %v1769 = vunpack.c.l.b16 %v695
        %v1770 = vunpack.c.h.b16 %v695
        %v1771 = vunpack.c.l.b16 %v696
        %v1772 = vunpack.c.h.b16 %v696
        %v1773 = vunpack.c.l.b16 %v697
        %v1774 = vunpack.c.h.b16 %v697
        %v1775 = vunpack.c.l.b16 %v698
        %v1776 = vunpack.c.h.b16 %v698
        %v1777 = vunpack.c.l.b16 %v699
        %v1778 = vunpack.c.h.b16 %v699
        %v1779 = vunpack.c.l.b16 %v700
        %v1780 = vunpack.c.h.b16 %v700
        %v1781 = vunpack.c.l.b16 %v701
        %v1782 = vunpack.c.h.b16 %v701
        %v1783 = vunpack.c.l.b16 %v702
        %v1784 = vunpack.c.h.b16 %v702
        %v1785 = vunpack.c.l.b16 %v703
        %v1786 = vunpack.c.h.b16 %v703
        %v1787 = vunpack.c.l.b16 %v704
        %v1788 = vunpack.c.h.b16 %v704
        %v1789 = vunpack.c.l.b16 %v705
        %v1790 = vunpack.c.h.b16 %v705
        %v1791 = vunpack.c.l.b16 %v706
        %v1792 = vunpack.c.h.b16 %v706
        %v1793 = vunpack.c.l.b16 %v707
        %v1794 = vunpack.c.h.b16 %v707
        %v1795 = vunpack.c.l.b16 %v708
        %v1796 = vunpack.c.h.b16 %v708
        %v1797 = vunpack.c.l.b16 %v709
        %v1798 = vunpack.c.h.b16 %v709
        %v1799 = vunpack.c.l.b16 %v710
        %v1800 = vunpack.c.h.b16 %v710
        %v1801 = vunpack.c.l.b16 %v711
        %v1802 = vunpack.c.h.b16 %v711
        %v1803 = vunpack.c.l.b16 %v712
        %v1804 = vunpack.c.h.b16 %v712
        %v1805 = vunpack.c.l.b16 %v713
        %v1806 = vunpack.c.h.b16 %v713
        %v1807 = vunpack.c.l.b16 %v714
        %v1808 = vunpack.c.h.b16 %v714
        %v1809 = vunpack.c.l.b16 %v715
        %v1810 = vunpack.c.h.b16 %v715
        %v1811 = vunpack.c.l.b16 %v716
        %v1812 = vunpack.c.h.b16 %v716
        %v1813 = vunpack.c.l.b16 %v717
        %v1814 = vunpack.c.h.b16 %v717
        %v1815 = vunpack.c.l.b16 %v718
        %v1816 = vunpack.c.h.b16 %v718
        %v1817 = vunpack.c.l.b16 %v719
        %v1818 = vunpack.c.h.b16 %v719
        %v1819 = vunpack.c.l.b16 %v720
        %v1820 = vunpack.c.h.b16 %v720
        %v1821 = vunpack.c.l.b16 %v721
        %v1822 = vunpack.c.h.b16 %v721
        %v1823 = vunpack.c.l.b16 %v722
        %v1824 = vunpack.c.h.b16 %v722
        %v1825 = vunpack.c.l.b16 %v723
        %v1826 = vunpack.c.h.b16 %v723
        %v1827 = vunpack.c.l.b16 %v724
        %v1828 = vunpack.c.h.b16 %v724
        %v1829 = vunpack.c.l.b16 %v725
        %v1830 = vunpack.c.h.b16 %v725
        %v1831 = vunpack.c.l.b16 %v726
        %v1832 = vunpack.c.h.b16 %v726
        %v1833 = vunpack.c.l.b16 %v727
        %v1834 = vunpack.c.h.b16 %v727
        %v1835 = vunpack.c.l.b16 %v728
        %v1836 = vunpack.c.h.b16 %v728
        %v1837 = vunpack.c.l.b16 %v729
        %v1838 = vunpack.c.h.b16 %v729
        %v1839 = vunpack.c.l.b16 %v730
        %v1840 = vunpack.c.h.b16 %v730
        %v1841 = vunpack.c.l.b16 %v731
        %v1842 = vunpack.c.h.b16 %v731
        %v1843 = vunpack.c.l.b16 %v732
        %v1844 = vunpack.c.h.b16 %v732
        %v1845 = vunpack.c.l.b16 %v733
        %v1846 = vunpack.c.h.b16 %v733
        %v1847 = vunpack.c.l.b16 %v734
        %v1848 = vunpack.c.h.b16 %v734
        %v1849 = vunpack.c.l.b16 %v735
        %v1850 = vunpack.c.h.b16 %v735
        %v1851 = vunpack.c.l.b16 %v736
        %v1852 = vunpack.c.h.b16 %v736
        %v1853 = vunpack.c.l.b16 %v737
        %v1854 = vunpack.c.h.b16 %v737
        %v1855 = vunpack.c.l.b16 %v738
        %v1856 = vunpack.c.h.b16 %v738
        %v1857 = vunpack.c.l.b16 %v739
        %v1858 = vunpack.c.h.b16 %v739
        %v1859 = vunpack.c.l.b16 %v740
        %v1860 = vunpack.c.h.b16 %v740
        %v1861 = vunpack.c.l.b16 %v741
        %v1862 = vunpack.c.h.b16 %v741
        %v1863 = vunpack.c.l.b16 %v742
        %v1864 = vunpack.c.h.b16 %v742
        %v1865 = vunpack.c.l.b16 %v743
        %v1866 = vunpack.c.h.b16 %v743
        %v1867 = vunpack.c.l.b16 %v744
        %v1868 = vunpack.c.h.b16 %v744
        %v1869 = vunpack.c.l.b16 %v745
        %v1870 = vunpack.c.h.b16 %v745
        %v1871 = vunpack.c.l.b16 %v746
        %v1872 = vunpack.c.h.b16 %v746
        %v1873 = vunpack.c.l.b16 %v747
        %v1874 = vunpack.c.h.b16 %v747
        %v1875 = vunpack.c.l.b16 %v748
        %v1876 = vunpack.c.h.b16 %v748
        %v1877 = vunpack.c.l.b16 %v749
        %v1878 = vunpack.c.h.b16 %v749
        %v1879 = vunpack.c.l.b16 %v750
        %v1880 = vunpack.c.h.b16 %v750
        %v1881 = vunpack.c.l.b16 %v751
        %v1882 = vunpack.c.h.b16 %v751
        %v1883 = vunpack.c.l.b16 %v752
        %v1884 = vunpack.c.h.b16 %v752
        %v1885 = vunpack.c.l.b16 %v753
        %v1886 = vunpack.c.h.b16 %v753
        %v1887 = vunpack.c.l.b16 %v754
        %v1888 = vunpack.c.h.b16 %v754
        %v1889 = vunpack.c.l.b16 %v755
        %v1890 = vunpack.c.h.b16 %v755
        %v1891 = vunpack.c.l.b16 %v756
        %v1892 = vunpack.c.h.b16 %v756
        %v1893 = vunpack.c.l.b16 %v757
        %v1894 = vunpack.c.h.b16 %v757
        %v1895 = vunpack.c.l.b16 %v758
        %v1896 = vunpack.c.h.b16 %v758
        %v1897 = vunpack.c.l.b16 %v759
        %v1898 = vunpack.c.h.b16 %v759
        %v1899 = vunpack.c.l.b16 %v760
        %v1900 = vunpack.c.h.b16 %v760
        %v1901 = vunpack.c.l.b16 %v761
        %v1902 = vunpack.c.h.b16 %v761
        %v1903 = vunpack.c.l.b16 %v762
        %v1904 = vunpack.c.h.b16 %v762
        %v1905 = vunpack.c.l.b16 %v763
        %v1906 = vunpack.c.h.b16 %v763
        %v1907 = vunpack.c.l.b16 %v764
        %v1908 = vunpack.c.h.b16 %v764
        %v1909 = vunpack.c.l.b16 %v765
        %v1910 = vunpack.c.h.b16 %v765
        %v1911 = vunpack.c.l.b16 %v766
        %v1912 = vunpack.c.h.b16 %v766
        %v1913 = vunpack.c.l.b16 %v767
        %v1914 = vunpack.c.h.b16 %v767
        %v1915 = vunpack.c.l.b16 %v768
        %v1916 = vunpack.c.h.b16 %v768
        %v1917 = vunpack.c.l.b16 %v769
        %v1918 = vunpack.c.h.b16 %v769
        %v1919 = vunpack.c.l.b16 %v770
        %v1920 = vunpack.c.h.b16 %v770
        %v1921 = vunpack.c.l.b16 %v771
        %v1922 = vunpack.c.h.b16 %v771
        %v1923 = vunpack.c.l.b16 %v772
        %v1924 = vunpack.c.h.b16 %v772
        %v1925 = vunpack.c.l.b16 %v773
        %v1926 = vunpack.c.h.b16 %v773
        %v1927 = vunpack.c.l.b16 %v774
        %v1928 = vunpack.c.h.b16 %v774
        %v1929 = vunpack.c.l.b16 %v775
        %v1930 = vunpack.c.h.b16 %v775
        %v1931 = vunpack.c.l.b16 %v776
        %v1932 = vunpack.c.h.b16 %v776
        %v1933 = vunpack.c.l.b16 %v777
        %v1934 = vunpack.c.h.b16 %v777
        %v1935 = vunpack.c.l.b16 %v778
        %v1936 = vunpack.c.h.b16 %v778
        %v1937 = vunpack.c.l.b16 %v779
        %v1938 = vunpack.c.h.b16 %v779
        %v1939 = vunpack.c.l.b16 %v780
        %v1940 = vunpack.c.h.b16 %v780
        %v1941 = vunpack.c.l.b16 %v781
        %v1942 = vunpack.c.h.b16 %v781
        %v1943 = vunpack.c.l.b16 %v782
        %v1944 = vunpack.c.h.b16 %v782
        %v1945 = vunpack.c.l.b16 %v783
        %v1946 = vunpack.c.h.b16 %v783
        %v1947 = vunpack.c.l.b16 %v784
        %v1948 = vunpack.c.h.b16 %v784
        %v1949 = vunpack.c.l.b16 %v785
        %v1950 = vunpack.c.h.b16 %v785
        %v1951 = vunpack.c.l.b16 %v786
        %v1952 = vunpack.c.h.b16 %v786
        %v1953 = vunpack.c.l.b16 %v787
        %v1954 = vunpack.c.h.b16 %v787
        %v1955 = vunpack.c.l.b16 %v788
        %v1956 = vunpack.c.h.b16 %v788
        %v1957 = vunpack.c.l.b16 %v789
        %v1958 = vunpack.c.h.b16 %v789
        %v1959 = vunpack.c.l.b16 %v790
        %v1960 = vunpack.c.h.b16 %v790
        %v1961 = vunpack.c.l.b16 %v791
        %v1962 = vunpack.c.h.b16 %v791
        %v1963 = vunpack.c.l.b16 %v792
        %v1964 = vunpack.c.h.b16 %v792
        %v1965 = vunpack.c.l.b16 %v793
        %v1966 = vunpack.c.h.b16 %v793
        %v1967 = vunpack.c.l.b16 %v794
        %v1968 = vunpack.c.h.b16 %v794
        %v1969 = vunpack.c.l.b16 %v795
        %v1970 = vunpack.c.h.b16 %v795
        %v1971 = vunpack.c.l.b16 %v796
        %v1972 = vunpack.c.h.b16 %v796
        %v1973 = vunpack.c.l.b16 %v797
        %v1974 = vunpack.c.h.b16 %v797
        %v1975 = vunpack.c.l.b16 %v798
        %v1976 = vunpack.c.h.b16 %v798
        %v1977 = vunpack.c.l.b16 %v799
        %v1978 = vunpack.c.h.b16 %v799
        %v1979 = vunpack.c.l.b16 %v800
        %v1980 = vunpack.c.h.b16 %v800
        %v1981 = vunpack.c.l.b16 %v801
        %v1982 = vunpack.c.h.b16 %v801
        %v1983 = vunpack.c.l.b16 %v802
        %v1984 = vunpack.c.h.b16 %v802
        %v1985 = vunpack.c.l.b16 %v803
        %v1986 = vunpack.c.h.b16 %v803
        %v1987 = vunpack.c.l.b16 %v804
        %v1988 = vunpack.c.h.b16 %v804
        %v1989 = vunpack.c.l.b16 %v805
        %v1990 = vunpack.c.h.b16 %v805
        %v1991 = vunpack.c.l.b16 %v806
        %v1992 = vunpack.c.h.b16 %v806
        %v1993 = vunpack.c.l.b16 %v807
        %v1994 = vunpack.c.h.b16 %v807
        %v1995 = vunpack.c.l.b16 %v808
        %v1996 = vunpack.c.h.b16 %v808
        %v1997 = vunpack.c.l.b16 %v809
        %v1998 = vunpack.c.h.b16 %v809
        %v1999 = vunpack.c.l.b16 %v810
        %v2000 = vunpack.c.h.b16 %v810
        %v2001 = vunpack.c.l.b16 %v811
        %v2002 = vunpack.c.h.b16 %v811
        %v2003 = vunpack.c.l.b16 %v812
        %v2004 = vunpack.c.h.b16 %v812
        %v2005 = vunpack.c.l.b16 %v813
        %v2006 = vunpack.c.h.b16 %v813
        %v2007 = vunpack.c.l.b16 %v814
        %v2008 = vunpack.c.h.b16 %v814
        %v2009 = vunpack.c.l.b16 %v815
        %v2010 = vunpack.c.h.b16 %v815
        %v2011 = vunpack.c.l.b16 %v816
        %v2012 = vunpack.c.h.b16 %v816
        %v2013 = vunpack.c.l.b16 %v817
        %v2014 = vunpack.c.h.b16 %v817
        %v2015 = vunpack.c.l.b16 %v818
        %v2016 = vunpack.c.h.b16 %v818
        %v2017 = vunpack.c.l.b16 %v819
        %v2018 = vunpack.c.h.b16 %v819
        %v2019 = vunpack.c.l.b16 %v820
        %v2020 = vunpack.c.h.b16 %v820
        %v2021 = vunpack.c.l.b16 %v821
        %v2022 = vunpack.c.h.b16 %v821
        %v2023 = vunpack.c.l.b16 %v822
        %v2024 = vunpack.c.h.b16 %v822
        %v2025 = vunpack.c.l.b16 %v823
        %v2026 = vunpack.c.h.b16 %v823
        %v2027 = vunpack.c.l.b16 %v824
        %v2028 = vunpack.c.h.b16 %v824
        %v2029 = vunpack.c.l.b16 %v825
        %v2030 = vunpack.c.h.b16 %v825
        %v2031 = vunpack.c.l.b16 %v826
        %v2032 = vunpack.c.h.b16 %v826
        %v2033 = vunpack.c.l.b16 %v827
        %v2034 = vunpack.c.h.b16 %v827
        %v2035 = vunpack.c.l.b16 %v828
        %v2036 = vunpack.c.h.b16 %v828
        %v2037 = vunpack.c.l.b16 %v829
        %v2038 = vunpack.c.h.b16 %v829
        %v2039 = vunpack.c.l.b16 %v830
        %v2040 = vunpack.c.h.b16 %v830
        %v2041 = vunpack.c.l.b16 %v831
        %v2042 = vunpack.c.h.b16 %v831
        %v2043 = vunpack.c.l.b16 %v832
        %v2044 = vunpack.c.h.b16 %v832
        %v2045 = vunpack.c.l.b16 %v833
        %v2046 = vunpack.c.h.b16 %v833
        %v2047 = vunpack.c.l.b16 %v834
        %v2048 = vunpack.c.h.b16 %v834
        %v2049 = vunpack.c.l.b16 %v835
        %v2050 = vunpack.c.h.b16 %v835
        %v2051 = vunpack.c.l.b16 %v836
        %v2052 = vunpack.c.h.b16 %v836
        %v2053 = vunpack.c.l.b16 %v837
        %v2054 = vunpack.c.h.b16 %v837
        %v2055 = vunpack.c.l.b16 %v838
        %v2056 = vunpack.c.h.b16 %v838
        %v2057 = vunpack.c.l.b16 %v839
        %v2058 = vunpack.c.h.b16 %v839
        %v2059 = vunpack.c.l.b16 %v840
        %v2060 = vunpack.c.h.b16 %v840
        %v2061 = vunpack.c.l.b16 %v841
        %v2062 = vunpack.c.h.b16 %v841
        %v2063 = vunpack.c.l.b16 %v842
        %v2064 = vunpack.c.h.b16 %v842
        %v2065 = vunpack.c.l.b16 %v843
        %v2066 = vunpack.c.h.b16 %v843
        %v2067 = vunpack.c.l.b16 %v844
        %v2068 = vunpack.c.h.b16 %v844
        %v2069 = vunpack.c.l.b16 %v845
        %v2070 = vunpack.c.h.b16 %v845
        %v2071 = vunpack.c.l.b16 %v846
        %v2072 = vunpack.c.h.b16 %v846
        %v2073 = vunpack.c.l.b16 %v847
        %v2074 = vunpack.c.h.b16 %v847
        %v2075 = vunpack.c.l.b16 %v848
        %v2076 = vunpack.c.h.b16 %v848
        %v2077 = vunpack.c.l.b16 %v849
        %v2078 = vunpack.c.h.b16 %v849
        %v2079 = vunpack.c.l.b16 %v850
        %v2080 = vunpack.c.h.b16 %v850
        %v2081 = vunpack.c.l.b16 %v851
        %v2082 = vunpack.c.h.b16 %v851
        %v2083 = vunpack.c.l.b16 %v852
        %v2084 = vunpack.c.h.b16 %v852
        %v2085 = vunpack.c.l.b16 %v853
        %v2086 = vunpack.c.h.b16 %v853
        %v2087 = vunpack.c.l.b16 %v854
        %v2088 = vunpack.c.h.b16 %v854
        %v2089 = vunpack.c.l.b16 %v855
        %v2090 = vunpack.c.h.b16 %v855
        %v2091 = vunpack.c.l.b16 %v856
        %v2092 = vunpack.c.h.b16 %v856
        %v2093 = vunpack.c.l.b16 %v857
        %v2094 = vunpack.c.h.b16 %v857
        %v2095 = vunpack.c.l.b16 %v858
        %v2096 = vunpack.c.h.b16 %v858
        %v2097 = vunpack.c.l.b16 %v859
        %v2098 = vunpack.c.h.b16 %v859
        %v2099 = vunpack.c.l.b16 %v860
        %v2100 = vunpack.c.h.b16 %v860
        %v2101 = vunpack.c.l.b16 %v861
        %v2102 = vunpack.c.h.b16 %v861
        %v2103 = vunpack.c.l.b16 %v862
        %v2104 = vunpack.c.h.b16 %v862
        %v2105 = vunpack.c.l.b16 %v863
        %v2106 = vunpack.c.h.b16 %v863
        %v2107 = vunpack.c.l.b16 %v864
        %v2108 = vunpack.c.h.b16 %v864
        %v2109 = vunpack.c.l.b16 %v865
        %v2110 = vunpack.c.h.b16 %v865
        %v2111 = vunpack.c.l.b16 %v866
        %v2112 = vunpack.c.h.b16 %v866
        %v2113 = vunpack.c.l.b16 %v867
        %v2114 = vunpack.c.h.b16 %v867
        %v2115 = vunpack.c.l.b16 %v868
        %v2116 = vunpack.c.h.b16 %v868
        %v2117 = vunpack.c.l.b16 %v869
        %v2118 = vunpack.c.h.b16 %v869
        %v2119 = vunpack.c.l.b16 %v870
        %v2120 = vunpack.c.h.b16 %v870
        %v2121 = vunpack.c.l.b16 %v871
        %v2122 = vunpack.c.h.b16 %v871
        %v2123 = vunpack.c.l.b16 %v872
        %v2124 = vunpack.c.h.b16 %v872
        %v2125 = vunpack.c.l.b16 %v873
        %v2126 = vunpack.c.h.b16 %v873
        %v2127 = vunpack.c.l.b16 %v874
        %v2128 = vunpack.c.h.b16 %v874
        %v2129 = vunpack.c.l.b16 %v875
        %v2130 = vunpack.c.h.b16 %v875
        %v2131 = vunpack.c.l.b16 %v876
        %v2132 = vunpack.c.h.b16 %v876
        %v2133 = vunpack.c.l.b16 %v877
        %v2134 = vunpack.c.h.b16 %v877
        %v2135 = vunpack.c.l.b16 %v878
        %v2136 = vunpack.c.h.b16 %v878
        %v2137 = vunpack.c.l.b16 %v879
        %v2138 = vunpack.c.h.b16 %v879
        %v2139 = vunpack.c.l.b16 %v880
        %v2140 = vunpack.c.h.b16 %v880
        %v2141 = vunpack.c.l.b16 %v881
        %v2142 = vunpack.c.h.b16 %v881
        %v2143 = vunpack.c.l.b16 %v882
        %v2144 = vunpack.c.h.b16 %v882
        %v2145 = vunpack.c.l.b16 %v883
        %v2146 = vunpack.c.h.b16 %v883
        %v2147 = vunpack.c.l.b16 %v884
        %v2148 = vunpack.c.h.b16 %v884
        %v2149 = vunpack.c.l.b16 %v885
        %v2150 = vunpack.c.h.b16 %v885
        %v2151 = vunpack.c.l.b16 %v886
        %v2152 = vunpack.c.h.b16 %v886
        %v2153 = vunpack.c.l.b16 %v887
        %v2154 = vunpack.c.h.b16 %v887
        %v2155 = vunpack.c.l.b16 %v888
        %v2156 = vunpack.c.h.b16 %v888
        %v2157 = vunpack.c.l.b16 %v889
        %v2158 = vunpack.c.h.b16 %v889
        %v2159 = vunpack.c.l.b16 %v890
        %v2160 = vunpack.c.h.b16 %v890
        %v2161 = vunpack.c.l.b16 %v891
        %v2162 = vunpack.c.h.b16 %v891
        %v2163 = vunpack.c.l.b16 %v892
        %v2164 = vunpack.c.h.b16 %v892
        %v2165 = vunpack.c.l.b16 %v893
        %v2166 = vunpack.c.h.b16 %v893
        %v2167 = vunpack.c.l.b16 %v894
        %v2168 = vunpack.c.h.b16 %v894
        %v2169 = vunpack.c.l.b16 %v895
        %v2170 = vunpack.c.h.b16 %v895
        %v2171 = vunpack.c.l.b16 %v896
        %v2172 = vunpack.c.h.b16 %v896
        %v2173 = vunpack.c.l.b16 %v897
        %v2174 = vunpack.c.h.b16 %v897
        %v2175 = vunpack.c.l.b16 %v898
        %v2176 = vunpack.c.h.b16 %v898
        %v2177 = vunpack.c.l.b16 %v899
        %v2178 = vunpack.c.h.b16 %v899
        %v2179 = vunpack.c.l.b16 %v900
        %v2180 = vunpack.c.h.b16 %v900
        %v2181 = vunpack.c.l.b16 %v901
        %v2182 = vunpack.c.h.b16 %v901
        %v2183 = vunpack.c.l.b16 %v902
        %v2184 = vunpack.c.h.b16 %v902
        %v2185 = vunpack.c.l.b16 %v903
        %v2186 = vunpack.c.h.b16 %v903
        %v2187 = vunpack.c.l.b16 %v904
        %v2188 = vunpack.c.h.b16 %v904
        %v2189 = vpack.c.b16 %v1423, %v1421
        %v2190 = vpack.c.b16 %v1424, %v1422
        %v2191 = vpack.c.b16 %v1427, %v1425
        %v2192 = vpack.c.b16 %v1428, %v1426
        %v2193 = vpack.c.b16 %v1431, %v1429
        %v2194 = vpack.c.b16 %v1432, %v1430
        %v2195 = vpack.c.b16 %v1435, %v1433
        %v2196 = vpack.c.b16 %v1436, %v1434
        %v2197 = vpack.c.b16 %v1439, %v1437
        %v2198 = vpack.c.b16 %v1440, %v1438
        %v2199 = vpack.c.b16 %v1443, %v1441
        %v2200 = vpack.c.b16 %v1444, %v1442
        %v2201 = vpack.c.b16 %v1447, %v1445
        %v2202 = vpack.c.b16 %v1448, %v1446
        %v2203 = vpack.c.b16 %v1451, %v1449
        %v2204 = vpack.c.b16 %v1452, %v1450
        %v2205 = vpack.c.b16 %v1455, %v1453
        %v2206 = vpack.c.b16 %v1456, %v1454
        %v2207 = vpack.c.b16 %v1459, %v1457
        %v2208 = vpack.c.b16 %v1460, %v1458
        %v2209 = vpack.c.b16 %v1463, %v1461
        %v2210 = vpack.c.b16 %v1464, %v1462
        %v2211 = vpack.c.b16 %v1467, %v1465
        %v2212 = vpack.c.b16 %v1468, %v1466
        %v2213 = vpack.c.b16 %v1471, %v1469
        %v2214 = vpack.c.b16 %v1472, %v1470
        %v2215 = vpack.c.b16 %v1475, %v1473
        %v2216 = vpack.c.b16 %v1476, %v1474
        %v2217 = vpack.c.b16 %v1479, %v1477
        %v2218 = vpack.c.b16 %v1480, %v1478
        %v2219 = vpack.c.b16 %v1483, %v1481
        %v2220 = vpack.c.b16 %v1484, %v1482
        %v2221 = vpack.c.b16 %v1487, %v1485
        %v2222 = vpack.c.b16 %v1488, %v1486
        %v2223 = vpack.c.b16 %v1491, %v1489
        %v2224 = vpack.c.b16 %v1492, %v1490
        %v2225 = vpack.c.b16 %v1495, %v1493
        %v2226 = vpack.c.b16 %v1496, %v1494
        %v2227 = vpack.c.b16 %v1499, %v1497
        %v2228 = vpack.c.b16 %v1500, %v1498
        %v2229 = vpack.c.b16 %v1503, %v1501
        %v2230 = vpack.c.b16 %v1504, %v1502
        %v2231 = vpack.c.b16 %v1507, %v1505
        %v2232 = vpack.c.b16 %v1508, %v1506
        %v2233 = vpack.c.b16 %v1511, %v1509
        %v2234 = vpack.c.b16 %v1512, %v1510
        %v2235 = vpack.c.b16 %v1515, %v1513
        %v2236 = vpack.c.b16 %v1516, %v1514
        %v2237 = vpack.c.b16 %v1519, %v1517
        %v2238 = vpack.c.b16 %v1520, %v1518
        %v2239 = vpack.c.b16 %v1523, %v1521
        %v2240 = vpack.c.b16 %v1524, %v1522
        %v2241 = vpack.c.b16 %v1527, %v1525
        %v2242 = vpack.c.b16 %v1528, %v1526
        %v2243 = vpack.c.b16 %v1531, %v1529
        %v2244 = vpack.c.b16 %v1532, %v1530
        %v2245 = vpack.c.b16 %v1535, %v1533
        %v2246 = vpack.c.b16 %v1536, %v1534
        %v2247 = vpack.c.b16 %v1539, %v1537
        %v2248 = vpack.c.b16 %v1540, %v1538
        %v2249 = vpack.c.b16 %v1543, %v1541
        %v2250 = vpack.c.b16 %v1544, %v1542
        %v2251 = vpack.c.b16 %v1547, %v1545
        %v2252 = vpack.c.b16 %v1548, %v1546
        %v2253 = vpack.c.b16 %v1551, %v1549
        %v2254 = vpack.c.b16 %v1552, %v1550
        %v2255 = vpack.c.b16 %v1555, %v1553
        %v2256 = vpack.c.b16 %v1556, %v1554
        %v2257 = vpack.c.b16 %v1559, %v1557
        %v2258 = vpack.c.b16 %v1560, %v1558
        %v2259 = vpack.c.b16 %v1563, %v1561
        %v2260 = vpack.c.b16 %v1564, %v1562
        %v2261 = vpack.c.b16 %v1567, %v1565
        %v2262 = vpack.c.b16 %v1568, %v1566
        %v2263 = vpack.c.b16 %v1571, %v1569
        %v2264 = vpack.c.b16 %v1572, %v1570
        %v2265 = vpack.c.b16 %v1575, %v1573
        %v2266 = vpack.c.b16 %v1576, %v1574
        %v2267 = vpack.c.b16 %v1579, %v1577
        %v2268 = vpack.c.b16 %v1580, %v1578
        %v2269 = vpack.c.b16 %v1583, %v1581
        %v2270 = vpack.c.b16 %v1584, %v1582
        %v2271 = vpack.c.b16 %v1587, %v1585
        %v2272 = vpack.c.b16 %v1588, %v1586
        %v2273 = vpack.c.b16 %v1591, %v1589
        %v2274 = vpack.c.b16 %v1592, %v1590
        %v2275 = vpack.c.b16 %v1595, %v1593
        %v2276 = vpack.c.b16 %v1596, %v1594
        %v2277 = vpack.c.b16 %v1599, %v1597
        %v2278 = vpack.c.b16 %v1600, %v1598
        %v2279 = vpack.c.b16 %v1603, %v1601
        %v2280 = vpack.c.b16 %v1604, %v1602
        %v2281 = vpack.c.b16 %v1607, %v1605
        %v2282 = vpack.c.b16 %v1608, %v1606
        %v2283 = vpack.c.b16 %v1611, %v1609
        %v2284 = vpack.c.b16 %v1612, %v1610
        %v2285 = vpack.c.b16 %v1615, %v1613
        %v2286 = vpack.c.b16 %v1616, %v1614
        %v2287 = vpack.c.b16 %v1619, %v1617
        %v2288 = vpack.c.b16 %v1620, %v1618
        %v2289 = vpack.c.b16 %v1623, %v1621
        %v2290 = vpack.c.b16 %v1624, %v1622
        %v2291 = vpack.c.b16 %v1627, %v1625
        %v2292 = vpack.c.b16 %v1628, %v1626
        %v2293 = vpack.c.b16 %v1631, %v1629
        %v2294 = vpack.c.b16 %v1632, %v1630
        %v2295 = vpack.c.b16 %v1635, %v1633
        %v2296 = vpack.c.b16 %v1636, %v1634
        %v2297 = vpack.c.b16 %v1639, %v1637
        %v2298 = vpack.c.b16 %v1640, %v1638
        %v2299 = vpack.c.b16 %v1643, %v1641
        %v2300 = vpack.c.b16 %v1644, %v1642
        %v2301 = vpack.c.b16 %v1647, %v1645
        %v2302 = vpack.c.b16 %v1648, %v1646
        %v2303 = vpack.c.b16 %v1651, %v1649
        %v2304 = vpack.c.b16 %v1652, %v1650
        %v2305 = vpack.c.b16 %v1655, %v1653
        %v2306 = vpack.c.b16 %v1656, %v1654
        %v2307 = vpack.c.b16 %v1659, %v1657
        %v2308 = vpack.c.b16 %v1660, %v1658
        %v2309 = vpack.c.b16 %v1663, %v1661
        %v2310 = vpack.c.b16 %v1664, %v1662
        %v2311 = vpack.c.b16 %v1667, %v1665
        %v2312 = vpack.c.b16 %v1668, %v1666
        %v2313 = vpack.c.b16 %v1671, %v1669
        %v2314 = vpack.c.b16 %v1672, %v1670
        %v2315 = vpack.c.b16 %v1675, %v1673
        %v2316 = vpack.c.b16 %v1676, %v1674
        %v2317 = vpack.c.b16 %v1679, %v1677
        %v2318 = vpack.c.b16 %v1680, %v1678
        %v2319 = vpack.c.b16 %v1683, %v1681
        %v2320 = vpack.c.b16 %v1684, %v1682
        %v2321 = vpack.c.b16 %v1687, %v1685
        %v2322 = vpack.c.b16 %v1688, %v1686
        %v2323 = vpack.c.b16 %v1691, %v1689
        %v2324 = vpack.c.b16 %v1692, %v1690
        %v2325 = vpack.c.b16 %v1695, %v1693
        %v2326 = vpack.c.b16 %v1696, %v1694
        %v2327 = vpack.c.b16 %v1699, %v1697
        %v2328 = vpack.c.b16 %v1700, %v1698
        %v2329 = vpack.c.b16 %v1703, %v1701
        %v2330 = vpack.c.b16 %v1704, %v1702
        %v2331 = vpack.c.b16 %v1707, %v1705
        %v2332 = vpack.c.b16 %v1708, %v1706
        %v2333 = vpack.c.b16 %v1711, %v1709
        %v2334 = vpack.c.b16 %v1712, %v1710
        %v2335 = vpack.c.b16 %v1715, %v1713
        %v2336 = vpack.c.b16 %v1716, %v1714
        %v2337 = vpack.c.b16 %v1719, %v1717
        %v2338 = vpack.c.b16 %v1720, %v1718
        %v2339 = vpack.c.b16 %v1723, %v1721
        %v2340 = vpack.c.b16 %v1724, %v1722
        %v2341 = vpack.c.b16 %v1727, %v1725
        %v2342 = vpack.c.b16 %v1728, %v1726
        %v2343 = vpack.c.b16 %v1731, %v1729
        %v2344 = vpack.c.b16 %v1732, %v1730
        %v2345 = vpack.c.b16 %v1735, %v1733
        %v2346 = vpack.c.b16 %v1736, %v1734
        %v2347 = vpack.c.b16 %v1739, %v1737
        %v2348 = vpack.c.b16 %v1740, %v1738
        %v2349 = vpack.c.b16 %v1743, %v1741
        %v2350 = vpack.c.b16 %v1744, %v1742
        %v2351 = vpack.c.b16 %v1747, %v1745
        %v2352 = vpack.c.b16 %v1748, %v1746
        %v2353 = vpack.c.b16 %v1751, %v1749
        %v2354 = vpack.c.b16 %v1752, %v1750
        %v2355 = vpack.c.b16 %v1755, %v1753
        %v2356 = vpack.c.b16 %v1756, %v1754
        %v2357 = vpack.c.b16 %v1759, %v1757
        %v2358 = vpack.c.b16 %v1760, %v1758
        %v2359 = vpack.c.b16 %v1763, %v1761
        %v2360 = vpack.c.b16 %v1764, %v1762
        %v2361 = vpack.c.b16 %v1767, %v1765
        %v2362 = vpack.c.b16 %v1768, %v1766
        %v2363 = vpack.c.b16 %v1771, %v1769
        %v2364 = vpack.c.b16 %v1772, %v1770
        %v2365 = vpack.c.b16 %v1775, %v1773
        %v2366 = vpack.c.b16 %v1776, %v1774
        %v2367 = vpack.c.b16 %v1779, %v1777
        %v2368 = vpack.c.b16 %v1780, %v1778
        %v2369 = vpack.c.b16 %v1783, %v1781
        %v2370 = vpack.c.b16 %v1784, %v1782
        %v2371 = vpack.c.b16 %v1787, %v1785
        %v2372 = vpack.c.b16 %v1788, %v1786
        %v2373 = vpack.c.b16 %v1791, %v1789
        %v2374 = vpack.c.b16 %v1792, %v1790
        %v2375 = vpack.c.b16 %v1795, %v1793
        %v2376 = vpack.c.b16 %v1796, %v1794
        %v2377 = vpack.c.b16 %v1799, %v1797
        %v2378 = vpack.c.b16 %v1800, %v1798
        %v2379 = vpack.c.b16 %v1803, %v1801
        %v2380 = vpack.c.b16 %v1804, %v1802
        %v2381 = vpack.c.b16 %v1807, %v1805
        %v2382 = vpack.c.b16 %v1808, %v1806
        %v2383 = vpack.c.b16 %v1811, %v1809
        %v2384 = vpack.c.b16 %v1812, %v1810
        %v2385 = vpack.c.b16 %v1815, %v1813
        %v2386 = vpack.c.b16 %v1816, %v1814
        %v2387 = vpack.c.b16 %v1819, %v1817
        %v2388 = vpack.c.b16 %v1820, %v1818
        %v2389 = vpack.c.b16 %v1823, %v1821
        %v2390 = vpack.c.b16 %v1824, %v1822
        %v2391 = vpack.c.b16 %v1827, %v1825
        %v2392 = vpack.c.b16 %v1828, %v1826
        %v2393 = vpack.c.b16 %v1831, %v1829
        %v2394 = vpack.c.b16 %v1832, %v1830
        %v2395 = vpack.c.b16 %v1835, %v1833
        %v2396 = vpack.c.b16 %v1836, %v1834
        %v2397 = vpack.c.b16 %v1839, %v1837
        %v2398 = vpack.c.b16 %v1840, %v1838
        %v2399 = vpack.c.b16 %v1843, %v1841
        %v2400 = vpack.c.b16 %v1844, %v1842
        %v2401 = vpack.c.b16 %v1847, %v1845
        %v2402 = vpack.c.b16 %v1848, %v1846
        %v2403 = vpack.c.b16 %v1851, %v1849
        %v2404 = vpack.c.b16 %v1852, %v1850
        %v2405 = vpack.c.b16 %v1855, %v1853
        %v2406 = vpack.c.b16 %v1856, %v1854
        %v2407 = vpack.c.b16 %v1859, %v1857
        %v2408 = vpack.c.b16 %v1860, %v1858
        %v2409 = vpack.c.b16 %v1863, %v1861
        %v2410 = vpack.c.b16 %v1864, %v1862
        %v2411 = vpack.c.b16 %v1867, %v1865
        %v2412 = vpack.c.b16 %v1868, %v1866
        %v2413 = vpack.c.b16 %v1871, %v1869
        %v2414 = vpack.c.b16 %v1872, %v1870
        %v2415 = vpack.c.b16 %v1875, %v1873
        %v2416 = vpack.c.b16 %v1876, %v1874
        %v2417 = vpack.c.b16 %v1879, %v1877
        %v2418 = vpack.c.b16 %v1880, %v1878
        %v2419 = vpack.c.b16 %v1883, %v1881
        %v2420 = vpack.c.b16 %v1884, %v1882
        %v2421 = vpack.c.b16 %v1887, %v1885
        %v2422 = vpack.c.b16 %v1888, %v1886
        %v2423 = vpack.c.b16 %v1891, %v1889
        %v2424 = vpack.c.b16 %v1892, %v1890
        %v2425 = vpack.c.b16 %v1895, %v1893
        %v2426 = vpack.c.b16 %v1896, %v1894
        %v2427 = vpack.c.b16 %v1899, %v1897
        %v2428 = vpack.c.b16 %v1900, %v1898
        %v2429 = vpack.c.b16 %v1903, %v1901
        %v2430 = vpack.c.b16 %v1904, %v1902
        %v2431 = vpack.c.b16 %v1907, %v1905
        %v2432 = vpack.c.b16 %v1908, %v1906
        %v2433 = vpack.c.b16 %v1911, %v1909
        %v2434 = vpack.c.b16 %v1912, %v1910
        %v2435 = vpack.c.b16 %v1915, %v1913
        %v2436 = vpack.c.b16 %v1916, %v1914
        %v2437 = vpack.c.b16 %v1919, %v1917
        %v2438 = vpack.c.b16 %v1920, %v1918
        %v2439 = vpack.c.b16 %v1923, %v1921
        %v2440 = vpack.c.b16 %v1924, %v1922
        %v2441 = vpack.c.b16 %v1927, %v1925
        %v2442 = vpack.c.b16 %v1928, %v1926
        %v2443 = vpack.c.b16 %v1931, %v1929
        %v2444 = vpack.c.b16 %v1932, %v1930
        %v2445 = vpack.c.b16 %v1935, %v1933
        %v2446 = vpack.c.b16 %v1936, %v1934
        %v2447 = vpack.c.b16 %v1939, %v1937
        %v2448 = vpack.c.b16 %v1940, %v1938
        %v2449 = vpack.c.b16 %v1943, %v1941
        %v2450 = vpack.c.b16 %v1944, %v1942
        %v2451 = vpack.c.b16 %v1947, %v1945
        %v2452 = vpack.c.b16 %v1948, %v1946
        %v2453 = vpack.c.b16 %v1951, %v1949
        %v2454 = vpack.c.b16 %v1952, %v1950
        %v2455 = vpack.c.b16 %v1955, %v1953
        %v2456 = vpack.c.b16 %v1956, %v1954
        %v2457 = vpack.c.b16 %v1959, %v1957
        %v2458 = vpack.c.b16 %v1960, %v1958
        %v2459 = vpack.c.b16 %v1963, %v1961
        %v2460 = vpack.c.b16 %v1964, %v1962
        %v2461 = vpack.c.b16 %v1967, %v1965
        %v2462 = vpack.c.b16 %v1968, %v1966
        %v2463 = vpack.c.b16 %v1971, %v1969
        %v2464 = vpack.c.b16 %v1972, %v1970
        %v2465 = vpack.c.b16 %v1975, %v1973
        %v2466 = vpack.c.b16 %v1976, %v1974
        %v2467 = vpack.c.b16 %v1979, %v1977
        %v2468 = vpack.c.b16 %v1980, %v1978
        %v2469 = vpack.c.b16 %v1983, %v1981
        %v2470 = vpack.c.b16 %v1984, %v1982
        %v2471 = vpack.c.b16 %v1987, %v1985
        %v2472 = vpack.c.b16 %v1988, %v1986
        %v2473 = vpack.c.b16 %v1991, %v1989
        %v2474 = vpack.c.b16 %v1992, %v1990
        %v2475 = vpack.c.b16 %v1995, %v1993
        %v2476 = vpack.c.b16 %v1996, %v1994
        %v2477 = vpack.c.b16 %v1999, %v1997
        %v2478 = vpack.c.b16 %v2000, %v1998
        %v2479 = vpack.c.b16 %v2003, %v2001
        %v2480 = vpack.c.b16 %v2004, %v2002
        %v2481 = vpack.c.b16 %v2007, %v2005
        %v2482 = vpack.c.b16 %v2008, %v2006
        %v2483 = vpack.c.b16 %v2011, %v2009
        %v2484 = vpack.c.b16 %v2012, %v2010
        %v2485 = vpack.c.b16 %v2015, %v2013
        %v2486 = vpack.c.b16 %v2016, %v2014
        %v2487 = vpack.c.b16 %v2019, %v2017
        %v2488 = vpack.c.b16 %v2020, %v2018
        %v2489 = vpack.c.b16 %v2023, %v2021
        %v2490 = vpack.c.b16 %v2024, %v2022
        %v2491 = vpack.c.b16 %v2027, %v2025
        %v2492 = vpack.c.b16 %v2028, %v2026
        %v2493 = vpack.c.b16 %v2031, %v2029
        %v2494 = vpack.c.b16 %v2032, %v2030
        %v2495 = vpack.c.b16 %v2035, %v2033
        %v2496 = vpack.c.b16 %v2036, %v2034
        %v2497 = vpack.c.b16 %v2039, %v2037
        %v2498 = vpack.c.b16 %v2040, %v2038
        %v2499 = vpack.c.b16 %v2043, %v2041
        %v2500 = vpack.c.b16 %v2044, %v2042
        %v2501 = vpack.c.b16 %v2047, %v2045
        %v2502 = vpack.c.b16 %v2048, %v2046
        %v2503 = vpack.c.b16 %v2051, %v2049
        %v2504 = vpack.c.b16 %v2052, %v2050
        %v2505 = vpack.c.b16 %v2055, %v2053
        %v2506 = vpack.c.b16 %v2056, %v2054
        %v2507 = vpack.c.b16 %v2059, %v2057
        %v2508 = vpack.c.b16 %v2060, %v2058
        %v2509 = vpack.c.b16 %v2063, %v2061
        %v2510 = vpack.c.b16 %v2064, %v2062
        %v2511 = vpack.c.b16 %v2067, %v2065
        %v2512 = vpack.c.b16 %v2068, %v2066
        %v2513 = vpack.c.b16 %v2071, %v2069
        %v2514 = vpack.c.b16 %v2072, %v2070
        %v2515 = vpack.c.b16 %v2075, %v2073
        %v2516 = vpack.c.b16 %v2076, %v2074
        %v2517 = vpack.c.b16 %v2079, %v2077
        %v2518 = vpack.c.b16 %v2080, %v2078
        %v2519 = vpack.c.b16 %v2083, %v2081
        %v2520 = vpack.c.b16 %v2084, %v2082
        %v2521 = vpack.c.b16 %v2087, %v2085
        %v2522 = vpack.c.b16 %v2088, %v2086
        %v2523 = vpack.c.b16 %v2091, %v2089
        %v2524 = vpack.c.b16 %v2092, %v2090
        %v2525 = vpack.c.b16 %v2095, %v2093
        %v2526 = vpack.c.b16 %v2096, %v2094
        %v2527 = vpack.c.b16 %v2099, %v2097
        %v2528 = vpack.c.b16 %v2100, %v2098
        %v2529 = vpack.c.b16 %v2103, %v2101
        %v2530 = vpack.c.b16 %v2104, %v2102
        %v2531 = vpack.c.b16 %v2107, %v2105
        %v2532 = vpack.c.b16 %v2108, %v2106
        %v2533 = vpack.c.b16 %v2111, %v2109
        %v2534 = vpack.c.b16 %v2112, %v2110
        %v2535 = vpack.c.b16 %v2115, %v2113
        %v2536 = vpack.c.b16 %v2116, %v2114
        %v2537 = vpack.c.b16 %v2119, %v2117
        %v2538 = vpack.c.b16 %v2120, %v2118
        %v2539 = vpack.c.b16 %v2123, %v2121
        %v2540 = vpack.c.b16 %v2124, %v2122
        %v2541 = vpack.c.b16 %v2127, %v2125
        %v2542 = vpack.c.b16 %v2128, %v2126
        %v2543 = vpack.c.b16 %v2131, %v2129
        %v2544 = vpack.c.b16 %v2132, %v2130
        %v2545 = vpack.c.b16 %v2135, %v2133
        %v2546 = vpack.c.b16 %v2136, %v2134
        %v2547 = vpack.c.b16 %v2139, %v2137
        %v2548 = vpack.c.b16 %v2140, %v2138
        %v2549 = vpack.c.b16 %v2143, %v2141
        %v2550 = vpack.c.b16 %v2144, %v2142
        %v2551 = vpack.c.b16 %v2147, %v2145
        %v2552 = vpack.c.b16 %v2148, %v2146
        %v2553 = vpack.c.b16 %v2151, %v2149
        %v2554 = vpack.c.b16 %v2152, %v2150
        %v2555 = vpack.c.b16 %v2155, %v2153
        %v2556 = vpack.c.b16 %v2156, %v2154
        %v2557 = vpack.c.b16 %v2159, %v2157
        %v2558 = vpack.c.b16 %v2160, %v2158
        %v2559 = vpack.c.b16 %v2163, %v2161
        %v2560 = vpack.c.b16 %v2164, %v2162
        %v2561 = vpack.c.b16 %v2167, %v2165
        %v2562 = vpack.c.b16 %v2168, %v2166
        %v2563 = vpack.c.b16 %v2171, %v2169
        %v2564 = vpack.c.b16 %v2172, %v2170
        %v2565 = vpack.c.b16 %v2175, %v2173
        %v2566 = vpack.c.b16 %v2176, %v2174
        %v2567 = vpack.c.b16 %v2179, %v2177
        %v2568 = vpack.c.b16 %v2180, %v2178
        %v2569 = vpack.c.b16 %v2183, %v2181
        %v2570 = vpack.c.b16 %v2184, %v2182
        %v2571 = vpack.c.b16 %v2187, %v2185
        %v2572 = vpack.c.b16 %v2188, %v2186
        %2957 = vmatprep.subr.bf16.mxu0 %v2190
        %2958 = vmatpush1.bf16.msra.mxu0 %v2189
        %2959 = vmatprep.subr.bf16.mxu0 %v2192
        %2960 = vmatpush1.bf16.msra.mxu0 %v2191
        %2961 = vmatprep.subr.bf16.mxu0 %v2194
        %2962 = vmatpush1.bf16.msra.mxu0 %v2193
        %2963 = vmatprep.subr.bf16.mxu0 %v2196
        %2964 = vmatpush1.bf16.msra.mxu0 %v2195
        %2965 = vmatprep.subr.bf16.mxu0 %v2198
        %2966 = vmatpush1.bf16.msra.mxu0 %v2197
        %2967 = vmatprep.subr.bf16.mxu0 %v2200
        %2968 = vmatpush1.bf16.msra.mxu0 %v2199
        %2969 = vmatprep.subr.bf16.mxu0 %v2202
        %2970 = vmatpush1.bf16.msra.mxu0 %v2201
        %2971 = vmatprep.subr.bf16.mxu0 %v2204
        %2972 = vmatpush1.bf16.msra.mxu0 %v2203
        %2973 = vmatprep.subr.bf16.mxu0 %v2206
        %2974 = vmatpush1.bf16.msra.mxu0 %v2205
        %2975 = vmatprep.subr.bf16.mxu0 %v2208
        %2976 = vmatpush1.bf16.msra.mxu0 %v2207
        %2977 = vmatprep.subr.bf16.mxu0 %v2210
        %2978 = vmatpush1.bf16.msra.mxu0 %v2209
        %2979 = vmatprep.subr.bf16.mxu0 %v2212
        %2980 = vmatpush1.bf16.msra.mxu0 %v2211
        %2981 = vmatprep.subr.bf16.mxu0 %v2214
        %2982 = vmatpush1.bf16.msra.mxu0 %v2213
        %2983 = vmatprep.subr.bf16.mxu0 %v2216
        %2984 = vmatpush1.bf16.msra.mxu0 %v2215
        %2985 = vmatprep.subr.bf16.mxu0 %v2218
        %2986 = vmatpush1.bf16.msra.mxu0 %v2217
        %2987 = vmatprep.subr.bf16.mxu0 %v2220
        %2988 = vmatpush1.bf16.msra.mxu0 %v2219
        %2989 = vmatprep.mubr.bf16.mxu0 %v990
        %2990 = vmatmul.mubr.bf16.gmra.mrb[0].mxu0 %v989
        %v2991 = vpop.f32.mrb[0].mxu0
        %v2992 = vadd.f32 %v910, %v2991
        %v2993 = vpop.f32.mrb[0].mxu0
        %v2994 = vadd.f32 %v914, %v2993
        %v2995 = vpop.f32.mrb[0].mxu0
        %v2996 = vadd.f32 %v910, %v2995
        %v2997 = vpop.f32.mrb[0].mxu0
        %v2998 = vadd.f32 %v914, %v2997
        %2999 = vdwg.mxu0
        %3000 = vmatprep.subr.bf16.mxu0 %v2222
        %3001 = vmatpush1.bf16.msra.mxu0 %v2221
        %3002 = vmatprep.subr.bf16.mxu0 %v2224
        %3003 = vmatpush1.bf16.msra.mxu0 %v2223
        %3004 = vmatprep.subr.bf16.mxu0 %v2226
        %3005 = vmatpush1.bf16.msra.mxu0 %v2225
        %3006 = vmatprep.subr.bf16.mxu0 %v2228
        %3007 = vmatpush1.bf16.msra.mxu0 %v2227
        %3008 = vmatprep.subr.bf16.mxu0 %v2230
        %3009 = vmatpush1.bf16.msra.mxu0 %v2229
        %3010 = vmatprep.subr.bf16.mxu0 %v2232
        %3011 = vmatpush1.bf16.msra.mxu0 %v2231
        %3012 = vmatprep.subr.bf16.mxu0 %v2234
        %3013 = vmatpush1.bf16.msra.mxu0 %v2233
        %3014 = vmatprep.subr.bf16.mxu0 %v2236
        %3015 = vmatpush1.bf16.msra.mxu0 %v2235
        %3016 = vmatprep.subr.bf16.mxu0 %v2238
        %3017 = vmatpush1.bf16.msra.mxu0 %v2237
        %3018 = vmatprep.subr.bf16.mxu0 %v2240
        %3019 = vmatpush1.bf16.msra.mxu0 %v2239
        %3020 = vmatprep.subr.bf16.mxu0 %v2242
        %3021 = vmatpush1.bf16.msra.mxu0 %v2241
        %3022 = vmatprep.subr.bf16.mxu0 %v2244
        %3023 = vmatpush1.bf16.msra.mxu0 %v2243
        %3024 = vmatprep.subr.bf16.mxu0 %v2246
        %3025 = vmatpush1.bf16.msra.mxu0 %v2245
        %3026 = vmatprep.subr.bf16.mxu0 %v2248
        %3027 = vmatpush1.bf16.msra.mxu0 %v2247
        %3028 = vmatprep.subr.bf16.mxu0 %v2250
        %3029 = vmatpush1.bf16.msra.mxu0 %v2249
        %3030 = vmatprep.subr.bf16.mxu0 %v2252
        %3031 = vmatpush1.bf16.msra.mxu0 %v2251
        %3032 = vmatprep.mubr.bf16.mxu0 %v992
        %3033 = vmatmul.mubr.bf16.gmra.mrb[0].mxu0 %v991
        %v3034 = vpop.f32.mrb[0].mxu0
        %v3035 = vadd.f32 %v2992, %v3034
        %v3036 = vpop.f32.mrb[0].mxu0
        %v3037 = vadd.f32 %v2994, %v3036
        %v3038 = vpop.f32.mrb[0].mxu0
        %v3039 = vadd.f32 %v2996, %v3038
        %v3040 = vpop.f32.mrb[0].mxu0
        %v3041 = vadd.f32 %v2998, %v3040
        %3042 = vdwg.mxu0
        %3043 = vmatprep.subr.bf16.mxu0 %v2254
        %3044 = vmatpush1.bf16.msra.mxu0 %v2253
        %3045 = vmatprep.subr.bf16.mxu0 %v2256
        %3046 = vmatpush1.bf16.msra.mxu0 %v2255
        %3047 = vmatprep.subr.bf16.mxu0 %v2258
        %3048 = vmatpush1.bf16.msra.mxu0 %v2257
        %3049 = vmatprep.subr.bf16.mxu0 %v2260
        %3050 = vmatpush1.bf16.msra.mxu0 %v2259
        %3051 = vmatprep.subr.bf16.mxu0 %v2262
        %3052 = vmatpush1.bf16.msra.mxu0 %v2261
        %3053 = vmatprep.subr.bf16.mxu0 %v2264
        %3054 = vmatpush1.bf16.msra.mxu0 %v2263
        %3055 = vmatprep.subr.bf16.mxu0 %v2266
        %3056 = vmatpush1.bf16.msra.mxu0 %v2265
        %3057 = vmatprep.subr.bf16.mxu0 %v2268
        %3058 = vmatpush1.bf16.msra.mxu0 %v2267
        %3059 = vmatprep.subr.bf16.mxu0 %v2270
        %3060 = vmatpush1.bf16.msra.mxu0 %v2269
        %3061 = vmatprep.subr.bf16.mxu0 %v2272
        %3062 = vmatpush1.bf16.msra.mxu0 %v2271
        %3063 = vmatprep.subr.bf16.mxu0 %v2274
        %3064 = vmatpush1.bf16.msra.mxu0 %v2273
        %3065 = vmatprep.subr.bf16.mxu0 %v2276
        %3066 = vmatpush1.bf16.msra.mxu0 %v2275
        %3067 = vmatprep.subr.bf16.mxu0 %v2278
        %3068 = vmatpush1.bf16.msra.mxu0 %v2277
        %3069 = vmatprep.subr.bf16.mxu0 %v2280
        %3070 = vmatpush1.bf16.msra.mxu0 %v2279
        %3071 = vmatprep.subr.bf16.mxu0 %v2282
        %3072 = vmatpush1.bf16.msra.mxu0 %v2281
        %3073 = vmatprep.subr.bf16.mxu0 %v2284
        %3074 = vmatpush1.bf16.msra.mxu0 %v2283
        %3075 = vmatprep.mubr.bf16.mxu0 %v994
        %3076 = vmatmul.mubr.bf16.gmra.mrb[0].mxu0 %v993
        %v3077 = vpop.f32.mrb[0].mxu0
        %v3078 = vadd.f32 %v3035, %v3077
        %v3079 = vpop.f32.mrb[0].mxu0
        %v3080 = vadd.f32 %v3037, %v3079
        %v3081 = vpop.f32.mrb[0].mxu0
        %v3082 = vadd.f32 %v3039, %v3081
        %v3083 = vpop.f32.mrb[0].mxu0
        %v3084 = vadd.f32 %v3041, %v3083
        %3085 = vdwg.mxu0
        %3086 = vmatprep.subr.bf16.mxu0 %v2286
        %3087 = vmatpush1.bf16.msra.mxu0 %v2285
        %3088 = vmatprep.subr.bf16.mxu0 %v2288
        %3089 = vmatpush1.bf16.msra.mxu0 %v2287
        %3090 = vmatprep.subr.bf16.mxu0 %v2290
        %3091 = vmatpush1.bf16.msra.mxu0 %v2289
        %3092 = vmatprep.subr.bf16.mxu0 %v2292
        %3093 = vmatpush1.bf16.msra.mxu0 %v2291
        %3094 = vmatprep.subr.bf16.mxu0 %v2294
        %3095 = vmatpush1.bf16.msra.mxu0 %v2293
        %3096 = vmatprep.subr.bf16.mxu0 %v2296
        %3097 = vmatpush1.bf16.msra.mxu0 %v2295
        %3098 = vmatprep.subr.bf16.mxu0 %v2298
        %3099 = vmatpush1.bf16.msra.mxu0 %v2297
        %3100 = vmatprep.subr.bf16.mxu0 %v2300
        %3101 = vmatpush1.bf16.msra.mxu0 %v2299
        %3102 = vmatprep.subr.bf16.mxu0 %v2302
        %3103 = vmatpush1.bf16.msra.mxu0 %v2301
        %3104 = vmatprep.subr.bf16.mxu0 %v2304
        %3105 = vmatpush1.bf16.msra.mxu0 %v2303
        %3106 = vmatprep.subr.bf16.mxu0 %v2306
        %3107 = vmatpush1.bf16.msra.mxu0 %v2305
        %3108 = vmatprep.subr.bf16.mxu0 %v2308
        %3109 = vmatpush1.bf16.msra.mxu0 %v2307
        %3110 = vmatprep.subr.bf16.mxu0 %v2310
        %3111 = vmatpush1.bf16.msra.mxu0 %v2309
        %3112 = vmatprep.subr.bf16.mxu0 %v2312
        %3113 = vmatpush1.bf16.msra.mxu0 %v2311
        %3114 = vmatprep.subr.bf16.mxu0 %v2314
        %3115 = vmatpush1.bf16.msra.mxu0 %v2313
        %3116 = vmatprep.subr.bf16.mxu0 %v2316
        %3117 = vmatpush1.bf16.msra.mxu0 %v2315
        %3118 = vmatprep.mubr.bf16.mxu0 %v996
        %3119 = vmatmul.mubr.bf16.gmra.mrb[0].mxu0 %v995
        %v3120 = vpop.f32.mrb[0].mxu0
        %v3121 = vadd.f32 %v3078, %v3120
        %v3122 = vpop.f32.mrb[0].mxu0
        %v3123 = vadd.f32 %v3080, %v3122
        %v3124 = vpop.f32.mrb[0].mxu0
        %v3125 = vadd.f32 %v3082, %v3124
        %v3126 = vpop.f32.mrb[0].mxu0
        %v3127 = vadd.f32 %v3084, %v3126
        %3128 = vdwg.mxu0
        %3129 = vmatprep.subr.bf16.mxu0 %v2318
        %3130 = vmatpush1.bf16.msra.mxu0 %v2317
        %3131 = vmatprep.subr.bf16.mxu0 %v2320
        %3132 = vmatpush1.bf16.msra.mxu0 %v2319
        %3133 = vmatprep.subr.bf16.mxu0 %v2322
        %3134 = vmatpush1.bf16.msra.mxu0 %v2321
        %3135 = vmatprep.subr.bf16.mxu0 %v2324
        %3136 = vmatpush1.bf16.msra.mxu0 %v2323
        %3137 = vmatprep.subr.bf16.mxu0 %v2326
        %3138 = vmatpush1.bf16.msra.mxu0 %v2325
        %3139 = vmatprep.subr.bf16.mxu0 %v2328
        %3140 = vmatpush1.bf16.msra.mxu0 %v2327
        %3141 = vmatprep.subr.bf16.mxu0 %v2330
        %3142 = vmatpush1.bf16.msra.mxu0 %v2329
        %3143 = vmatprep.subr.bf16.mxu0 %v2332
        %3144 = vmatpush1.bf16.msra.mxu0 %v2331
        %3145 = vmatprep.subr.bf16.mxu0 %v2334
        %3146 = vmatpush1.bf16.msra.mxu0 %v2333
        %3147 = vmatprep.subr.bf16.mxu0 %v2336
        %3148 = vmatpush1.bf16.msra.mxu0 %v2335
        %3149 = vmatprep.subr.bf16.mxu0 %v2338
        %3150 = vmatpush1.bf16.msra.mxu0 %v2337
        %3151 = vmatprep.subr.bf16.mxu0 %v2340
        %3152 = vmatpush1.bf16.msra.mxu0 %v2339
        %3153 = vmatprep.subr.bf16.mxu0 %v2342
        %3154 = vmatpush1.bf16.msra.mxu0 %v2341
        %3155 = vmatprep.subr.bf16.mxu0 %v2344
        %3156 = vmatpush1.bf16.msra.mxu0 %v2343
        %3157 = vmatprep.subr.bf16.mxu0 %v2346
        %3158 = vmatpush1.bf16.msra.mxu0 %v2345
        %3159 = vmatprep.subr.bf16.mxu0 %v2348
        %3160 = vmatpush1.bf16.msra.mxu0 %v2347
        %3161 = vmatprep.mubr.bf16.mxu0 %v998
        %3162 = vmatmul.mubr.bf16.gmra.mrb[0].mxu0 %v997
        %v3163 = vpop.f32.mrb[0].mxu0
        %v3164 = vadd.f32 %v3121, %v3163
        %v3165 = vpop.f32.mrb[0].mxu0
        %v3166 = vadd.f32 %v3123, %v3165
        %v3167 = vpop.f32.mrb[0].mxu0
        %v3168 = vadd.f32 %v3125, %v3167
        %v3169 = vpop.f32.mrb[0].mxu0
        %v3170 = vadd.f32 %v3127, %v3169
        %3171 = vdwg.mxu0
        %3172 = vmatprep.subr.bf16.mxu0 %v2350
        %3173 = vmatpush1.bf16.msra.mxu0 %v2349
        %3174 = vmatprep.subr.bf16.mxu0 %v2352
        %3175 = vmatpush1.bf16.msra.mxu0 %v2351
        %3176 = vmatprep.subr.bf16.mxu0 %v2354
        %3177 = vmatpush1.bf16.msra.mxu0 %v2353
        %3178 = vmatprep.subr.bf16.mxu0 %v2356
        %3179 = vmatpush1.bf16.msra.mxu0 %v2355
        %3180 = vmatprep.subr.bf16.mxu0 %v2358
        %3181 = vmatpush1.bf16.msra.mxu0 %v2357
        %3182 = vmatprep.subr.bf16.mxu0 %v2360
        %3183 = vmatpush1.bf16.msra.mxu0 %v2359
        %3184 = vmatprep.subr.bf16.mxu0 %v2362
        %3185 = vmatpush1.bf16.msra.mxu0 %v2361
        %3186 = vmatprep.subr.bf16.mxu0 %v2364
        %3187 = vmatpush1.bf16.msra.mxu0 %v2363
        %3188 = vmatprep.subr.bf16.mxu0 %v2366
        %3189 = vmatpush1.bf16.msra.mxu0 %v2365
        %3190 = vmatprep.subr.bf16.mxu0 %v2368
        %3191 = vmatpush1.bf16.msra.mxu0 %v2367
        %3192 = vmatprep.subr.bf16.mxu0 %v2370
        %3193 = vmatpush1.bf16.msra.mxu0 %v2369
        %3194 = vmatprep.subr.bf16.mxu0 %v2372
        %3195 = vmatpush1.bf16.msra.mxu0 %v2371
        %3196 = vmatprep.subr.bf16.mxu0 %v2374
        %3197 = vmatpush1.bf16.msra.mxu0 %v2373
        %3198 = vmatprep.subr.bf16.mxu0 %v2376
        %3199 = vmatpush1.bf16.msra.mxu0 %v2375
        %3200 = vmatprep.subr.bf16.mxu0 %v2378
        %3201 = vmatpush1.bf16.msra.mxu0 %v2377
        %3202 = vmatprep.subr.bf16.mxu0 %v2380
        %3203 = vmatpush1.bf16.msra.mxu0 %v2379
        %3204 = vmatprep.mubr.bf16.mxu0 %v1000
        %3205 = vmatmul.mubr.bf16.gmra.mrb[0].mxu0 %v999
        %v3206 = vpop.f32.mrb[0].mxu0
        %v3207 = vadd.f32 %v3164, %v3206
        %v3208 = vpop.f32.mrb[0].mxu0
        %v3209 = vadd.f32 %v3166, %v3208
        %v3210 = vpop.f32.mrb[0].mxu0
        %v3211 = vadd.f32 %v3168, %v3210
        %v3212 = vpop.f32.mrb[0].mxu0
        %v3213 = vadd.f32 %v3170, %v3212
        %3214 = vdwg.mxu0
        %3215 = vmatprep.subr.bf16.mxu0 %v2382
        %3216 = vmatpush1.bf16.msra.mxu0 %v2381
        %3217 = vmatprep.subr.bf16.mxu0 %v2384
        %3218 = vmatpush1.bf16.msra.mxu0 %v2383
        %3219 = vmatprep.subr.bf16.mxu0 %v2386
        %3220 = vmatpush1.bf16.msra.mxu0 %v2385
        %3221 = vmatprep.subr.bf16.mxu0 %v2388
        %3222 = vmatpush1.bf16.msra.mxu0 %v2387
        %3223 = vmatprep.subr.bf16.mxu0 %v2390
        %3224 = vmatpush1.bf16.msra.mxu0 %v2389
        %3225 = vmatprep.subr.bf16.mxu0 %v2392
        %3226 = vmatpush1.bf16.msra.mxu0 %v2391
        %3227 = vmatprep.subr.bf16.mxu0 %v2394
        %3228 = vmatpush1.bf16.msra.mxu0 %v2393
        %3229 = vmatprep.subr.bf16.mxu0 %v2396
        %3230 = vmatpush1.bf16.msra.mxu0 %v2395
        %3231 = vmatprep.subr.bf16.mxu0 %v2398
        %3232 = vmatpush1.bf16.msra.mxu0 %v2397
        %3233 = vmatprep.subr.bf16.mxu0 %v2400
        %3234 = vmatpush1.bf16.msra.mxu0 %v2399
        %3235 = vmatprep.subr.bf16.mxu0 %v2402
        %3236 = vmatpush1.bf16.msra.mxu0 %v2401
        %3237 = vmatprep.subr.bf16.mxu0 %v2404
        %3238 = vmatpush1.bf16.msra.mxu0 %v2403
        %3239 = vmatprep.subr.bf16.mxu0 %v2406
        %3240 = vmatpush1.bf16.msra.mxu0 %v2405
        %3241 = vmatprep.subr.bf16.mxu0 %v2408
        %3242 = vmatpush1.bf16.msra.mxu0 %v2407
        %3243 = vmatprep.subr.bf16.mxu0 %v2410
        %3244 = vmatpush1.bf16.msra.mxu0 %v2409
        %3245 = vmatprep.subr.bf16.mxu0 %v2412
        %3246 = vmatpush1.bf16.msra.mxu0 %v2411
        %3247 = vmatprep.mubr.bf16.mxu0 %v1002
        %3248 = vmatmul.mubr.bf16.gmra.mrb[0].mxu0 %v1001
        %v3249 = vpop.f32.mrb[0].mxu0
        %v3250 = vadd.f32 %v3207, %v3249
        %v3251 = vpop.f32.mrb[0].mxu0
        %v3252 = vadd.f32 %v3209, %v3251
        %v3253 = vpop.f32.mrb[0].mxu0
        %v3254 = vadd.f32 %v3211, %v3253
        %v3255 = vpop.f32.mrb[0].mxu0
        %v3256 = vadd.f32 %v3213, %v3255
        %3257 = vdwg.mxu0
        %3258 = vmatprep.subr.bf16.mxu0 %v2414
        %3259 = vmatpush1.bf16.msra.mxu0 %v2413
        %3260 = vmatprep.subr.bf16.mxu0 %v2416
        %3261 = vmatpush1.bf16.msra.mxu0 %v2415
        %3262 = vmatprep.subr.bf16.mxu0 %v2418
        %3263 = vmatpush1.bf16.msra.mxu0 %v2417
        %3264 = vmatprep.subr.bf16.mxu0 %v2420
        %3265 = vmatpush1.bf16.msra.mxu0 %v2419
        %3266 = vmatprep.subr.bf16.mxu0 %v2422
        %3267 = vmatpush1.bf16.msra.mxu0 %v2421
        %3268 = vmatprep.subr.bf16.mxu0 %v2424
        %3269 = vmatpush1.bf16.msra.mxu0 %v2423
        %3270 = vmatprep.subr.bf16.mxu0 %v2426
        %3271 = vmatpush1.bf16.msra.mxu0 %v2425
        %3272 = vmatprep.subr.bf16.mxu0 %v2428
        %3273 = vmatpush1.bf16.msra.mxu0 %v2427
        %3274 = vmatprep.subr.bf16.mxu0 %v2430
        %3275 = vmatpush1.bf16.msra.mxu0 %v2429
        %3276 = vmatprep.subr.bf16.mxu0 %v2432
        %3277 = vmatpush1.bf16.msra.mxu0 %v2431
        %3278 = vmatprep.subr.bf16.mxu0 %v2434
        %3279 = vmatpush1.bf16.msra.mxu0 %v2433
        %3280 = vmatprep.subr.bf16.mxu0 %v2436
        %3281 = vmatpush1.bf16.msra.mxu0 %v2435
        %3282 = vmatprep.subr.bf16.mxu0 %v2438
        %3283 = vmatpush1.bf16.msra.mxu0 %v2437
        %3284 = vmatprep.subr.bf16.mxu0 %v2440
        %3285 = vmatpush1.bf16.msra.mxu0 %v2439
        %3286 = vmatprep.subr.bf16.mxu0 %v2442
        %3287 = vmatpush1.bf16.msra.mxu0 %v2441
        %3288 = vmatprep.subr.bf16.mxu0 %v2444
        %3289 = vmatpush1.bf16.msra.mxu0 %v2443
        %3290 = vmatprep.mubr.bf16.mxu0 %v1004
        %3291 = vmatmul.mubr.bf16.gmra.mrb[0].mxu0 %v1003
        %v3292 = vpop.f32.mrb[0].mxu0
        %v3293 = vadd.f32 %v3250, %v3292
        %v3294 = vpop.f32.mrb[0].mxu0
        %v3295 = vadd.f32 %v3252, %v3294
        %v3296 = vpop.f32.mrb[0].mxu0
        %v3297 = vadd.f32 %v3254, %v3296
        %v3298 = vpop.f32.mrb[0].mxu0
        %v3299 = vadd.f32 %v3256, %v3298
        %3300 = vdwg.mxu0
        %3301 = vmatprep.subr.bf16.mxu0 %v2446
        %3302 = vmatpush1.bf16.msra.mxu0 %v2445
        %3303 = vmatprep.subr.bf16.mxu0 %v2448
        %3304 = vmatpush1.bf16.msra.mxu0 %v2447
        %3305 = vmatprep.subr.bf16.mxu0 %v2450
        %3306 = vmatpush1.bf16.msra.mxu0 %v2449
        %3307 = vmatprep.subr.bf16.mxu0 %v2452
        %3308 = vmatpush1.bf16.msra.mxu0 %v2451
        %3309 = vmatprep.subr.bf16.mxu0 %v2454
        %3310 = vmatpush1.bf16.msra.mxu0 %v2453
        %3311 = vmatprep.subr.bf16.mxu0 %v2456
        %3312 = vmatpush1.bf16.msra.mxu0 %v2455
        %3313 = vmatprep.subr.bf16.mxu0 %v2458
        %3314 = vmatpush1.bf16.msra.mxu0 %v2457
        %3315 = vmatprep.subr.bf16.mxu0 %v2460
        %3316 = vmatpush1.bf16.msra.mxu0 %v2459
        %3317 = vmatprep.subr.bf16.mxu0 %v2462
        %3318 = vmatpush1.bf16.msra.mxu0 %v2461
        %3319 = vmatprep.subr.bf16.mxu0 %v2464
        %3320 = vmatpush1.bf16.msra.mxu0 %v2463
        %3321 = vmatprep.subr.bf16.mxu0 %v2466
        %3322 = vmatpush1.bf16.msra.mxu0 %v2465
        %3323 = vmatprep.subr.bf16.mxu0 %v2468
        %3324 = vmatpush1.bf16.msra.mxu0 %v2467
        %3325 = vmatprep.subr.bf16.mxu0 %v2470
        %3326 = vmatpush1.bf16.msra.mxu0 %v2469
        %3327 = vmatprep.subr.bf16.mxu0 %v2472
        %3328 = vmatpush1.bf16.msra.mxu0 %v2471
        %3329 = vmatprep.subr.bf16.mxu0 %v2474
        %3330 = vmatpush1.bf16.msra.mxu0 %v2473
        %3331 = vmatprep.subr.bf16.mxu0 %v2476
        %3332 = vmatpush1.bf16.msra.mxu0 %v2475
        %3333 = vmatprep.mubr.bf16.mxu0 %v1006
        %3334 = vmatmul.mubr.bf16.gmra.mrb[0].mxu0 %v1005
        %v3335 = vpop.f32.mrb[0].mxu0
        %v3336 = vadd.f32 %v3293, %v3335
        %v3337 = vpop.f32.mrb[0].mxu0
        %v3338 = vadd.f32 %v3295, %v3337
        %v3339 = vpop.f32.mrb[0].mxu0
        %v3340 = vadd.f32 %v3297, %v3339
        %v3341 = vpop.f32.mrb[0].mxu0
        %v3342 = vadd.f32 %v3299, %v3341
        %3343 = vdwg.mxu0
        %3344 = vmatprep.subr.bf16.mxu0 %v2478
        %3345 = vmatpush1.bf16.msra.mxu0 %v2477
        %3346 = vmatprep.subr.bf16.mxu0 %v2480
        %3347 = vmatpush1.bf16.msra.mxu0 %v2479
        %3348 = vmatprep.subr.bf16.mxu0 %v2482
        %3349 = vmatpush1.bf16.msra.mxu0 %v2481
        %3350 = vmatprep.subr.bf16.mxu0 %v2484
        %3351 = vmatpush1.bf16.msra.mxu0 %v2483
        %3352 = vmatprep.subr.bf16.mxu0 %v2486
        %3353 = vmatpush1.bf16.msra.mxu0 %v2485
        %3354 = vmatprep.subr.bf16.mxu0 %v2488
        %3355 = vmatpush1.bf16.msra.mxu0 %v2487
        %3356 = vmatprep.subr.bf16.mxu0 %v2490
        %3357 = vmatpush1.bf16.msra.mxu0 %v2489
        %3358 = vmatprep.subr.bf16.mxu0 %v2492
        %3359 = vmatpush1.bf16.msra.mxu0 %v2491
        %3360 = vmatprep.subr.bf16.mxu0 %v2494
        %3361 = vmatpush1.bf16.msra.mxu0 %v2493
        %3362 = vmatprep.subr.bf16.mxu0 %v2496
        %3363 = vmatpush1.bf16.msra.mxu0 %v2495
        %3364 = vmatprep.subr.bf16.mxu0 %v2498
        %3365 = vmatpush1.bf16.msra.mxu0 %v2497
        %3366 = vmatprep.subr.bf16.mxu0 %v2500
        %3367 = vmatpush1.bf16.msra.mxu0 %v2499
        %3368 = vmatprep.subr.bf16.mxu0 %v2502
        %3369 = vmatpush1.bf16.msra.mxu0 %v2501
        %3370 = vmatprep.subr.bf16.mxu0 %v2504
        %3371 = vmatpush1.bf16.msra.mxu0 %v2503
        %3372 = vmatprep.subr.bf16.mxu0 %v2506
        %3373 = vmatpush1.bf16.msra.mxu0 %v2505
        %3374 = vmatprep.subr.bf16.mxu0 %v2508
        %3375 = vmatpush1.bf16.msra.mxu0 %v2507
        %3376 = vmatprep.mubr.bf16.mxu0 %v1008
        %3377 = vmatmul.mubr.bf16.gmra.mrb[0].mxu0 %v1007
        %v3378 = vpop.f32.mrb[0].mxu0
        %v3379 = vadd.f32 %v3336, %v3378
        %v3380 = vpop.f32.mrb[0].mxu0
        %v3381 = vadd.f32 %v3338, %v3380
        %v3382 = vpop.f32.mrb[0].mxu0
        %v3383 = vadd.f32 %v3340, %v3382
        %v3384 = vpop.f32.mrb[0].mxu0
        %v3385 = vadd.f32 %v3342, %v3384
        %3386 = vdwg.mxu0
        %3387 = vmatprep.subr.bf16.mxu0 %v2510
        %3388 = vmatpush1.bf16.msra.mxu0 %v2509
        %3389 = vmatprep.subr.bf16.mxu0 %v2512
        %3390 = vmatpush1.bf16.msra.mxu0 %v2511
        %3391 = vmatprep.subr.bf16.mxu0 %v2514
        %3392 = vmatpush1.bf16.msra.mxu0 %v2513
        %3393 = vmatprep.subr.bf16.mxu0 %v2516
        %3394 = vmatpush1.bf16.msra.mxu0 %v2515
        %3395 = vmatprep.subr.bf16.mxu0 %v2518
        %3396 = vmatpush1.bf16.msra.mxu0 %v2517
        %3397 = vmatprep.subr.bf16.mxu0 %v2520
        %3398 = vmatpush1.bf16.msra.mxu0 %v2519
        %3399 = vmatprep.subr.bf16.mxu0 %v2522
        %3400 = vmatpush1.bf16.msra.mxu0 %v2521
        %3401 = vmatprep.subr.bf16.mxu0 %v2524
        %3402 = vmatpush1.bf16.msra.mxu0 %v2523
        %3403 = vmatprep.subr.bf16.mxu0 %v2526
        %3404 = vmatpush1.bf16.msra.mxu0 %v2525
        %3405 = vmatprep.subr.bf16.mxu0 %v2528
        %3406 = vmatpush1.bf16.msra.mxu0 %v2527
        %3407 = vmatprep.subr.bf16.mxu0 %v2530
        %3408 = vmatpush1.bf16.msra.mxu0 %v2529
        %3409 = vmatprep.subr.bf16.mxu0 %v2532
        %3410 = vmatpush1.bf16.msra.mxu0 %v2531
        %3411 = vmatprep.subr.bf16.mxu0 %v2534
        %3412 = vmatpush1.bf16.msra.mxu0 %v2533
        %3413 = vmatprep.subr.bf16.mxu0 %v2536
        %3414 = vmatpush1.bf16.msra.mxu0 %v2535
        %3415 = vmatprep.subr.bf16.mxu0 %v2538
        %3416 = vmatpush1.bf16.msra.mxu0 %v2537
        %3417 = vmatprep.subr.bf16.mxu0 %v2540
        %3418 = vmatpush1.bf16.msra.mxu0 %v2539
        %3419 = vmatprep.mubr.bf16.mxu0 %v1010
        %3420 = vmatmul.mubr.bf16.gmra.mrb[0].mxu0 %v1009
        %v3421 = vpop.f32.mrb[0].mxu0
        %v3422 = vadd.f32 %v3379, %v3421
        %v3423 = vpop.f32.mrb[0].mxu0
        %v3424 = vadd.f32 %v3381, %v3423
        %v3425 = vpop.f32.mrb[0].mxu0
        %v3426 = vadd.f32 %v3383, %v3425
        %v3427 = vpop.f32.mrb[0].mxu0
        %v3428 = vadd.f32 %v3385, %v3427
        %3429 = vdwg.mxu0
        %3430 = vmatprep.subr.bf16.mxu0 %v2542
        %3431 = vmatpush1.bf16.msra.mxu0 %v2541
        %3432 = vmatprep.subr.bf16.mxu0 %v2544
        %3433 = vmatpush1.bf16.msra.mxu0 %v2543
        %3434 = vmatprep.subr.bf16.mxu0 %v2546
        %3435 = vmatpush1.bf16.msra.mxu0 %v2545
        %3436 = vmatprep.subr.bf16.mxu0 %v2548
        %3437 = vmatpush1.bf16.msra.mxu0 %v2547
        %3438 = vmatprep.subr.bf16.mxu0 %v2550
        %3439 = vmatpush1.bf16.msra.mxu0 %v2549
        %3440 = vmatprep.subr.bf16.mxu0 %v2552
        %3441 = vmatpush1.bf16.msra.mxu0 %v2551
        %3442 = vmatprep.subr.bf16.mxu0 %v2554
        %3443 = vmatpush1.bf16.msra.mxu0 %v2553
        %3444 = vmatprep.subr.bf16.mxu0 %v2556
        %3445 = vmatpush1.bf16.msra.mxu0 %v2555
        %3446 = vmatprep.subr.bf16.mxu0 %v2558
        %3447 = vmatpush1.bf16.msra.mxu0 %v2557
        %3448 = vmatprep.subr.bf16.mxu0 %v2560
        %3449 = vmatpush1.bf16.msra.mxu0 %v2559
        %3450 = vmatprep.subr.bf16.mxu0 %v2562
        %3451 = vmatpush1.bf16.msra.mxu0 %v2561
        %3452 = vmatprep.subr.bf16.mxu0 %v2564
        %3453 = vmatpush1.bf16.msra.mxu0 %v2563
        %3454 = vmatprep.subr.bf16.mxu0 %v2566
        %3455 = vmatpush1.bf16.msra.mxu0 %v2565
        %3456 = vmatprep.subr.bf16.mxu0 %v2568
        %3457 = vmatpush1.bf16.msra.mxu0 %v2567
        %3458 = vmatprep.subr.bf16.mxu0 %v2570
        %3459 = vmatpush1.bf16.msra.mxu0 %v2569
        %3460 = vmatprep.subr.bf16.mxu0 %v2572
        %3461 = vmatpush1.bf16.msra.mxu0 %v2571
        %3462 = vmatprep.mubr.bf16.mxu0 %v1012
        %3463 = vmatmul.mubr.bf16.gmra.mrb[0].mxu0 %v1011
        %v3464 = vpop.f32.mrb[0].mxu0
        %v3465 = vadd.f32 %v3422, %v3464
        %v3466 = vpop.f32.mrb[0].mxu0
        %v3467 = vadd.f32 %v3424, %v3466
        %v3468 = vpop.f32.mrb[0].mxu0
        %v3469 = vadd.f32 %v3426, %v3468
        %v3470 = vpop.f32.mrb[0].mxu0
        %v3471 = vadd.f32 %v3428, %v3470
        %3472 = vdwg.mxu0
        %v3473 = vmax.f32 %v3465, 0.0
        %v3474 = vmax.f32 %v3467, 0.0
        %v3475 = vmax.f32 %v3469, 0.0
        %v3476 = vmax.f32 %v3471, 0.0
        %v3477 = vpack.c.bf16 %v3475, %v3473
        %v3478 = vpack.c.bf16 %v3476, %v3474
        %v3479 = vld [vmem:[#allocation2] sm:$0xff]
        %v3480 = vld [vmem:[#allocation2 + $0x8] sm:$0xff]
        %v3481 = vld [vmem:[#allocation2 + $0x10] sm:$0xff]
        %v3482 = vld [vmem:[#allocation2 + $0x18] sm:$0xff]
        %v3483 = vld [vmem:[#allocation2 + $0x20] sm:$0xff]
        %v3484 = vld [vmem:[#allocation2 + $0x28] sm:$0xff]
        %v3485 = vld [vmem:[#allocation2 + $0x30] sm:$0xff]
        %v3486 = vld [vmem:[#allocation2 + $0x38] sm:$0xff]
        %v3487 = vld [vmem:[%s421] sm:$0xff]
        %v3488 = vld [vmem:[%s421 + $0x8] sm:$0xff]
        %v3489 = vld [vmem:[%s421 + $0x10] sm:$0xff]
        %v3490 = vld [vmem:[%s421 + $0x18] sm:$0xff]
        %v3491 = vld [vmem:[%s421 + $0x20] sm:$0xff]
        %v3492 = vld [vmem:[%s421 + $0x28] sm:$0xff]
        %v3493 = vld [vmem:[%s421 + $0x30] sm:$0xff]
        %v3494 = vld [vmem:[%s421 + $0x38] sm:$0xff]
        %v3495 = vld [vmem:[%s421 + $0x40] sm:$0xff]
        %v3496 = vld [vmem:[%s421 + $0x48] sm:$0xff]
        %v3497 = vld [vmem:[%s421 + $0x50] sm:$0xff]
        %v3498 = vld [vmem:[%s421 + $0x58] sm:$0xff]
        %v3499 = vld [vmem:[%s421 + $0x60] sm:$0xff]
        %v3500 = vld [vmem:[%s421 + $0x68] sm:$0xff]
        %v3501 = vld [vmem:[%s421 + $0x70] sm:$0xff]
        %v3502 = vld [vmem:[%s421 + $0x78] sm:$0xff]
        %v3503 = vld [vmem:[%s421 + $0x80] sm:$0xff]
        %v3504 = vld [vmem:[%s421 + $0x88] sm:$0xff]
        %v3505 = vld [vmem:[%s421 + $0x90] sm:$0xff]
        %v3506 = vld [vmem:[%s421 + $0x98] sm:$0xff]
        %v3507 = vld [vmem:[%s421 + $0xa0] sm:$0xff]
        %v3508 = vld [vmem:[%s421 + $0xa8] sm:$0xff]
        %v3509 = vld [vmem:[%s421 + $0xb0] sm:$0xff]
        %v3510 = vld [vmem:[%s421 + $0xb8] sm:$0xff]
        %v3511 = vld [vmem:[%s421 + $0xc0] sm:$0xff]
        %v3512 = vld [vmem:[%s421 + $0xc8] sm:$0xff]
        %v3513 = vld [vmem:[%s421 + $0xd0] sm:$0xff]
        %v3514 = vld [vmem:[%s421 + $0xd8] sm:$0xff]
        %v3515 = vld [vmem:[%s421 + $0xe0] sm:$0xff]
        %v3516 = vld [vmem:[%s421 + $0xe8] sm:$0xff]
        %v3517 = vld [vmem:[%s421 + $0xf0] sm:$0xff]
        %v3518 = vld [vmem:[%s421 + $0xf8] sm:$0xff]
        %v3519 = vld [vmem:[%s421 + $0x100] sm:$0xff]
        %v3520 = vld [vmem:[%s421 + $0x108] sm:$0xff]
        %v3521 = vld [vmem:[%s421 + $0x110] sm:$0xff]
        %v3522 = vld [vmem:[%s421 + $0x118] sm:$0xff]
        %v3523 = vld [vmem:[%s421 + $0x120] sm:$0xff]
        %v3524 = vld [vmem:[%s421 + $0x128] sm:$0xff]
        %v3525 = vld [vmem:[%s421 + $0x130] sm:$0xff]
        %v3526 = vld [vmem:[%s421 + $0x138] sm:$0xff]
        %v3527 = vld [vmem:[%s421 + $0x140] sm:$0xff]
        %v3528 = vld [vmem:[%s421 + $0x148] sm:$0xff]
        %v3529 = vld [vmem:[%s421 + $0x150] sm:$0xff]
        %v3530 = vld [vmem:[%s421 + $0x158] sm:$0xff]
        %v3531 = vld [vmem:[%s421 + $0x160] sm:$0xff]
        %v3532 = vld [vmem:[%s421 + $0x168] sm:$0xff]
        %v3533 = vld [vmem:[%s421 + $0x170] sm:$0xff]
        %v3534 = vld [vmem:[%s421 + $0x178] sm:$0xff]
        %v3535 = vld [vmem:[%s421 + $0x180] sm:$0xff]
        %v3536 = vld [vmem:[%s421 + $0x188] sm:$0xff]
        %v3537 = vld [vmem:[%s421 + $0x190] sm:$0xff]
        %v3538 = vld [vmem:[%s421 + $0x198] sm:$0xff]
        %v3539 = vld [vmem:[%s421 + $0x1a0] sm:$0xff]
        %v3540 = vld [vmem:[%s421 + $0x1a8] sm:$0xff]
        %v3541 = vld [vmem:[%s421 + $0x1b0] sm:$0xff]
        %v3542 = vld [vmem:[%s421 + $0x1b8] sm:$0xff]
        %v3543 = vld [vmem:[%s421 + $0x1c0] sm:$0xff]
        %v3544 = vld [vmem:[%s421 + $0x1c8] sm:$0xff]
        %v3545 = vld [vmem:[%s421 + $0x1d0] sm:$0xff]
        %v3546 = vld [vmem:[%s421 + $0x1d8] sm:$0xff]
        %v3547 = vld [vmem:[%s421 + $0x1e0] sm:$0xff]
        %v3548 = vld [vmem:[%s421 + $0x1e8] sm:$0xff]
        %v3549 = vld [vmem:[%s421 + $0x1f0] sm:$0xff]
        %v3550 = vld [vmem:[%s421 + $0x1f8] sm:$0xff]
        %v3615 = vunpack.c.l.b16 %v3487
        %v3616 = vunpack.c.h.b16 %v3487
        %v3617 = vunpack.c.l.b16 %v3488
        %v3618 = vunpack.c.h.b16 %v3488
        %v3619 = vunpack.c.l.b16 %v3489
        %v3620 = vunpack.c.h.b16 %v3489
        %v3621 = vunpack.c.l.b16 %v3490
        %v3622 = vunpack.c.h.b16 %v3490
        %v3623 = vunpack.c.l.b16 %v3491
        %v3624 = vunpack.c.h.b16 %v3491
        %v3625 = vunpack.c.l.b16 %v3492
        %v3626 = vunpack.c.h.b16 %v3492
        %v3627 = vunpack.c.l.b16 %v3493
        %v3628 = vunpack.c.h.b16 %v3493
        %v3629 = vunpack.c.l.b16 %v3494
        %v3630 = vunpack.c.h.b16 %v3494
        %v3631 = vunpack.c.l.b16 %v3495
        %v3632 = vunpack.c.h.b16 %v3495
        %v3633 = vunpack.c.l.b16 %v3496
        %v3634 = vunpack.c.h.b16 %v3496
        %v3635 = vunpack.c.l.b16 %v3497
        %v3636 = vunpack.c.h.b16 %v3497
        %v3637 = vunpack.c.l.b16 %v3498
        %v3638 = vunpack.c.h.b16 %v3498
        %v3639 = vunpack.c.l.b16 %v3499
        %v3640 = vunpack.c.h.b16 %v3499
        %v3641 = vunpack.c.l.b16 %v3500
        %v3642 = vunpack.c.h.b16 %v3500
        %v3643 = vunpack.c.l.b16 %v3501
        %v3644 = vunpack.c.h.b16 %v3501
        %v3645 = vunpack.c.l.b16 %v3502
        %v3646 = vunpack.c.h.b16 %v3502
        %v3647 = vunpack.c.l.b16 %v3503
        %v3648 = vunpack.c.h.b16 %v3503
        %v3649 = vunpack.c.l.b16 %v3504
        %v3650 = vunpack.c.h.b16 %v3504
        %v3651 = vunpack.c.l.b16 %v3505
        %v3652 = vunpack.c.h.b16 %v3505
        %v3653 = vunpack.c.l.b16 %v3506
        %v3654 = vunpack.c.h.b16 %v3506
        %v3655 = vunpack.c.l.b16 %v3507
        %v3656 = vunpack.c.h.b16 %v3507
        %v3657 = vunpack.c.l.b16 %v3508
        %v3658 = vunpack.c.h.b16 %v3508
        %v3659 = vunpack.c.l.b16 %v3509
        %v3660 = vunpack.c.h.b16 %v3509
        %v3661 = vunpack.c.l.b16 %v3510
        %v3662 = vunpack.c.h.b16 %v3510
        %v3663 = vunpack.c.l.b16 %v3511
        %v3664 = vunpack.c.h.b16 %v3511
        %v3665 = vunpack.c.l.b16 %v3512
        %v3666 = vunpack.c.h.b16 %v3512
        %v3667 = vunpack.c.l.b16 %v3513
        %v3668 = vunpack.c.h.b16 %v3513
        %v3669 = vunpack.c.l.b16 %v3514
        %v3670 = vunpack.c.h.b16 %v3514
        %v3671 = vunpack.c.l.b16 %v3515
        %v3672 = vunpack.c.h.b16 %v3515
        %v3673 = vunpack.c.l.b16 %v3516
        %v3674 = vunpack.c.h.b16 %v3516
        %v3675 = vunpack.c.l.b16 %v3517
        %v3676 = vunpack.c.h.b16 %v3517
        %v3677 = vunpack.c.l.b16 %v3518
        %v3678 = vunpack.c.h.b16 %v3518
        %v3679 = vunpack.c.l.b16 %v3519
        %v3680 = vunpack.c.h.b16 %v3519
        %v3681 = vunpack.c.l.b16 %v3520
        %v3682 = vunpack.c.h.b16 %v3520
        %v3683 = vunpack.c.l.b16 %v3521
        %v3684 = vunpack.c.h.b16 %v3521
        %v3685 = vunpack.c.l.b16 %v3522
        %v3686 = vunpack.c.h.b16 %v3522
        %v3687 = vunpack.c.l.b16 %v3523
        %v3688 = vunpack.c.h.b16 %v3523
        %v3689 = vunpack.c.l.b16 %v3524
        %v3690 = vunpack.c.h.b16 %v3524
        %v3691 = vunpack.c.l.b16 %v3525
        %v3692 = vunpack.c.h.b16 %v3525
        %v3693 = vunpack.c.l.b16 %v3526
        %v3694 = vunpack.c.h.b16 %v3526
        %v3695 = vunpack.c.l.b16 %v3527
        %v3696 = vunpack.c.h.b16 %v3527
        %v3697 = vunpack.c.l.b16 %v3528
        %v3698 = vunpack.c.h.b16 %v3528
        %v3699 = vunpack.c.l.b16 %v3529
        %v3700 = vunpack.c.h.b16 %v3529
        %v3701 = vunpack.c.l.b16 %v3530
        %v3702 = vunpack.c.h.b16 %v3530
        %v3703 = vunpack.c.l.b16 %v3531
        %v3704 = vunpack.c.h.b16 %v3531
        %v3705 = vunpack.c.l.b16 %v3532
        %v3706 = vunpack.c.h.b16 %v3532
        %v3707 = vunpack.c.l.b16 %v3533
        %v3708 = vunpack.c.h.b16 %v3533
        %v3709 = vunpack.c.l.b16 %v3534
        %v3710 = vunpack.c.h.b16 %v3534
        %v3711 = vunpack.c.l.b16 %v3535
        %v3712 = vunpack.c.h.b16 %v3535
        %v3713 = vunpack.c.l.b16 %v3536
        %v3714 = vunpack.c.h.b16 %v3536
        %v3715 = vunpack.c.l.b16 %v3537
        %v3716 = vunpack.c.h.b16 %v3537
        %v3717 = vunpack.c.l.b16 %v3538
        %v3718 = vunpack.c.h.b16 %v3538
        %v3719 = vunpack.c.l.b16 %v3539
        %v3720 = vunpack.c.h.b16 %v3539
        %v3721 = vunpack.c.l.b16 %v3540
        %v3722 = vunpack.c.h.b16 %v3540
        %v3723 = vunpack.c.l.b16 %v3541
        %v3724 = vunpack.c.h.b16 %v3541
        %v3725 = vunpack.c.l.b16 %v3542
        %v3726 = vunpack.c.h.b16 %v3542
        %v3727 = vunpack.c.l.b16 %v3543
        %v3728 = vunpack.c.h.b16 %v3543
        %v3729 = vunpack.c.l.b16 %v3544
        %v3730 = vunpack.c.h.b16 %v3544
        %v3731 = vunpack.c.l.b16 %v3545
        %v3732 = vunpack.c.h.b16 %v3545
        %v3733 = vunpack.c.l.b16 %v3546
        %v3734 = vunpack.c.h.b16 %v3546
        %v3735 = vunpack.c.l.b16 %v3547
        %v3736 = vunpack.c.h.b16 %v3547
        %v3737 = vunpack.c.l.b16 %v3548
        %v3738 = vunpack.c.h.b16 %v3548
        %v3739 = vunpack.c.l.b16 %v3549
        %v3740 = vunpack.c.h.b16 %v3549
        %v3741 = vunpack.c.l.b16 %v3550
        %v3742 = vunpack.c.h.b16 %v3550
        %v3743 = vpack.c.b16 %v3619, %v3615
        %v3744 = vpack.c.b16 %v3620, %v3616
        %v3745 = vpack.c.b16 %v3621, %v3617
        %v3746 = vpack.c.b16 %v3622, %v3618
        %v3747 = vpack.c.b16 %v3627, %v3623
        %v3748 = vpack.c.b16 %v3628, %v3624
        %v3749 = vpack.c.b16 %v3629, %v3625
        %v3750 = vpack.c.b16 %v3630, %v3626
        %v3751 = vpack.c.b16 %v3635, %v3631
        %v3752 = vpack.c.b16 %v3636, %v3632
        %v3753 = vpack.c.b16 %v3637, %v3633
        %v3754 = vpack.c.b16 %v3638, %v3634
        %v3755 = vpack.c.b16 %v3643, %v3639
        %v3756 = vpack.c.b16 %v3644, %v3640
        %v3757 = vpack.c.b16 %v3645, %v3641
        %v3758 = vpack.c.b16 %v3646, %v3642
        %v3759 = vpack.c.b16 %v3651, %v3647
        %v3760 = vpack.c.b16 %v3652, %v3648
        %v3761 = vpack.c.b16 %v3653, %v3649
        %v3762 = vpack.c.b16 %v3654, %v3650
        %v3763 = vpack.c.b16 %v3659, %v3655
        %v3764 = vpack.c.b16 %v3660, %v3656
        %v3765 = vpack.c.b16 %v3661, %v3657
        %v3766 = vpack.c.b16 %v3662, %v3658
        %v3767 = vpack.c.b16 %v3667, %v3663
        %v3768 = vpack.c.b16 %v3668, %v3664
        %v3769 = vpack.c.b16 %v3669, %v3665
        %v3770 = vpack.c.b16 %v3670, %v3666
        %v3771 = vpack.c.b16 %v3675, %v3671
        %v3772 = vpack.c.b16 %v3676, %v3672
        %v3773 = vpack.c.b16 %v3677, %v3673
        %v3774 = vpack.c.b16 %v3678, %v3674
        %v3775 = vpack.c.b16 %v3683, %v3679
        %v3776 = vpack.c.b16 %v3684, %v3680
        %v3777 = vpack.c.b16 %v3685, %v3681
        %v3778 = vpack.c.b16 %v3686, %v3682
        %v3779 = vpack.c.b16 %v3691, %v3687
        %v3780 = vpack.c.b16 %v3692, %v3688
        %v3781 = vpack.c.b16 %v3693, %v3689
        %v3782 = vpack.c.b16 %v3694, %v3690
        %v3783 = vpack.c.b16 %v3699, %v3695
        %v3784 = vpack.c.b16 %v3700, %v3696
        %v3785 = vpack.c.b16 %v3701, %v3697
        %v3786 = vpack.c.b16 %v3702, %v3698
        %v3787 = vpack.c.b16 %v3707, %v3703
        %v3788 = vpack.c.b16 %v3708, %v3704
        %v3789 = vpack.c.b16 %v3709, %v3705
        %v3790 = vpack.c.b16 %v3710, %v3706
        %v3791 = vpack.c.b16 %v3715, %v3711
        %v3792 = vpack.c.b16 %v3716, %v3712
        %v3793 = vpack.c.b16 %v3717, %v3713
        %v3794 = vpack.c.b16 %v3718, %v3714
        %v3795 = vpack.c.b16 %v3723, %v3719
        %v3796 = vpack.c.b16 %v3724, %v3720
        %v3797 = vpack.c.b16 %v3725, %v3721
        %v3798 = vpack.c.b16 %v3726, %v3722
        %v3799 = vpack.c.b16 %v3731, %v3727
        %v3800 = vpack.c.b16 %v3732, %v3728
        %v3801 = vpack.c.b16 %v3733, %v3729
        %v3802 = vpack.c.b16 %v3734, %v3730
        %v3803 = vpack.c.b16 %v3739, %v3735
        %v3804 = vpack.c.b16 %v3740, %v3736
        %v3805 = vpack.c.b16 %v3741, %v3737
        %v3806 = vpack.c.b16 %v3742, %v3738
        %3871 = vmatprep.subr.bf16.mxu0 %v3744
        %3872 = vmatpush1.bf16.msra.mxu0 %v3743
        %3873 = vmatprep.subr.bf16.mxu0 %v3748
        %3874 = vmatpush1.bf16.msra.mxu0 %v3747
        %3875 = vmatprep.subr.bf16.mxu0 %v3752
        %3876 = vmatpush1.bf16.msra.mxu0 %v3751
        %3877 = vmatprep.subr.bf16.mxu0 %v3756
        %3878 = vmatpush1.bf16.msra.mxu0 %v3755
        %3879 = vmatprep.subr.bf16.mxu0 %v3760
        %3880 = vmatpush1.bf16.msra.mxu0 %v3759
        %3881 = vmatprep.subr.bf16.mxu0 %v3764
        %3882 = vmatpush1.bf16.msra.mxu0 %v3763
        %3883 = vmatprep.subr.bf16.mxu0 %v3768
        %3884 = vmatpush1.bf16.msra.mxu0 %v3767
        %3885 = vmatprep.subr.bf16.mxu0 %v3772
        %3886 = vmatpush1.bf16.msra.mxu0 %v3771
        %3887 = vmatprep.subr.bf16.mxu0 %v3776
        %3888 = vmatpush1.bf16.msra.mxu0 %v3775
        %3889 = vmatprep.subr.bf16.mxu0 %v3780
        %3890 = vmatpush1.bf16.msra.mxu0 %v3779
        %3891 = vmatprep.subr.bf16.mxu0 %v3784
        %3892 = vmatpush1.bf16.msra.mxu0 %v3783
        %3893 = vmatprep.subr.bf16.mxu0 %v3788
        %3894 = vmatpush1.bf16.msra.mxu0 %v3787
        %3895 = vmatprep.subr.bf16.mxu0 %v3792
        %3896 = vmatpush1.bf16.msra.mxu0 %v3791
        %3897 = vmatprep.subr.bf16.mxu0 %v3796
        %3898 = vmatpush1.bf16.msra.mxu0 %v3795
        %3899 = vmatprep.subr.bf16.mxu0 %v3800
        %3900 = vmatpush1.bf16.msra.mxu0 %v3799
        %3901 = vmatprep.subr.bf16.mxu0 %v3804
        %3902 = vmatpush1.bf16.msra.mxu0 %v3803
        %3903 = vmatprep.mubr.bf16.mxu0 %v3478
        %3904 = vmatmul.mubr.bf16.gmra.mrb[0].mxu0 %v3477
        %v3905 = vpop.f32.mrb[0].mxu0
        %v3906 = vadd.f32 0.0, %v3905
        %v3907 = vpop.f32.mrb[0].mxu0
        %v3908 = vadd.f32 0.0, %v3907
        %v3909 = vpop.f32.mrb[0].mxu0
        %v3910 = vadd.f32 0.0, %v3909
        %v3911 = vpop.f32.mrb[0].mxu0
        %v3912 = vadd.f32 0.0, %v3911
        %3913 = vdwg.mxu0
        %3914 = vmatprep.subr.bf16.mxu0 %v3746
        %3915 = vmatpush1.bf16.msra.mxu0 %v3745
        %3916 = vmatprep.subr.bf16.mxu0 %v3750
        %3917 = vmatpush1.bf16.msra.mxu0 %v3749
        %3918 = vmatprep.subr.bf16.mxu0 %v3754
        %3919 = vmatpush1.bf16.msra.mxu0 %v3753
        %3920 = vmatprep.subr.bf16.mxu0 %v3758
        %3921 = vmatpush1.bf16.msra.mxu0 %v3757
        %3922 = vmatprep.subr.bf16.mxu0 %v3762
        %3923 = vmatpush1.bf16.msra.mxu0 %v3761
        %3924 = vmatprep.subr.bf16.mxu0 %v3766
        %3925 = vmatpush1.bf16.msra.mxu0 %v3765
        %3926 = vmatprep.subr.bf16.mxu0 %v3770
        %3927 = vmatpush1.bf16.msra.mxu0 %v3769
        %3928 = vmatprep.subr.bf16.mxu0 %v3774
        %3929 = vmatpush1.bf16.msra.mxu0 %v3773
        %3930 = vmatprep.subr.bf16.mxu0 %v3778
        %3931 = vmatpush1.bf16.msra.mxu0 %v3777
        %3932 = vmatprep.subr.bf16.mxu0 %v3782
        %3933 = vmatpush1.bf16.msra.mxu0 %v3781
        %3934 = vmatprep.subr.bf16.mxu0 %v3786
        %3935 = vmatpush1.bf16.msra.mxu0 %v3785
        %3936 = vmatprep.subr.bf16.mxu0 %v3790
        %3937 = vmatpush1.bf16.msra.mxu0 %v3789
        %3938 = vmatprep.subr.bf16.mxu0 %v3794
        %3939 = vmatpush1.bf16.msra.mxu0 %v3793
        %3940 = vmatprep.subr.bf16.mxu0 %v3798
        %3941 = vmatpush1.bf16.msra.mxu0 %v3797
        %3942 = vmatprep.subr.bf16.mxu0 %v3802
        %3943 = vmatpush1.bf16.msra.mxu0 %v3801
        %3944 = vmatprep.subr.bf16.mxu0 %v3806
        %3945 = vmatpush1.bf16.msra.mxu0 %v3805
        %3946 = vmatprep.mubr.bf16.mxu0 %v3478
        %3947 = vmatmul.mubr.bf16.gmra.mrb[0].mxu0 %v3477
        %v3948 = vpop.f32.mrb[0].mxu0
        %v3949 = vadd.f32 0.0, %v3948
        %v3950 = vpop.f32.mrb[0].mxu0
        %v3951 = vadd.f32 0.0, %v3950
        %v3952 = vpop.f32.mrb[0].mxu0
        %v3953 = vadd.f32 0.0, %v3952
        %v3954 = vpop.f32.mrb[0].mxu0
        %v3955 = vadd.f32 0.0, %v3954
        %3956 = vdwg.mxu0
        %v3957 = vadd.f32 %v3479, %v3906
        %v3958 = vadd.f32 %v3480, %v3908
        %v3959 = vadd.f32 %v3481, %v3949
        %v3960 = vadd.f32 %v3482, %v3951
        %v3961 = vadd.f32 %v3483, %v3910
        %v3962 = vadd.f32 %v3484, %v3912
        %v3963 = vadd.f32 %v3485, %v3953
        %v3964 = vadd.f32 %v3486, %v3955
        %3965 = vst [vmem:[#allocation2] sm:$0xff] %v3957
        %3966 = vst [vmem:[#allocation2 + $0x8] sm:$0xff] %v3958
        %3967 = vst [vmem:[#allocation2 + $0x10] sm:$0xff] %v3959
        %3968 = vst [vmem:[#allocation2 + $0x18] sm:$0xff] %v3960
        %3969 = vst [vmem:[#allocation2 + $0x20] sm:$0xff] %v3961
        %3970 = vst [vmem:[#allocation2 + $0x28] sm:$0xff] %v3962
        %3971 = vst [vmem:[#allocation2 + $0x30] sm:$0xff] %v3963
        %3972 = vst [vmem:[#allocation2 + $0x38] sm:$0xff] %v3964
        %p3973 = scmp.eq.s32.totalorder %s29, 3
        // Predicated region
        $region93: #{cifar_mlp_forward.1} parent=55 // pred_check
          %p3974 = pneg %p3973
        $region94: #{cifar_mlp_forward.1} parent=55 // pred_check_branch
          %3976 = sbr.rel (%p3974) target = $region96
        $region95: #{cifar_mlp_forward.1} parent=55 // pred_region
          %v3977 = vld [vmem:[#allocation2] sm:$0xff]
          %v3978 = vld [vmem:[#allocation2 + $0x8] sm:$0xff]
          %v3979 = vld [vmem:[#allocation2 + $0x10] sm:$0xff]
          %v3980 = vld [vmem:[#allocation2 + $0x18] sm:$0xff]
          %v3981 = vld [vmem:[#allocation2 + $0x20] sm:$0xff]
          %v3982 = vld [vmem:[#allocation2 + $0x28] sm:$0xff]
          %v3983 = vld [vmem:[#allocation2 + $0x30] sm:$0xff]
          %v3984 = vld [vmem:[#allocation2 + $0x38] sm:$0xff]
          %v3985 = vld [vmem:[#allocation8] sm:$0xf]
          %v3987 = vlaneseq
          %v3988 = vshrl.u32 %v3987, 7
          %v3989 = vsub.s32 0, %v3988
          %v3990 = vrot.slane %v3985, %v3989
          %v3991 = vlaneseq
          %v3992 = vshrl.u32 %v3991, 7
          %v3993 = vsub.s32 1, %v3992
          %v3994 = vrot.slane %v3985, %v3993
          %v3995 = vlaneseq
          %v3996 = vshrl.u32 %v3995, 7
          %v3997 = vsub.s32 2, %v3996
          %v3998 = vrot.slane %v3985, %v3997
          %v3999 = vlaneseq
          %v4000 = vshrl.u32 %v3999, 7
          %v4001 = vsub.s32 3, %v4000
          %v4002 = vrot.slane %v3985, %v4001
          %v4007 = vadd.f32 %v3977, %v3990
          %v4008 = vadd.f32 %v3978, %v3994
          %v4009 = vadd.f32 %v3979, %v3998
          %v4010 = vadd.f32 %v3980, %v4002
          %v4011 = vadd.f32 %v3981, %v3990
          %v4012 = vadd.f32 %v3982, %v3994
          %v4013 = vadd.f32 %v3983, %v3998
          %v4014 = vadd.f32 %v3984, %v4002
          %v4015 = vmax.f32 %v4007, 0.0
          %v4016 = vmax.f32 %v4008, 0.0
          %v4017 = vmax.f32 %v4009, 0.0
          %v4018 = vmax.f32 %v4010, 0.0
          %v4019 = vmax.f32 %v4011, 0.0
          %v4020 = vmax.f32 %v4012, 0.0
          %v4021 = vmax.f32 %v4013, 0.0
          %v4022 = vmax.f32 %v4014, 0.0
          %v4023 = vpack.c.bf16 %v4019, %v4015
          %v4024 = vpack.c.bf16 %v4020, %v4016
          %v4025 = vpack.c.bf16 %v4021, %v4017
          %v4026 = vpack.c.bf16 %v4022, %v4018
          %v4027 = vld [vmem:[#allocation10] sm:$0xf]
          %v4028 = vld [vmem:[#allocation10 + $0x4] sm:$0xf]
          %v4029 = vld [vmem:[#allocation10 + $0x8] sm:$0xf]
          %v4030 = vld [vmem:[#allocation10 + $0xc] sm:$0xf]
          %v4031 = vld [vmem:[#allocation10 + $0x10] sm:$0xf]
          %v4032 = vld [vmem:[#allocation10 + $0x14] sm:$0xf]
          %v4033 = vld [vmem:[#allocation10 + $0x18] sm:$0xf]
          %v4034 = vld [vmem:[#allocation10 + $0x1c] sm:$0xf]
          %v4035 = vld [vmem:[#allocation10 + $0x20] sm:$0xf]
          %v4036 = vld [vmem:[#allocation10 + $0x24] sm:$0xf]
          %v4037 = vld [vmem:[#allocation10 + $0x28] sm:$0xf]
          %v4038 = vld [vmem:[#allocation10 + $0x2c] sm:$0xf]
          %v4039 = vld [vmem:[#allocation10 + $0x30] sm:$0xf]
          %v4040 = vld [vmem:[#allocation10 + $0x34] sm:$0xf]
          %v4041 = vld [vmem:[#allocation10 + $0x38] sm:$0xf]
          %v4042 = vld [vmem:[#allocation10 + $0x3c] sm:$0xf]
          %v4043 = vld [vmem:[#allocation10 + $0x40] sm:$0xf]
          %v4044 = vld [vmem:[#allocation10 + $0x44] sm:$0xf]
          %v4045 = vld [vmem:[#allocation10 + $0x48] sm:$0xf]
          %v4046 = vld [vmem:[#allocation10 + $0x4c] sm:$0xf]
          %v4047 = vld [vmem:[#allocation10 + $0x50] sm:$0xf]
          %v4048 = vld [vmem:[#allocation10 + $0x54] sm:$0xf]
          %v4049 = vld [vmem:[#allocation10 + $0x58] sm:$0xf]
          %v4050 = vld [vmem:[#allocation10 + $0x5c] sm:$0xf]
          %v4051 = vld [vmem:[#allocation10 + $0x60] sm:$0xf]
          %v4052 = vld [vmem:[#allocation10 + $0x64] sm:$0xf]
          %v4053 = vld [vmem:[#allocation10 + $0x68] sm:$0xf]
          %v4054 = vld [vmem:[#allocation10 + $0x6c] sm:$0xf]
          %v4055 = vld [vmem:[#allocation10 + $0x70] sm:$0xf]
          %v4056 = vld [vmem:[#allocation10 + $0x74] sm:$0xf]
          %v4057 = vld [vmem:[#allocation10 + $0x78] sm:$0xf]
          %v4058 = vld [vmem:[#allocation10 + $0x7c] sm:$0xf]
          %v4059 = vld [vmem:[#allocation10 + $0x80] sm:$0xf]
          %v4060 = vld [vmem:[#allocation10 + $0x84] sm:$0xf]
          %v4061 = vld [vmem:[#allocation10 + $0x88] sm:$0xf]
          %v4062 = vld [vmem:[#allocation10 + $0x8c] sm:$0xf]
          %v4063 = vld [vmem:[#allocation10 + $0x90] sm:$0xf]
          %v4064 = vld [vmem:[#allocation10 + $0x94] sm:$0xf]
          %v4065 = vld [vmem:[#allocation10 + $0x98] sm:$0xf]
          %v4066 = vld [vmem:[#allocation10 + $0x9c] sm:$0xf]
          %v4067 = vld [vmem:[#allocation10 + $0xa0] sm:$0xf]
          %v4068 = vld [vmem:[#allocation10 + $0xa4] sm:$0xf]
          %v4069 = vld [vmem:[#allocation10 + $0xa8] sm:$0xf]
          %v4070 = vld [vmem:[#allocation10 + $0xac] sm:$0xf]
          %v4071 = vld [vmem:[#allocation10 + $0xb0] sm:$0xf]
          %v4072 = vld [vmem:[#allocation10 + $0xb4] sm:$0xf]
          %v4073 = vld [vmem:[#allocation10 + $0xb8] sm:$0xf]
          %v4074 = vld [vmem:[#allocation10 + $0xbc] sm:$0xf]
          %v4075 = vld [vmem:[#allocation10 + $0xc0] sm:$0xf]
          %v4076 = vld [vmem:[#allocation10 + $0xc4] sm:$0xf]
          %v4077 = vld [vmem:[#allocation10 + $0xc8] sm:$0xf]
          %v4078 = vld [vmem:[#allocation10 + $0xcc] sm:$0xf]
          %v4079 = vld [vmem:[#allocation10 + $0xd0] sm:$0xf]
          %v4080 = vld [vmem:[#allocation10 + $0xd4] sm:$0xf]
          %v4081 = vld [vmem:[#allocation10 + $0xd8] sm:$0xf]
          %v4082 = vld [vmem:[#allocation10 + $0xdc] sm:$0xf]
          %v4083 = vld [vmem:[#allocation10 + $0xe0] sm:$0xf]
          %v4084 = vld [vmem:[#allocation10 + $0xe4] sm:$0xf]
          %v4085 = vld [vmem:[#allocation10 + $0xe8] sm:$0xf]
          %v4086 = vld [vmem:[#allocation10 + $0xec] sm:$0xf]
          %v4087 = vld [vmem:[#allocation10 + $0xf0] sm:$0xf]
          %v4088 = vld [vmem:[#allocation10 + $0xf4] sm:$0xf]
          %v4089 = vld [vmem:[#allocation10 + $0xf8] sm:$0xf]
          %v4090 = vld [vmem:[#allocation10 + $0xfc] sm:$0xf]
          %v4091 = vld [vmem:[#allocation11] sm:$0x1]
          %v4093 = vlaneseq
          %v4094 = vshrl.u32 %v4093, 7
          %v4095 = vsub.s32 0, %v4094
          %v4096 = vrot.slane %v4091, %v4095
          %v4162 = vunpack.c.l.b16 %v4027
          %v4163 = vunpack.c.l.b16 %v4028
          %v4164 = vunpack.c.l.b16 %v4029
          %v4165 = vunpack.c.l.b16 %v4030
          %v4166 = vunpack.c.l.b16 %v4031
          %v4167 = vunpack.c.l.b16 %v4032
          %v4168 = vunpack.c.l.b16 %v4033
          %v4169 = vunpack.c.l.b16 %v4034
          %v4170 = vunpack.c.l.b16 %v4035
          %v4171 = vunpack.c.l.b16 %v4036
          %v4172 = vunpack.c.l.b16 %v4037
          %v4173 = vunpack.c.l.b16 %v4038
          %v4174 = vunpack.c.l.b16 %v4039
          %v4175 = vunpack.c.l.b16 %v4040
          %v4176 = vunpack.c.l.b16 %v4041
          %v4177 = vunpack.c.l.b16 %v4042
          %v4178 = vunpack.c.l.b16 %v4043
          %v4179 = vunpack.c.l.b16 %v4044
          %v4180 = vunpack.c.l.b16 %v4045
          %v4181 = vunpack.c.l.b16 %v4046
          %v4182 = vunpack.c.l.b16 %v4047
          %v4183 = vunpack.c.l.b16 %v4048
          %v4184 = vunpack.c.l.b16 %v4049
          %v4185 = vunpack.c.l.b16 %v4050
          %v4186 = vunpack.c.l.b16 %v4051
          %v4187 = vunpack.c.l.b16 %v4052
          %v4188 = vunpack.c.l.b16 %v4053
          %v4189 = vunpack.c.l.b16 %v4054
          %v4190 = vunpack.c.l.b16 %v4055
          %v4191 = vunpack.c.l.b16 %v4056
          %v4192 = vunpack.c.l.b16 %v4057
          %v4193 = vunpack.c.l.b16 %v4058
          %v4194 = vunpack.c.l.b16 %v4059
          %v4195 = vunpack.c.l.b16 %v4060
          %v4196 = vunpack.c.l.b16 %v4061
          %v4197 = vunpack.c.l.b16 %v4062
          %v4198 = vunpack.c.l.b16 %v4063
          %v4199 = vunpack.c.l.b16 %v4064
          %v4200 = vunpack.c.l.b16 %v4065
          %v4201 = vunpack.c.l.b16 %v4066
          %v4202 = vunpack.c.l.b16 %v4067
          %v4203 = vunpack.c.l.b16 %v4068
          %v4204 = vunpack.c.l.b16 %v4069
          %v4205 = vunpack.c.l.b16 %v4070
          %v4206 = vunpack.c.l.b16 %v4071
          %v4207 = vunpack.c.l.b16 %v4072
          %v4208 = vunpack.c.l.b16 %v4073
          %v4209 = vunpack.c.l.b16 %v4074
          %v4210 = vunpack.c.l.b16 %v4075
          %v4211 = vunpack.c.l.b16 %v4076
          %v4212 = vunpack.c.l.b16 %v4077
          %v4213 = vunpack.c.l.b16 %v4078
          %v4214 = vunpack.c.l.b16 %v4079
          %v4215 = vunpack.c.l.b16 %v4080
          %v4216 = vunpack.c.l.b16 %v4081
          %v4217 = vunpack.c.l.b16 %v4082
          %v4218 = vunpack.c.l.b16 %v4083
          %v4219 = vunpack.c.l.b16 %v4084
          %v4220 = vunpack.c.l.b16 %v4085
          %v4221 = vunpack.c.l.b16 %v4086
          %v4222 = vunpack.c.l.b16 %v4087
          %v4223 = vunpack.c.l.b16 %v4088
          %v4224 = vunpack.c.l.b16 %v4089
          %v4225 = vunpack.c.l.b16 %v4090
          %v4226 = vpack.c.b16 %v4163, %v4162
          %v4227 = vpack.c.b16 %v4165, %v4164
          %v4228 = vpack.c.b16 %v4167, %v4166
          %v4229 = vpack.c.b16 %v4169, %v4168
          %v4230 = vpack.c.b16 %v4171, %v4170
          %v4231 = vpack.c.b16 %v4173, %v4172
          %v4232 = vpack.c.b16 %v4175, %v4174
          %v4233 = vpack.c.b16 %v4177, %v4176
          %v4234 = vpack.c.b16 %v4179, %v4178
          %v4235 = vpack.c.b16 %v4181, %v4180
          %v4236 = vpack.c.b16 %v4183, %v4182
          %v4237 = vpack.c.b16 %v4185, %v4184
          %v4238 = vpack.c.b16 %v4187, %v4186
          %v4239 = vpack.c.b16 %v4189, %v4188
          %v4240 = vpack.c.b16 %v4191, %v4190
          %v4241 = vpack.c.b16 %v4193, %v4192
          %v4242 = vpack.c.b16 %v4195, %v4194
          %v4243 = vpack.c.b16 %v4197, %v4196
          %v4244 = vpack.c.b16 %v4199, %v4198
          %v4245 = vpack.c.b16 %v4201, %v4200
          %v4246 = vpack.c.b16 %v4203, %v4202
          %v4247 = vpack.c.b16 %v4205, %v4204
          %v4248 = vpack.c.b16 %v4207, %v4206
          %v4249 = vpack.c.b16 %v4209, %v4208
          %v4250 = vpack.c.b16 %v4211, %v4210
          %v4251 = vpack.c.b16 %v4213, %v4212
          %v4252 = vpack.c.b16 %v4215, %v4214
          %v4253 = vpack.c.b16 %v4217, %v4216
          %v4254 = vpack.c.b16 %v4219, %v4218
          %v4255 = vpack.c.b16 %v4221, %v4220
          %v4256 = vpack.c.b16 %v4223, %v4222
          %v4257 = vpack.c.b16 %v4225, %v4224
          %4290 = vmatprep.subr.bf16.mxu0 0
          %4291 = vmatpush1.bf16.msra.mxu0 %v4226
          %4292 = vmatprep.subr.bf16.mxu0 0
          %4293 = vmatpush1.bf16.msra.mxu0 %v4227
          %4294 = vmatprep.subr.bf16.mxu0 0
          %4295 = vmatpush1.bf16.msra.mxu0 %v4228
          %4296 = vmatprep.subr.bf16.mxu0 0
          %4297 = vmatpush1.bf16.msra.mxu0 %v4229
          %4298 = vmatprep.subr.bf16.mxu0 0
          %4299 = vmatpush1.bf16.msra.mxu0 %v4230
          %4300 = vmatprep.subr.bf16.mxu0 0
          %4301 = vmatpush1.bf16.msra.mxu0 %v4231
          %4302 = vmatprep.subr.bf16.mxu0 0
          %4303 = vmatpush1.bf16.msra.mxu0 %v4232
          %4304 = vmatprep.subr.bf16.mxu0 0
          %4305 = vmatpush1.bf16.msra.mxu0 %v4233
          %4306 = vmatprep.subr.bf16.mxu0 0
          %4307 = vmatpush1.bf16.msra.mxu0 %v4234
          %4308 = vmatprep.subr.bf16.mxu0 0
          %4309 = vmatpush1.bf16.msra.mxu0 %v4235
          %4310 = vmatprep.subr.bf16.mxu0 0
          %4311 = vmatpush1.bf16.msra.mxu0 %v4236
          %4312 = vmatprep.subr.bf16.mxu0 0
          %4313 = vmatpush1.bf16.msra.mxu0 %v4237
          %4314 = vmatprep.subr.bf16.mxu0 0
          %4315 = vmatpush1.bf16.msra.mxu0 %v4238
          %4316 = vmatprep.subr.bf16.mxu0 0
          %4317 = vmatpush1.bf16.msra.mxu0 %v4239
          %4318 = vmatprep.subr.bf16.mxu0 0
          %4319 = vmatpush1.bf16.msra.mxu0 %v4240
          %4320 = vmatprep.subr.bf16.mxu0 0
          %4321 = vmatpush1.bf16.msra.mxu0 %v4241
          %4322 = vmatprep.mubr.bf16.mxu0 %v4024
          %4323 = vmatmul.mubr.bf16.gmra.mrb[0].mxu0 %v4023
          %v4324 = vpop.f32.mrb[0].mxu0
          %v4325 = vadd.f32 %v4096, %v4324
          %v4326 = vpop.f32.mrb[0].mxu0
          %v4327 = vpop.f32.mrb[0].mxu0
          %v4328 = vadd.f32 %v4096, %v4327
          %v4329 = vpop.f32.mrb[0].mxu0
          %4330 = vdwg.mxu0
          %4331 = vmatprep.subr.bf16.mxu0 0
          %4332 = vmatpush1.bf16.msra.mxu0 %v4242
          %4333 = vmatprep.subr.bf16.mxu0 0
          %4334 = vmatpush1.bf16.msra.mxu0 %v4243
          %4335 = vmatprep.subr.bf16.mxu0 0
          %4336 = vmatpush1.bf16.msra.mxu0 %v4244
          %4337 = vmatprep.subr.bf16.mxu0 0
          %4338 = vmatpush1.bf16.msra.mxu0 %v4245
          %4339 = vmatprep.subr.bf16.mxu0 0
          %4340 = vmatpush1.bf16.msra.mxu0 %v4246
          %4341 = vmatprep.subr.bf16.mxu0 0
          %4342 = vmatpush1.bf16.msra.mxu0 %v4247
          %4343 = vmatprep.subr.bf16.mxu0 0
          %4344 = vmatpush1.bf16.msra.mxu0 %v4248
          %4345 = vmatprep.subr.bf16.mxu0 0
          %4346 = vmatpush1.bf16.msra.mxu0 %v4249
          %4347 = vmatprep.subr.bf16.mxu0 0
          %4348 = vmatpush1.bf16.msra.mxu0 %v4250
          %4349 = vmatprep.subr.bf16.mxu0 0
          %4350 = vmatpush1.bf16.msra.mxu0 %v4251
          %4351 = vmatprep.subr.bf16.mxu0 0
          %4352 = vmatpush1.bf16.msra.mxu0 %v4252
          %4353 = vmatprep.subr.bf16.mxu0 0
          %4354 = vmatpush1.bf16.msra.mxu0 %v4253
          %4355 = vmatprep.subr.bf16.mxu0 0
          %4356 = vmatpush1.bf16.msra.mxu0 %v4254
          %4357 = vmatprep.subr.bf16.mxu0 0
          %4358 = vmatpush1.bf16.msra.mxu0 %v4255
          %4359 = vmatprep.subr.bf16.mxu0 0
          %4360 = vmatpush1.bf16.msra.mxu0 %v4256
          %4361 = vmatprep.subr.bf16.mxu0 0
          %4362 = vmatpush1.bf16.msra.mxu0 %v4257
          %4363 = vmatprep.mubr.bf16.mxu0 %v4026
          %4364 = vmatmul.mubr.bf16.gmra.mrb[0].mxu0 %v4025
          %v4365 = vpop.f32.mrb[0].mxu0
          %v4366 = vadd.f32 %v4325, %v4365
          %v4367 = vpop.f32.mrb[0].mxu0
          %v4368 = vpop.f32.mrb[0].mxu0
          %v4369 = vadd.f32 %v4328, %v4368
          %v4370 = vpop.f32.mrb[0].mxu0
          %4371 = vdwg.mxu0
          %v4372 = vmax.f32 %v4366, 0.0
          %v4373 = vmax.f32 %v4369, 0.0
          %v4374 = vpack.c.bf16 %v4373, %v4372
          %v4375 = vld [vmem:[#allocation13] sm:$0xf]
          %v4376 = vld [vmem:[#allocation13 + $0x4] sm:$0xf]
          %v4377 = vld [vmem:[#allocation13 + $0x8] sm:$0xf]
          %v4378 = vld [vmem:[#allocation13 + $0xc] sm:$0xf]
          %v4379 = vld [vmem:[#allocation13 + $0x10] sm:$0xf]
          %v4380 = vld [vmem:[#allocation13 + $0x14] sm:$0xf]
          %v4381 = vld [vmem:[#allocation13 + $0x18] sm:$0xf]
          %v4382 = vld [vmem:[#allocation13 + $0x1c] sm:$0xf]
          %v4383 = vld [vmem:[#allocation13 + $0x20] sm:$0xf]
          %v4384 = vld [vmem:[#allocation13 + $0x24] sm:$0xf]
          %v4385 = vld [vmem:[#allocation13 + $0x28] sm:$0xf]
          %v4386 = vld [vmem:[#allocation13 + $0x2c] sm:$0xf]
          %v4387 = vld [vmem:[#allocation13 + $0x30] sm:$0xf]
          %v4388 = vld [vmem:[#allocation13 + $0x34] sm:$0xf]
          %v4389 = vld [vmem:[#allocation13 + $0x38] sm:$0xf]
          %v4390 = vld [vmem:[#allocation13 + $0x3c] sm:$0xf]
          %v4391 = vld [vmem:[#allocation14] sm:$0x1]
          %v4393 = vlaneseq
          %v4394 = vshrl.u32 %v4393, 7
          %v4395 = vsub.s32 0, %v4394
          %v4396 = vrot.slane %v4391, %v4395
          %v4414 = vunpack.c.l.b16 %v4375
          %v4415 = vunpack.c.l.b16 %v4376
          %v4416 = vunpack.c.l.b16 %v4377
          %v4417 = vunpack.c.l.b16 %v4378
          %v4418 = vunpack.c.l.b16 %v4379
          %v4419 = vunpack.c.l.b16 %v4380
          %v4420 = vunpack.c.l.b16 %v4381
          %v4421 = vunpack.c.l.b16 %v4382
          %v4422 = vunpack.c.l.b16 %v4383
          %v4423 = vunpack.c.l.b16 %v4384
          %v4424 = vunpack.c.l.b16 %v4385
          %v4425 = vunpack.c.l.b16 %v4386
          %v4426 = vunpack.c.l.b16 %v4387
          %v4427 = vunpack.c.l.b16 %v4388
          %v4428 = vunpack.c.l.b16 %v4389
          %v4429 = vunpack.c.l.b16 %v4390
          %v4430 = vpack.c.b16 %v4415, %v4414
          %v4431 = vpack.c.b16 %v4417, %v4416
          %v4432 = vpack.c.b16 %v4419, %v4418
          %v4433 = vpack.c.b16 %v4421, %v4420
          %v4434 = vpack.c.b16 %v4423, %v4422
          %v4435 = vpack.c.b16 %v4425, %v4424
          %v4436 = vpack.c.b16 %v4427, %v4426
          %v4437 = vpack.c.b16 %v4429, %v4428
          %4446 = vmatprep.subr.bf16.mxu0 0
          %4447 = vmatpush1.bf16.msra.mxu0 %v4430
          %4448 = vmatprep.subr.bf16.mxu0 0
          %4449 = vmatpush1.bf16.msra.mxu0 %v4431
          %4450 = vmatprep.subr.bf16.mxu0 0
          %4451 = vmatpush1.bf16.msra.mxu0 %v4432
          %4452 = vmatprep.subr.bf16.mxu0 0
          %4453 = vmatpush1.bf16.msra.mxu0 %v4433
          %4454 = vmatprep.subr.bf16.mxu0 0
          %4455 = vmatpush1.bf16.msra.mxu0 %v4434
          %4456 = vmatprep.subr.bf16.mxu0 0
          %4457 = vmatpush1.bf16.msra.mxu0 %v4435
          %4458 = vmatprep.subr.bf16.mxu0 0
          %4459 = vmatpush1.bf16.msra.mxu0 %v4436
          %4460 = vmatprep.subr.bf16.mxu0 0
          %4461 = vmatpush1.bf16.msra.mxu0 %v4437
          %4462 = vmatprep.subr.bf16.mxu0 0
          %4463 = vmatpush1.bf16.msra.mxu0 0
          %4464 = vmatprep.subr.bf16.mxu0 0
          %4465 = vmatpush1.bf16.msra.mxu0 0
          %4466 = vmatprep.subr.bf16.mxu0 0
          %4467 = vmatpush1.bf16.msra.mxu0 0
          %4468 = vmatprep.subr.bf16.mxu0 0
          %4469 = vmatpush1.bf16.msra.mxu0 0
          %4470 = vmatprep.subr.bf16.mxu0 0
          %4471 = vmatpush1.bf16.msra.mxu0 0
          %4472 = vmatprep.subr.bf16.mxu0 0
          %4473 = vmatpush1.bf16.msra.mxu0 0
          %4474 = vmatprep.subr.bf16.mxu0 0
          %4475 = vmatpush1.bf16.msra.mxu0 0
          %4476 = vmatprep.subr.bf16.mxu0 0
          %4477 = vmatpush1.bf16.msra.mxu0 0
          %4478 = vmatprep.mubr.bf16.mxu0 0
          %4479 = vmatmul.mubr.bf16.gmra.mrb[0].mxu0 %v4374
          %v4480 = vpop.f32.mrb[0].mxu0
          %v4481 = vadd.f32 %v4396, %v4480
          %v4482 = vpop.f32.mrb[0].mxu0
          %v4483 = vpop.f32.mrb[0].mxu0
          %v4484 = vadd.f32 %v4396, %v4483
          %v4485 = vpop.f32.mrb[0].mxu0
          %4486 = vdwg.mxu0
          %4487 = vmax.xlane.f32.xlu0 %v4481
          %v4488 = vpop.xlane.xlu0 %4487
          %4489 = vmax.xlane.f32.xlu0 %v4484
          %v4490 = vpop.xlane.xlu0 %4489
          %v4491 = vsub.f32 %v4481, %v4488
          %v4492 = vsub.f32 %v4484, %v4490
          %v4493 = vmul.f32 %v4491, 1.442695
          %v4494 = vpow.pop %v4493
          %v4495 = vmul.f32 %v4492, 1.442695
          %v4496 = vpow.pop %v4495
          %4497 = vadd.xlane.f32.xlu0 %v4494
          %v4498 = vpop.xlane.xlu0 %4497
          %4499 = vadd.xlane.f32.xlu0 %v4496
          %v4500 = vpop.xlane.xlu0 %4499
          %v4501 = vlog2.pop %v4498
          %v4502 = vmul.f32 %v4501, 0.6931472
          %v4503 = vlog2.pop %v4500
          %v4504 = vmul.f32 %v4503, 0.6931472
          %v4505 = vsub.f32 %v4491, %v4502
          %v4506 = vsub.f32 %v4492, %v4504
          %4507 = vst [vmem:[%s9] sm:$0xff] %v4505
          %4508 = vst [vmem:[%s9 + $0x8] sm:$0xff] %v4506
        $region96: #{cifar_mlp_forward.1} parent=55 // pred_fallthru
          _
        // Predicated region
        $region97: #{cifar_mlp_forward.1} parent=55 // pred_check
          %p4509 = pneg %p246
        $region98: #{cifar_mlp_forward.1} parent=55 // pred_check_branch
          %4511 = sbr.rel (%p4509) target = $region100
        $region99: #{cifar_mlp_forward.1} parent=55 // pred_region
          _
        $region100: #{cifar_mlp_forward.1} parent=55 // pred_fallthru
          _
        // Predicated region
        $region101: #{cifar_mlp_forward.1} parent=55 // pred_check
          %p4512 = pneg %p246
        $region102: #{cifar_mlp_forward.1} parent=55 // pred_check_branch
          %4514 = sbr.rel (%p4512) target = $region104
        $region103: #{cifar_mlp_forward.1} parent=55 // pred_region
          _
        $region104: #{cifar_mlp_forward.1} parent=55 // pred_fallthru
          _
      $region56: #{cifar_mlp_forward.1} parent=5 // pred_fallthru
        _
      %p4515 = scmp.le.s32.totalorder 2, %s24
      // Predicated region
      $region105: #{cifar_mlp_forward.1} parent=5 // pred_check
        %p4516 = pneg %p4515
      $region106: #{cifar_mlp_forward.1} parent=5 // pred_check_branch
        %4518 = sbr.rel (%p4516) target = $region108
      $region107: #{cifar_mlp_forward.1} parent=5 // pred_region
        %s4519 = ssub.s32 %s24, 2
      $region108: #{cifar_mlp_forward.1} parent=5 // pred_fallthru
        _
    $region6: #{cifar_mlp_forward.1} parent=1 // loop_footer
      %s28 = sadd.s32 1, %s24
    $region7: #{cifar_mlp_forward.1} parent=1 // loop_footer_branch
      %23 = sbr.rel target = $region3
    $region8: #{cifar_mlp_forward.1} parent=1 // loop_exit
      _
    %4520 = vsyncpa [#allocation4], 1
    %s4521 = scalar_lea.sflag [#allocation4], 1
    %4522 = vsyncpa %s4521, 1
    %4523 = vsyncpa [#allocation6], 1
    %s4524 = scalar_lea.sflag [#allocation6], 1
    %4525 = vsyncpa %s4524, 1
    %4526 = vsyncpa [#allocation9], 1
    %4527 = vsyncpa [#allocation12], 1
    %4528 = vsyncpa [#allocation15], 1

</llo_original>
